<compile_context>
chip_gen: v7x
topology: tpu7x:2x2x1
jax: 0.10.0
libtpu: 0.0.40
codegen_flags: <defaults>
</compile_context>

<pallas_src>
import jax
import jax.numpy as jnp
import numpy as np
from jax.experimental import pallas as pl
from jax.experimental.pallas import tpu as pltpu


def _make_dense_block_kernel(C0, G, L, H, W):
    WP = W + 2                      # padded row width (left/right zero columns kept in-lane)
    S = H * WP                      # flattened spatial extent of activations / outputs
    OFF = 1 + WP                    # scratch lane offset of the conv center tap
    C_max = C0 + (L - 1) * G        # widest layer input (last layer's cin)
    SPAD = (-(-(1 + (H + 2) * WP + 1) // 128)) * 128   # guard + padded frame + guard, aligned

    def kernel(x_ref, mask_ref, scale_ref, shift_ref, bias_ref, w_ref,
               o_ref, feat_ref, apad_ref):
        # Zero ONLY the conv zero-padding lanes of the padded-activation scratch: the
        # leading guard + top padding row, and the bottom padding row + trailing guard /
        # alignment tail.  The interior band is fully rewritten each layer and its in-lane
        # side columns are zeroed by the column mask, so no full-buffer fill is needed.
        apad_ref[:, 0:OFF] = jnp.zeros((C_max, OFF), apad_ref.dtype)
        apad_ref[:, OFF + S:SPAD] = jnp.zeros((C_max, SPAD - OFF - S), apad_ref.dtype)

        # Persistent dense-feature scratch: write the block input once; every later layer's
        # output is appended below, so layer inputs are plain channel slices (no concat).
        feat_ref[0:C0, :] = x_ref[0]
        mask = mask_ref[...]                                    # (1, S): 0 on side columns

        for i in range(L):
            cin = C0 + i * G

            # Folded BN + ReLU in f32 on the VPU (v5e-safe) + side-column re-zeroing,
            # written straight into the padded band as the bf16 MXU input.
            a = jnp.maximum(feat_ref[0:cin, :] * scale_ref[0:cin, i:i + 1]
                            + shift_ref[0:cin, i:i + 1], 0.0) * mask
            apad_ref[0:cin, OFF:OFF + S] = a.astype(apad_ref.dtype)

            # 3x3 conv = nine (G, cin) @ (cin, S) MXU matmuls accumulated in f32.  Each tap
            # is a contiguous lane slice of the padded scratch -> no im2col concat buffer.
            acc = jnp.zeros((G, S), jnp.float32)
            for t in range(9):
                kh, kw = t // 3, t % 3
                off = OFF + (kh - 1) * WP + (kw - 1)
                acc = acc + jnp.dot(w_ref[i, t, :, 0:cin],
                                    apad_ref[0:cin, off:off + S],
                                    preferred_element_type=jnp.float32)
            y = acc + bias_ref[:, i:i + 1]

            o_ref[0, i * G:(i + 1) * G, :] = y.astype(o_ref.dtype)
            if i + 1 < L:                                       # dense connectivity
                feat_ref[cin:cin + G, :] = y

    return kernel


@jax.jit
def dense_block_forward(x_nchw, params):
    """DenseBlock forward, NCHW in / NCHW out (concat of all layer outputs)."""
    N, C0, H, W = x_nchw.shape
    L = len(params)
    G = params[0]["w"].shape[-1]
    WP, S = W + 2, H * (W + 2)
    C_max = C0 + (L - 1) * G
    SPAD = (-(-(1 + (H + 2) * WP + 1) // 128)) * 128

    # Row-flat padded input: keep the two zero side columns in-lane so every conv tap inside
    # the kernel is a contiguous lane slice (no in-kernel reshapes/transposes).
    x_s = jnp.pad(x_nchw, ((0, 0), (0, 0), (0, 0), (1, 1))).reshape(N, C0, S)

    # Constant column mask (0.0 on the two in-lane side columns of each image row).
    col_mask = jnp.pad(jnp.ones((H, W), jnp.float32), ((0, 0), (1, 1))).reshape(1, S)

    # Pack the 4*L tiny per-layer parameters into 4 operands; layer i lives in column /
    # leading index i.  Channels beyond cin are zero-padded but never read (kernel slices).
    scale_p = jnp.zeros((C_max, L), jnp.float32)
    shift_p = jnp.zeros((C_max, L), jnp.float32)
    bias_p = jnp.zeros((G, L), jnp.float32)
    w_p = jnp.zeros((L, 9, G, C_max), jnp.bfloat16)
    for i, p in enumerate(params):
        cin = C0 + i * G
        scale_p = scale_p.at[0:cin, i].set(p["scale"])
        shift_p = shift_p.at[0:cin, i].set(p["shift"])
        bias_p = bias_p.at[:, i].set(p["b"])
        # HWIO (3,3,cin,G) -> tap-major (9, G, cin) for the per-tap (G,cin)@(cin,S) matmuls.
        wt = jnp.transpose(p["w"], (0, 1, 3, 2)).reshape(9, G, cin)
        w_p = w_p.at[i, :, :, 0:cin].set(wt.astype(jnp.bfloat16))

    kernel = _make_dense_block_kernel(C0, G, L, H, W)

    out_s = pl.pallas_call(
        kernel,
        out_shape=jax.ShapeDtypeStruct((N, L * G, S), x_nchw.dtype),
        grid_spec=pltpu.PrefetchScalarGridSpec(
            num_scalar_prefetch=0,
            grid=(N,),                                    # one batch item per grid step
            in_specs=[
                pl.BlockSpec((1, C0, S), lambda n: (n, 0, 0)),           # x
                pl.BlockSpec((1, S), lambda n: (0, 0)),                  # column mask
                pl.BlockSpec((C_max, L), lambda n: (0, 0)),              # packed BN scale
                pl.BlockSpec((C_max, L), lambda n: (0, 0)),              # packed BN shift
                pl.BlockSpec((G, L), lambda n: (0, 0)),                  # packed conv bias
                pl.BlockSpec((L, 9, G, C_max), lambda n: (0, 0, 0, 0)),  # packed tap weights
            ],
            out_specs=pl.BlockSpec((1, L * G, S), lambda n: (n, 0, 0)),
            scratch_shapes=[
                pltpu.VMEM((C_max, S), jnp.float32),      # persistent dense features
                pltpu.VMEM((C_max, SPAD), jnp.bfloat16),  # padded activations (MXU input)
            ],
        ),
        compiler_params=pltpu.CompilerParams(
            dimension_semantics=("parallel",),
            vmem_limit_bytes=64 * 1024 * 1024,
        ),
    )(x_s, col_mask, scale_p, shift_p, bias_p, w_p)

    # Strip the two in-lane padding columns; the result is already NCHW.
    return out_s.reshape(N, L * G, H, WP)[:, :, :, 1:W + 1]


def init_params(key, in_channels, num_layers, growth_rate, eps=1e-5):
    params = []
    for i in range(num_layers):
        cin = in_channels + i * growth_rate
        key, k1, k2, k3, k4 = jax.random.split(key, 5)
        gamma = 1.0 + 0.1 * jax.random.normal(k1, (cin,), jnp.float32)
        beta = 0.1 * jax.random.normal(k2, (cin,), jnp.float32)
        run_mean = jnp.zeros((cin,), jnp.float32)       # fresh-module running stats
        run_var = jnp.ones((cin,), jnp.float32)
        scale = gamma / jnp.sqrt(run_var + eps)
        shift = beta - run_mean * scale
        w = 0.1 * jax.random.normal(k3, (3, 3, cin, growth_rate), jnp.float32)  # HWIO
        b = 0.01 * jax.random.normal(k4, (growth_rate,), jnp.float32)
        params.append(dict(scale=scale, shift=shift, w=w, b=b))
    return params


def dense_block_reference(x_nchw, params):
    """Pure-JAX reference (lax.conv).  Conv inputs are rounded to bf16 to match the kernel's
    MXU input precision; accumulation stays f32, so the tolerance stays tight."""
    x = jnp.transpose(x_nchw, (0, 2, 3, 1))
    outs = []
    for p in params:
        a = jax.nn.relu(x * p["scale"] + p["shift"])
        a = a.astype(jnp.bfloat16).astype(jnp.float32)
        w = p["w"].astype(jnp.bfloat16).astype(jnp.float32)
        y = jax.lax.conv_general_dilated(
            a, w, (1, 1), "SAME",
            dimension_numbers=("NHWC", "HWIO", "NHWC"),
            precision=jax.lax.Precision.HIGHEST) + p["b"]
        outs.append(y)
        x = jnp.concatenate([x, y], axis=-1)
    return jnp.transpose(jnp.concatenate(outs, axis=-1), (0, 3, 1, 2))


if __name__ == "__main__":
    key = jax.random.PRNGKey(0)
    k_x, k_p = jax.random.split(key)

    N, in_channels, H, W = 2, 4, 16, 16
    num_layers, growth_rate = 3, 4

    x = jax.random.normal(k_x, (N, in_channels, H, W), jnp.float32)   # NCHW like PyTorch
    params = init_params(k_p, in_channels, num_layers, growth_rate)

    out = jax.block_until_ready(dense_block_forward(x, params))
    assert out.shape == (N, num_layers * growth_rate, H, W), out.shape

    ref = jax.block_until_ready(dense_block_reference(x, params))
    np.testing.assert_allclose(np.asarray(out), np.asarray(ref), atol=5e-3, rtol=5e-3)

    print("KERNEL_OK")
</pallas_src>

<mosaic_0001>
module attributes {stable_mosaic.version = 11 : i64} {
  func.func @kernel(%arg0: i32, %arg1: memref<1x4x288xf32, #tpu.memory_space<vmem>>, %arg2: memref<1x288xf32, #tpu.memory_space<vmem>>, %arg3: memref<12x3xf32, #tpu.memory_space<vmem>>, %arg4: memref<12x3xf32, #tpu.memory_space<vmem>>, %arg5: memref<4x3xf32, #tpu.memory_space<vmem>>, %arg6: memref<3x9x4x12xbf16, #tpu.memory_space<vmem>>, %arg7: memref<1x12x288xf32, #tpu.memory_space<vmem>>, %arg8: memref<12x288xf32, #tpu.memory_space<vmem>>, %arg9: memref<12x384xbf16, #tpu.memory_space<vmem>>) attributes {dimension_semantics = [#tpu.dimension_semantics<parallel>], iteration_bounds = array<i64: 2>, scalar_prefetch = 0 : i64, scratch_operands = 2 : i64, tpu.core_type = #tpu.core_type<tc>, window_params = [{transform_indices = @transform_0, window_bounds = array<i64: 1, 4, 288>}, {pipeline_mode = #tpu.pipeline_mode<synchronous>, transform_indices = @transform_1, window_bounds = array<i64: 1, 288>}, {pipeline_mode = #tpu.pipeline_mode<synchronous>, transform_indices = @transform_2, window_bounds = array<i64: 12, 3>}, {pipeline_mode = #tpu.pipeline_mode<synchronous>, transform_indices = @transform_3, window_bounds = array<i64: 12, 3>}, {pipeline_mode = #tpu.pipeline_mode<synchronous>, transform_indices = @transform_4, window_bounds = array<i64: 4, 3>}, {pipeline_mode = #tpu.pipeline_mode<synchronous>, transform_indices = @transform_5, window_bounds = array<i64: 3, 9, 4, 12>}, {transform_indices = @transform_6, window_bounds = array<i64: 1, 12, 288>}]} {
    %cst = arith.constant 0.000000e+00 : bf16
    %0 = vector.broadcast %cst : bf16 to vector<12x19xbf16>
    %c0 = arith.constant 0 : index
    %c0_0 = arith.constant 0 : index
    %1 = vector.load %arg9[%c0, %c0_0] : memref<12x384xbf16, #tpu.memory_space<vmem>>, vector<12x19xbf16>
    tpu.vector_store %arg9[%c0, %c0_0], %0 {strides = array<i32>} : memref<12x384xbf16, #tpu.memory_space<vmem>>, vector<12x19xbf16>,
    %cst_1 = arith.constant 0.000000e+00 : bf16
    %2 = vector.broadcast %cst_1 : bf16 to vector<12x77xbf16>
    %c0_2 = arith.constant 0 : index
    %c307 = arith.constant 307 : index
    %3 = vector.load %arg9[%c0_2, %c307] : memref<12x384xbf16, #tpu.memory_space<vmem>>, vector<12x77xbf16>
    tpu.vector_store %arg9[%c0_2, %c307], %2 {strides = array<i32>} : memref<12x384xbf16, #tpu.memory_space<vmem>>, vector<12x77xbf16>,
    %c0_3 = arith.constant 0 : index
    %c0_4 = arith.constant 0 : index
    %c0_5 = arith.constant 0 : index
    %4 = vector.load %arg1[%c0_3, %c0_4, %c0_5] : memref<1x4x288xf32, #tpu.memory_space<vmem>>, vector<1x4x288xf32>
    %5 = vector.shape_cast %4 : vector<1x4x288xf32> to vector<4x288xf32>
    %c0_6 = arith.constant 0 : index
    %c0_7 = arith.constant 0 : index
    %6 = vector.load %arg8[%c0_6, %c0_7] : memref<12x288xf32, #tpu.memory_space<vmem>>, vector<4x288xf32>
    tpu.vector_store %arg8[%c0_6, %c0_7], %5 {strides = array<i32>} : memref<12x288xf32, #tpu.memory_space<vmem>>, vector<4x288xf32>,
    %c0_8 = arith.constant 0 : index
    %c0_9 = arith.constant 0 : index
    %7 = vector.load %arg2[%c0_8, %c0_9] : memref<1x288xf32, #tpu.memory_space<vmem>>, vector<1x288xf32>
    %c0_10 = arith.constant 0 : index
    %c0_11 = arith.constant 0 : index
    %8 = vector.load %arg8[%c0_10, %c0_11] : memref<12x288xf32, #tpu.memory_space<vmem>>, vector<4x288xf32>
    %c0_12 = arith.constant 0 : index
    %c0_13 = arith.constant 0 : index
    %9 = vector.load %arg3[%c0_12, %c0_13] : memref<12x3xf32, #tpu.memory_space<vmem>>, vector<4x1xf32>
    %10 = vector.broadcast %9 : vector<4x1xf32> to vector<4x288xf32>
    %11 = arith.mulf %8, %10 : vector<4x288xf32>
    %c0_14 = arith.constant 0 : index
    %c0_15 = arith.constant 0 : index
    %12 = vector.load %arg4[%c0_14, %c0_15] : memref<12x3xf32, #tpu.memory_space<vmem>>, vector<4x1xf32>
    %13 = vector.broadcast %12 : vector<4x1xf32> to vector<4x288xf32>
    %14 = arith.addf %11, %13 : vector<4x288xf32>
    %cst_16 = arith.constant 0.000000e+00 : f32
    %15 = vector.broadcast %cst_16 : f32 to vector<4x288xf32>
    %16 = arith.maximumf %14, %15 : vector<4x288xf32>
    %17 = vector.broadcast %7 : vector<1x288xf32> to vector<4x288xf32>
    %18 = arith.mulf %16, %17 : vector<4x288xf32>
    %19 = arith.truncf %18 : vector<4x288xf32> to vector<4x288xbf16>
    %c0_17 = arith.constant 0 : index
    %c19 = arith.constant 19 : index
    %20 = vector.load %arg9[%c0_17, %c19] : memref<12x384xbf16, #tpu.memory_space<vmem>>, vector<4x288xbf16>
    tpu.vector_store %arg9[%c0_17, %c19], %19 {strides = array<i32>} : memref<12x384xbf16, #tpu.memory_space<vmem>>, vector<4x288xbf16>,
    %cst_18 = arith.constant 0.000000e+00 : f32
    %21 = vector.broadcast %cst_18 : f32 to vector<4x288xf32>
    %c0_19 = arith.constant 0 : index
    %c0_20 = arith.constant 0 : index
    %c0_21 = arith.constant 0 : index
    %c0_22 = arith.constant 0 : index
    %22 = vector.load %arg6[%c0_19, %c0_20, %c0_21, %c0_22] : memref<3x9x4x12xbf16, #tpu.memory_space<vmem>>, vector<1x1x4x4xbf16>
    %23 = vector.shape_cast %22 : vector<1x1x4x4xbf16> to vector<4x4xbf16>
    %c0_23 = arith.constant 0 : index
    %c0_24 = arith.constant 0 : index
    %24 = vector.load %arg9[%c0_23, %c0_24] : memref<12x384xbf16, #tpu.memory_space<vmem>>, vector<4x288xbf16>
    %cst_25 = arith.constant dense<0.000000e+00> : vector<4x288xf32>
    %25 = tpu.matmul %23, %24, %cst_25 {dimension_numbers = #tpu.dot_dimension_numbers<[1], [0], [0], [1], [0, 0, 1, 1], [], []>} : vector<4x4xbf16>, vector<4x288xbf16>, vector<4x288xf32> -> vector<4x288xf32>
    %26 = arith.addf %21, %25 : vector<4x288xf32>
    %c0_26 = arith.constant 0 : index
    %c1 = arith.constant 1 : index
    %c0_27 = arith.constant 0 : index
    %c0_28 = arith.constant 0 : index
    %27 = vector.load %arg6[%c0_26, %c1, %c0_27, %c0_28] : memref<3x9x4x12xbf16, #tpu.memory_space<vmem>>, vector<1x1x4x4xbf16>
    %28 = vector.shape_cast %27 : vector<1x1x4x4xbf16> to vector<4x4xbf16>
    %c0_29 = arith.constant 0 : index
    %c1_30 = arith.constant 1 : index
    %29 = vector.load %arg9[%c0_29, %c1_30] : memref<12x384xbf16, #tpu.memory_space<vmem>>, vector<4x288xbf16>
    %cst_31 = arith.constant dense<0.000000e+00> : vector<4x288xf32>
    %30 = tpu.matmul %28, %29, %cst_31 {dimension_numbers = #tpu.dot_dimension_numbers<[1], [0], [0], [1], [0, 0, 1, 1], [], []>} : vector<4x4xbf16>, vector<4x288xbf16>, vector<4x288xf32> -> vector<4x288xf32>
    %31 = arith.addf %26, %30 : vector<4x288xf32>
    %c0_32 = arith.constant 0 : index
    %c2 = arith.constant 2 : index
    %c0_33 = arith.constant 0 : index
    %c0_34 = arith.constant 0 : index
    %32 = vector.load %arg6[%c0_32, %c2, %c0_33, %c0_34] : memref<3x9x4x12xbf16, #tpu.memory_space<vmem>>, vector<1x1x4x4xbf16>
    %33 = vector.shape_cast %32 : vector<1x1x4x4xbf16> to vector<4x4xbf16>
    %c0_35 = arith.constant 0 : index
    %c2_36 = arith.constant 2 : index
    %34 = vector.load %arg9[%c0_35, %c2_36] : memref<12x384xbf16, #tpu.memory_space<vmem>>, vector<4x288xbf16>
    %cst_37 = arith.constant dense<0.000000e+00> : vector<4x288xf32>
    %35 = tpu.matmul %33, %34, %cst_37 {dimension_numbers = #tpu.dot_dimension_numbers<[1], [0], [0], [1], [0, 0, 1, 1], [], []>} : vector<4x4xbf16>, vector<4x288xbf16>, vector<4x288xf32> -> vector<4x288xf32>
    %36 = arith.addf %31, %35 : vector<4x288xf32>
    %c0_38 = arith.constant 0 : index
    %c3 = arith.constant 3 : index
    %c0_39 = arith.constant 0 : index
    %c0_40 = arith.constant 0 : index
    %37 = vector.load %arg6[%c0_38, %c3, %c0_39, %c0_40] : memref<3x9x4x12xbf16, #tpu.memory_space<vmem>>, vector<1x1x4x4xbf16>
    %38 = vector.shape_cast %37 : vector<1x1x4x4xbf16> to vector<4x4xbf16>
    %c0_41 = arith.constant 0 : index
    %c18 = arith.constant 18 : index
    %39 = vector.load %arg9[%c0_41, %c18] : memref<12x384xbf16, #tpu.memory_space<vmem>>, vector<4x288xbf16>
    %cst_42 = arith.constant dense<0.000000e+00> : vector<4x288xf32>
    %40 = tpu.matmul %38, %39, %cst_42 {dimension_numbers = #tpu.dot_dimension_numbers<[1], [0], [0], [1], [0, 0, 1, 1], [], []>} : vector<4x4xbf16>, vector<4x288xbf16>, vector<4x288xf32> -> vector<4x288xf32>
    %41 = arith.addf %36, %40 : vector<4x288xf32>
    %c0_43 = arith.constant 0 : index
    %c4 = arith.constant 4 : index
    %c0_44 = arith.constant 0 : index
    %c0_45 = arith.constant 0 : index
    %42 = vector.load %arg6[%c0_43, %c4, %c0_44, %c0_45] : memref<3x9x4x12xbf16, #tpu.memory_space<vmem>>, vector<1x1x4x4xbf16>
    %43 = vector.shape_cast %42 : vector<1x1x4x4xbf16> to vector<4x4xbf16>
    %c0_46 = arith.constant 0 : index
    %c19_47 = arith.constant 19 : index
    %44 = vector.load %arg9[%c0_46, %c19_47] : memref<12x384xbf16, #tpu.memory_space<vmem>>, vector<4x288xbf16>
    %cst_48 = arith.constant dense<0.000000e+00> : vector<4x288xf32>
    %45 = tpu.matmul %43, %44, %cst_48 {dimension_numbers = #tpu.dot_dimension_numbers<[1], [0], [0], [1], [0, 0, 1, 1], [], []>} : vector<4x4xbf16>, vector<4x288xbf16>, vector<4x288xf32> -> vector<4x288xf32>
    %46 = arith.addf %41, %45 : vector<4x288xf32>
    %c0_49 = arith.constant 0 : index
    %c5 = arith.constant 5 : index
    %c0_50 = arith.constant 0 : index
    %c0_51 = arith.constant 0 : index
    %47 = vector.load %arg6[%c0_49, %c5, %c0_50, %c0_51] : memref<3x9x4x12xbf16, #tpu.memory_space<vmem>>, vector<1x1x4x4xbf16>
    %48 = vector.shape_cast %47 : vector<1x1x4x4xbf16> to vector<4x4xbf16>
    %c0_52 = arith.constant 0 : index
    %c20 = arith.constant 20 : index
    %49 = vector.load %arg9[%c0_52, %c20] : memref<12x384xbf16, #tpu.memory_space<vmem>>, vector<4x288xbf16>
    %cst_53 = arith.constant dense<0.000000e+00> : vector<4x288xf32>
    %50 = tpu.matmul %48, %49, %cst_53 {dimension_numbers = #tpu.dot_dimension_numbers<[1], [0], [0], [1], [0, 0, 1, 1], [], []>} : vector<4x4xbf16>, vector<4x288xbf16>, vector<4x288xf32> -> vector<4x288xf32>
    %51 = arith.addf %46, %50 : vector<4x288xf32>
    %c0_54 = arith.constant 0 : index
    %c6 = arith.constant 6 : index
    %c0_55 = arith.constant 0 : index
    %c0_56 = arith.constant 0 : index
    %52 = vector.load %arg6[%c0_54, %c6, %c0_55, %c0_56] : memref<3x9x4x12xbf16, #tpu.memory_space<vmem>>, vector<1x1x4x4xbf16>
    %53 = vector.shape_cast %52 : vector<1x1x4x4xbf16> to vector<4x4xbf16>
    %c0_57 = arith.constant 0 : index
    %c36 = arith.constant 36 : index
    %54 = vector.load %arg9[%c0_57, %c36] : memref<12x384xbf16, #tpu.memory_space<vmem>>, vector<4x288xbf16>
    %cst_58 = arith.constant dense<0.000000e+00> : vector<4x288xf32>
    %55 = tpu.matmul %53, %54, %cst_58 {dimension_numbers = #tpu.dot_dimension_numbers<[1], [0], [0], [1], [0, 0, 1, 1], [], []>} : vector<4x4xbf16>, vector<4x288xbf16>, vector<4x288xf32> -> vector<4x288xf32>
    %56 = arith.addf %51, %55 : vector<4x288xf32>
    %c0_59 = arith.constant 0 : index
    %c7 = arith.constant 7 : index
    %c0_60 = arith.constant 0 : index
    %c0_61 = arith.constant 0 : index
    %57 = vector.load %arg6[%c0_59, %c7, %c0_60, %c0_61] : memref<3x9x4x12xbf16, #tpu.memory_space<vmem>>, vector<1x1x4x4xbf16>
    %58 = vector.shape_cast %57 : vector<1x1x4x4xbf16> to vector<4x4xbf16>
    %c0_62 = arith.constant 0 : index
    %c37 = arith.constant 37 : index
    %59 = vector.load %arg9[%c0_62, %c37] : memref<12x384xbf16, #tpu.memory_space<vmem>>, vector<4x288xbf16>
    %cst_63 = arith.constant dense<0.000000e+00> : vector<4x288xf32>
    %60 = tpu.matmul %58, %59, %cst_63 {dimension_numbers = #tpu.dot_dimension_numbers<[1], [0], [0], [1], [0, 0, 1, 1], [], []>} : vector<4x4xbf16>, vector<4x288xbf16>, vector<4x288xf32> -> vector<4x288xf32>
    %61 = arith.addf %56, %60 : vector<4x288xf32>
    %c0_64 = arith.constant 0 : index
    %c8 = arith.constant 8 : index
    %c0_65 = arith.constant 0 : index
    %c0_66 = arith.constant 0 : index
    %62 = vector.load %arg6[%c0_64, %c8, %c0_65, %c0_66] : memref<3x9x4x12xbf16, #tpu.memory_space<vmem>>, vector<1x1x4x4xbf16>
    %63 = vector.shape_cast %62 : vector<1x1x4x4xbf16> to vector<4x4xbf16>
    %c0_67 = arith.constant 0 : index
    %c38 = arith.constant 38 : index
    %64 = vector.load %arg9[%c0_67, %c38] : memref<12x384xbf16, #tpu.memory_space<vmem>>, vector<4x288xbf16>
    %cst_68 = arith.constant dense<0.000000e+00> : vector<4x288xf32>
    %65 = tpu.matmul %63, %64, %cst_68 {dimension_numbers = #tpu.dot_dimension_numbers<[1], [0], [0], [1], [0, 0, 1, 1], [], []>} : vector<4x4xbf16>, vector<4x288xbf16>, vector<4x288xf32> -> vector<4x288xf32>
    %66 = arith.addf %61, %65 : vector<4x288xf32>
    %c0_69 = arith.constant 0 : index
    %c0_70 = arith.constant 0 : index
    %67 = vector.load %arg5[%c0_69, %c0_70] : memref<4x3xf32, #tpu.memory_space<vmem>>, vector<4x1xf32>
    %68 = vector.broadcast %67 : vector<4x1xf32> to vector<4x288xf32>
    %69 = arith.addf %66, %68 : vector<4x288xf32>
    %c0_71 = arith.constant 0 : index
    %c0_72 = arith.constant 0 : index
    %c0_73 = arith.constant 0 : index
    %70 = vector.load %arg7[%c0_71, %c0_72, %c0_73] : memref<1x12x288xf32, #tpu.memory_space<vmem>>, vector<1x4x288xf32>
    %71 = vector.shape_cast %70 : vector<1x4x288xf32> to vector<4x288xf32>
    %72 = vector.shape_cast %69 : vector<4x288xf32> to vector<1x4x288xf32>
    tpu.vector_store %arg7[%c0_71, %c0_72, %c0_73], %72 {strides = array<i32>} : memref<1x12x288xf32, #tpu.memory_space<vmem>>, vector<1x4x288xf32>,
    %c4_74 = arith.constant 4 : index
    %c0_75 = arith.constant 0 : index
    %73 = vector.load %arg8[%c4_74, %c0_75] : memref<12x288xf32, #tpu.memory_space<vmem>>, vector<4x288xf32>
    tpu.vector_store %arg8[%c4_74, %c0_75], %69 {strides = array<i32>} : memref<12x288xf32, #tpu.memory_space<vmem>>, vector<4x288xf32>,
    %c0_76 = arith.constant 0 : index
    %c0_77 = arith.constant 0 : index
    %74 = vector.load %arg8[%c0_76, %c0_77] : memref<12x288xf32, #tpu.memory_space<vmem>>, vector<8x288xf32>
    %c0_78 = arith.constant 0 : index
    %c1_79 = arith.constant 1 : index
    %75 = vector.load %arg3[%c0_78, %c1_79] : memref<12x3xf32, #tpu.memory_space<vmem>>, vector<8x1xf32>
    %76 = vector.broadcast %75 : vector<8x1xf32> to vector<8x288xf32>
    %77 = arith.mulf %74, %76 : vector<8x288xf32>
    %c0_80 = arith.constant 0 : index
    %c1_81 = arith.constant 1 : index
    %78 = vector.load %arg4[%c0_80, %c1_81] : memref<12x3xf32, #tpu.memory_space<vmem>>, vector<8x1xf32>
    %79 = vector.broadcast %78 : vector<8x1xf32> to vector<8x288xf32>
    %80 = arith.addf %77, %79 : vector<8x288xf32>
    %cst_82 = arith.constant 0.000000e+00 : f32
    %81 = vector.broadcast %cst_82 : f32 to vector<8x288xf32>
    %82 = arith.maximumf %80, %81 : vector<8x288xf32>
    %83 = vector.broadcast %7 : vector<1x288xf32> to vector<8x288xf32>
    %84 = arith.mulf %82, %83 : vector<8x288xf32>
    %85 = arith.truncf %84 : vector<8x288xf32> to vector<8x288xbf16>
    %c0_83 = arith.constant 0 : index
    %c19_84 = arith.constant 19 : index
    %86 = vector.load %arg9[%c0_83, %c19_84] : memref<12x384xbf16, #tpu.memory_space<vmem>>, vector<8x288xbf16>
    tpu.vector_store %arg9[%c0_83, %c19_84], %85 {strides = array<i32>} : memref<12x384xbf16, #tpu.memory_space<vmem>>, vector<8x288xbf16>,
    %cst_85 = arith.constant 0.000000e+00 : f32
    %87 = vector.broadcast %cst_85 : f32 to vector<4x288xf32>
    %c1_86 = arith.constant 1 : index
    %c0_87 = arith.constant 0 : index
    %c0_88 = arith.constant 0 : index
    %c0_89 = arith.constant 0 : index
    %88 = vector.load %arg6[%c1_86, %c0_87, %c0_88, %c0_89] : memref<3x9x4x12xbf16, #tpu.memory_space<vmem>>, vector<1x1x4x8xbf16>
    %89 = vector.shape_cast %88 : vector<1x1x4x8xbf16> to vector<4x8xbf16>
    %c0_90 = arith.constant 0 : index
    %c0_91 = arith.constant 0 : index
    %90 = vector.load %arg9[%c0_90, %c0_91] : memref<12x384xbf16, #tpu.memory_space<vmem>>, vector<8x288xbf16>
    %cst_92 = arith.constant dense<0.000000e+00> : vector<4x288xf32>
    %91 = tpu.matmul %89, %90, %cst_92 {dimension_numbers = #tpu.dot_dimension_numbers<[1], [0], [0], [1], [0, 0, 1, 1], [], []>} : vector<4x8xbf16>, vector<8x288xbf16>, vector<4x288xf32> -> vector<4x288xf32>
    %92 = arith.addf %87, %91 : vector<4x288xf32>
    %c1_93 = arith.constant 1 : index
    %c1_94 = arith.constant 1 : index
    %c0_95 = arith.constant 0 : index
    %c0_96 = arith.constant 0 : index
    %93 = vector.load %arg6[%c1_93, %c1_94, %c0_95, %c0_96] : memref<3x9x4x12xbf16, #tpu.memory_space<vmem>>, vector<1x1x4x8xbf16>
    %94 = vector.shape_cast %93 : vector<1x1x4x8xbf16> to vector<4x8xbf16>
    %c0_97 = arith.constant 0 : index
    %c1_98 = arith.constant 1 : index
    %95 = vector.load %arg9[%c0_97, %c1_98] : memref<12x384xbf16, #tpu.memory_space<vmem>>, vector<8x288xbf16>
    %cst_99 = arith.constant dense<0.000000e+00> : vector<4x288xf32>
    %96 = tpu.matmul %94, %95, %cst_99 {dimension_numbers = #tpu.dot_dimension_numbers<[1], [0], [0], [1], [0, 0, 1, 1], [], []>} : vector<4x8xbf16>, vector<8x288xbf16>, vector<4x288xf32> -> vector<4x288xf32>
    %97 = arith.addf %92, %96 : vector<4x288xf32>
    %c1_100 = arith.constant 1 : index
    %c2_101 = arith.constant 2 : index
    %c0_102 = arith.constant 0 : index
    %c0_103 = arith.constant 0 : index
    %98 = vector.load %arg6[%c1_100, %c2_101, %c0_102, %c0_103] : memref<3x9x4x12xbf16, #tpu.memory_space<vmem>>, vector<1x1x4x8xbf16>
    %99 = vector.shape_cast %98 : vector<1x1x4x8xbf16> to vector<4x8xbf16>
    %c0_104 = arith.constant 0 : index
    %c2_105 = arith.constant 2 : index
    %100 = vector.load %arg9[%c0_104, %c2_105] : memref<12x384xbf16, #tpu.memory_space<vmem>>, vector<8x288xbf16>
    %cst_106 = arith.constant dense<0.000000e+00> : vector<4x288xf32>
    %101 = tpu.matmul %99, %100, %cst_106 {dimension_numbers = #tpu.dot_dimension_numbers<[1], [0], [0], [1], [0, 0, 1, 1], [], []>} : vector<4x8xbf16>, vector<8x288xbf16>, vector<4x288xf32> -> vector<4x288xf32>
    %102 = arith.addf %97, %101 : vector<4x288xf32>
    %c1_107 = arith.constant 1 : index
    %c3_108 = arith.constant 3 : index
    %c0_109 = arith.constant 0 : index
    %c0_110 = arith.constant 0 : index
    %103 = vector.load %arg6[%c1_107, %c3_108, %c0_109, %c0_110] : memref<3x9x4x12xbf16, #tpu.memory_space<vmem>>, vector<1x1x4x8xbf16>
    %104 = vector.shape_cast %103 : vector<1x1x4x8xbf16> to vector<4x8xbf16>
    %c0_111 = arith.constant 0 : index
    %c18_112 = arith.constant 18 : index
    %105 = vector.load %arg9[%c0_111, %c18_112] : memref<12x384xbf16, #tpu.memory_space<vmem>>, vector<8x288xbf16>
    %cst_113 = arith.constant dense<0.000000e+00> : vector<4x288xf32>
    %106 = tpu.matmul %104, %105, %cst_113 {dimension_numbers = #tpu.dot_dimension_numbers<[1], [0], [0], [1], [0, 0, 1, 1], [], []>} : vector<4x8xbf16>, vector<8x288xbf16>, vector<4x288xf32> -> vector<4x288xf32>
    %107 = arith.addf %102, %106 : vector<4x288xf32>
    %c1_114 = arith.constant 1 : index
    %c4_115 = arith.constant 4 : index
    %c0_116 = arith.constant 0 : index
    %c0_117 = arith.constant 0 : index
    %108 = vector.load %arg6[%c1_114, %c4_115, %c0_116, %c0_117] : memref<3x9x4x12xbf16, #tpu.memory_space<vmem>>, vector<1x1x4x8xbf16>
    %109 = vector.shape_cast %108 : vector<1x1x4x8xbf16> to vector<4x8xbf16>
    %c0_118 = arith.constant 0 : index
    %c19_119 = arith.constant 19 : index
    %110 = vector.load %arg9[%c0_118, %c19_119] : memref<12x384xbf16, #tpu.memory_space<vmem>>, vector<8x288xbf16>
    %cst_120 = arith.constant dense<0.000000e+00> : vector<4x288xf32>
    %111 = tpu.matmul %109, %110, %cst_120 {dimension_numbers = #tpu.dot_dimension_numbers<[1], [0], [0], [1], [0, 0, 1, 1], [], []>} : vector<4x8xbf16>, vector<8x288xbf16>, vector<4x288xf32> -> vector<4x288xf32>
    %112 = arith.addf %107, %111 : vector<4x288xf32>
    %c1_121 = arith.constant 1 : index
    %c5_122 = arith.constant 5 : index
    %c0_123 = arith.constant 0 : index
    %c0_124 = arith.constant 0 : index
    %113 = vector.load %arg6[%c1_121, %c5_122, %c0_123, %c0_124] : memref<3x9x4x12xbf16, #tpu.memory_space<vmem>>, vector<1x1x4x8xbf16>
    %114 = vector.shape_cast %113 : vector<1x1x4x8xbf16> to vector<4x8xbf16>
    %c0_125 = arith.constant 0 : index
    %c20_126 = arith.constant 20 : index
    %115 = vector.load %arg9[%c0_125, %c20_126] : memref<12x384xbf16, #tpu.memory_space<vmem>>, vector<8x288xbf16>
    %cst_127 = arith.constant dense<0.000000e+00> : vector<4x288xf32>
    %116 = tpu.matmul %114, %115, %cst_127 {dimension_numbers = #tpu.dot_dimension_numbers<[1], [0], [0], [1], [0, 0, 1, 1], [], []>} : vector<4x8xbf16>, vector<8x288xbf16>, vector<4x288xf32> -> vector<4x288xf32>
    %117 = arith.addf %112, %116 : vector<4x288xf32>
    %c1_128 = arith.constant 1 : index
    %c6_129 = arith.constant 6 : index
    %c0_130 = arith.constant 0 : index
    %c0_131 = arith.constant 0 : index
    %118 = vector.load %arg6[%c1_128, %c6_129, %c0_130, %c0_131] : memref<3x9x4x12xbf16, #tpu.memory_space<vmem>>, vector<1x1x4x8xbf16>
    %119 = vector.shape_cast %118 : vector<1x1x4x8xbf16> to vector<4x8xbf16>
    %c0_132 = arith.constant 0 : index
    %c36_133 = arith.constant 36 : index
    %120 = vector.load %arg9[%c0_132, %c36_133] : memref<12x384xbf16, #tpu.memory_space<vmem>>, vector<8x288xbf16>
    %cst_134 = arith.constant dense<0.000000e+00> : vector<4x288xf32>
    %121 = tpu.matmul %119, %120, %cst_134 {dimension_numbers = #tpu.dot_dimension_numbers<[1], [0], [0], [1], [0, 0, 1, 1], [], []>} : vector<4x8xbf16>, vector<8x288xbf16>, vector<4x288xf32> -> vector<4x288xf32>
    %122 = arith.addf %117, %121 : vector<4x288xf32>
    %c1_135 = arith.constant 1 : index
    %c7_136 = arith.constant 7 : index
    %c0_137 = arith.constant 0 : index
    %c0_138 = arith.constant 0 : index
    %123 = vector.load %arg6[%c1_135, %c7_136, %c0_137, %c0_138] : memref<3x9x4x12xbf16, #tpu.memory_space<vmem>>, vector<1x1x4x8xbf16>
    %124 = vector.shape_cast %123 : vector<1x1x4x8xbf16> to vector<4x8xbf16>
    %c0_139 = arith.constant 0 : index
    %c37_140 = arith.constant 37 : index
    %125 = vector.load %arg9[%c0_139, %c37_140] : memref<12x384xbf16, #tpu.memory_space<vmem>>, vector<8x288xbf16>
    %cst_141 = arith.constant dense<0.000000e+00> : vector<4x288xf32>
    %126 = tpu.matmul %124, %125, %cst_141 {dimension_numbers = #tpu.dot_dimension_numbers<[1], [0], [0], [1], [0, 0, 1, 1], [], []>} : vector<4x8xbf16>, vector<8x288xbf16>, vector<4x288xf32> -> vector<4x288xf32>
    %127 = arith.addf %122, %126 : vector<4x288xf32>
    %c1_142 = arith.constant 1 : index
    %c8_143 = arith.constant 8 : index
    %c0_144 = arith.constant 0 : index
    %c0_145 = arith.constant 0 : index
    %128 = vector.load %arg6[%c1_142, %c8_143, %c0_144, %c0_145] : memref<3x9x4x12xbf16, #tpu.memory_space<vmem>>, vector<1x1x4x8xbf16>
    %129 = vector.shape_cast %128 : vector<1x1x4x8xbf16> to vector<4x8xbf16>
    %c0_146 = arith.constant 0 : index
    %c38_147 = arith.constant 38 : index
    %130 = vector.load %arg9[%c0_146, %c38_147] : memref<12x384xbf16, #tpu.memory_space<vmem>>, vector<8x288xbf16>
    %cst_148 = arith.constant dense<0.000000e+00> : vector<4x288xf32>
    %131 = tpu.matmul %129, %130, %cst_148 {dimension_numbers = #tpu.dot_dimension_numbers<[1], [0], [0], [1], [0, 0, 1, 1], [], []>} : vector<4x8xbf16>, vector<8x288xbf16>, vector<4x288xf32> -> vector<4x288xf32>
    %132 = arith.addf %127, %131 : vector<4x288xf32>
    %c0_149 = arith.constant 0 : index
    %c1_150 = arith.constant 1 : index
    %133 = vector.load %arg5[%c0_149, %c1_150] : memref<4x3xf32, #tpu.memory_space<vmem>>, vector<4x1xf32>
    %134 = vector.broadcast %133 : vector<4x1xf32> to vector<4x288xf32>
    %135 = arith.addf %132, %134 : vector<4x288xf32>
    %c0_151 = arith.constant 0 : index
    %c4_152 = arith.constant 4 : index
    %c0_153 = arith.constant 0 : index
    %136 = vector.load %arg7[%c0_151, %c4_152, %c0_153] : memref<1x12x288xf32, #tpu.memory_space<vmem>>, vector<1x4x288xf32>
    %137 = vector.shape_cast %136 : vector<1x4x288xf32> to vector<4x288xf32>
    %138 = vector.shape_cast %135 : vector<4x288xf32> to vector<1x4x288xf32>
    tpu.vector_store %arg7[%c0_151, %c4_152, %c0_153], %138 {strides = array<i32>} : memref<1x12x288xf32, #tpu.memory_space<vmem>>, vector<1x4x288xf32>,
    %c8_154 = arith.constant 8 : index
    %c0_155 = arith.constant 0 : index
    %139 = vector.load %arg8[%c8_154, %c0_155] : memref<12x288xf32, #tpu.memory_space<vmem>>, vector<4x288xf32>
    tpu.vector_store %arg8[%c8_154, %c0_155], %135 {strides = array<i32>} : memref<12x288xf32, #tpu.memory_space<vmem>>, vector<4x288xf32>,
    %c0_156 = arith.constant 0 : index
    %c0_157 = arith.constant 0 : index
    %140 = vector.load %arg8[%c0_156, %c0_157] : memref<12x288xf32, #tpu.memory_space<vmem>>, vector<12x288xf32>
    %c0_158 = arith.constant 0 : index
    %c2_159 = arith.constant 2 : index
    %141 = vector.load %arg3[%c0_158, %c2_159] : memref<12x3xf32, #tpu.memory_space<vmem>>, vector<12x1xf32>
    %142 = vector.broadcast %141 : vector<12x1xf32> to vector<12x288xf32>
    %143 = arith.mulf %140, %142 : vector<12x288xf32>
    %c0_160 = arith.constant 0 : index
    %c2_161 = arith.constant 2 : index
    %144 = vector.load %arg4[%c0_160, %c2_161] : memref<12x3xf32, #tpu.memory_space<vmem>>, vector<12x1xf32>
    %145 = vector.broadcast %144 : vector<12x1xf32> to vector<12x288xf32>
    %146 = arith.addf %143, %145 : vector<12x288xf32>
    %cst_162 = arith.constant 0.000000e+00 : f32
    %147 = vector.broadcast %cst_162 : f32 to vector<12x288xf32>
    %148 = arith.maximumf %146, %147 : vector<12x288xf32>
    %149 = vector.broadcast %7 : vector<1x288xf32> to vector<12x288xf32>
    %150 = arith.mulf %148, %149 : vector<12x288xf32>
    %151 = arith.truncf %150 : vector<12x288xf32> to vector<12x288xbf16>
    %c0_163 = arith.constant 0 : index
    %c19_164 = arith.constant 19 : index
    %152 = vector.load %arg9[%c0_163, %c19_164] : memref<12x384xbf16, #tpu.memory_space<vmem>>, vector<12x288xbf16>
    tpu.vector_store %arg9[%c0_163, %c19_164], %151 {strides = array<i32>} : memref<12x384xbf16, #tpu.memory_space<vmem>>, vector<12x288xbf16>,
    %cst_165 = arith.constant 0.000000e+00 : f32
    %153 = vector.broadcast %cst_165 : f32 to vector<4x288xf32>
    %c2_166 = arith.constant 2 : index
    %c0_167 = arith.constant 0 : index
    %c0_168 = arith.constant 0 : index
    %c0_169 = arith.constant 0 : index
    %154 = vector.load %arg6[%c2_166, %c0_167, %c0_168, %c0_169] : memref<3x9x4x12xbf16, #tpu.memory_space<vmem>>, vector<1x1x4x12xbf16>
    %155 = vector.shape_cast %154 : vector<1x1x4x12xbf16> to vector<4x12xbf16>
    %c0_170 = arith.constant 0 : index
    %c0_171 = arith.constant 0 : index
    %156 = vector.load %arg9[%c0_170, %c0_171] : memref<12x384xbf16, #tpu.memory_space<vmem>>, vector<12x288xbf16>
    %cst_172 = arith.constant dense<0.000000e+00> : vector<4x288xf32>
    %157 = tpu.matmul %155, %156, %cst_172 {dimension_numbers = #tpu.dot_dimension_numbers<[1], [0], [0], [1], [0, 0, 1, 1], [], []>} : vector<4x12xbf16>, vector<12x288xbf16>, vector<4x288xf32> -> vector<4x288xf32>
    %158 = arith.addf %153, %157 : vector<4x288xf32>
    %c2_173 = arith.constant 2 : index
    %c1_174 = arith.constant 1 : index
    %c0_175 = arith.constant 0 : index
    %c0_176 = arith.constant 0 : index
    %159 = vector.load %arg6[%c2_173, %c1_174, %c0_175, %c0_176] : memref<3x9x4x12xbf16, #tpu.memory_space<vmem>>, vector<1x1x4x12xbf16>
    %160 = vector.shape_cast %159 : vector<1x1x4x12xbf16> to vector<4x12xbf16>
    %c0_177 = arith.constant 0 : index
    %c1_178 = arith.constant 1 : index
    %161 = vector.load %arg9[%c0_177, %c1_178] : memref<12x384xbf16, #tpu.memory_space<vmem>>, vector<12x288xbf16>
    %cst_179 = arith.constant dense<0.000000e+00> : vector<4x288xf32>
    %162 = tpu.matmul %160, %161, %cst_179 {dimension_numbers = #tpu.dot_dimension_numbers<[1], [0], [0], [1], [0, 0, 1, 1], [], []>} : vector<4x12xbf16>, vector<12x288xbf16>, vector<4x288xf32> -> vector<4x288xf32>
    %163 = arith.addf %158, %162 : vector<4x288xf32>
    %c2_180 = arith.constant 2 : index
    %c2_181 = arith.constant 2 : index
    %c0_182 = arith.constant 0 : index
    %c0_183 = arith.constant 0 : index
    %164 = vector.load %arg6[%c2_180, %c2_181, %c0_182, %c0_183] : memref<3x9x4x12xbf16, #tpu.memory_space<vmem>>, vector<1x1x4x12xbf16>
    %165 = vector.shape_cast %164 : vector<1x1x4x12xbf16> to vector<4x12xbf16>
    %c0_184 = arith.constant 0 : index
    %c2_185 = arith.constant 2 : index
    %166 = vector.load %arg9[%c0_184, %c2_185] : memref<12x384xbf16, #tpu.memory_space<vmem>>, vector<12x288xbf16>
    %cst_186 = arith.constant dense<0.000000e+00> : vector<4x288xf32>
    %167 = tpu.matmul %165, %166, %cst_186 {dimension_numbers = #tpu.dot_dimension_numbers<[1], [0], [0], [1], [0, 0, 1, 1], [], []>} : vector<4x12xbf16>, vector<12x288xbf16>, vector<4x288xf32> -> vector<4x288xf32>
    %168 = arith.addf %163, %167 : vector<4x288xf32>
    %c2_187 = arith.constant 2 : index
    %c3_188 = arith.constant 3 : index
    %c0_189 = arith.constant 0 : index
    %c0_190 = arith.constant 0 : index
    %169 = vector.load %arg6[%c2_187, %c3_188, %c0_189, %c0_190] : memref<3x9x4x12xbf16, #tpu.memory_space<vmem>>, vector<1x1x4x12xbf16>
    %170 = vector.shape_cast %169 : vector<1x1x4x12xbf16> to vector<4x12xbf16>
    %c0_191 = arith.constant 0 : index
    %c18_192 = arith.constant 18 : index
    %171 = vector.load %arg9[%c0_191, %c18_192] : memref<12x384xbf16, #tpu.memory_space<vmem>>, vector<12x288xbf16>
    %cst_193 = arith.constant dense<0.000000e+00> : vector<4x288xf32>
    %172 = tpu.matmul %170, %171, %cst_193 {dimension_numbers = #tpu.dot_dimension_numbers<[1], [0], [0], [1], [0, 0, 1, 1], [], []>} : vector<4x12xbf16>, vector<12x288xbf16>, vector<4x288xf32> -> vector<4x288xf32>
    %173 = arith.addf %168, %172 : vector<4x288xf32>
    %c2_194 = arith.constant 2 : index
    %c4_195 = arith.constant 4 : index
    %c0_196 = arith.constant 0 : index
    %c0_197 = arith.constant 0 : index
    %174 = vector.load %arg6[%c2_194, %c4_195, %c0_196, %c0_197] : memref<3x9x4x12xbf16, #tpu.memory_space<vmem>>, vector<1x1x4x12xbf16>
    %175 = vector.shape_cast %174 : vector<1x1x4x12xbf16> to vector<4x12xbf16>
    %c0_198 = arith.constant 0 : index
    %c19_199 = arith.constant 19 : index
    %176 = vector.load %arg9[%c0_198, %c19_199] : memref<12x384xbf16, #tpu.memory_space<vmem>>, vector<12x288xbf16>
    %cst_200 = arith.constant dense<0.000000e+00> : vector<4x288xf32>
    %177 = tpu.matmul %175, %176, %cst_200 {dimension_numbers = #tpu.dot_dimension_numbers<[1], [0], [0], [1], [0, 0, 1, 1], [], []>} : vector<4x12xbf16>, vector<12x288xbf16>, vector<4x288xf32> -> vector<4x288xf32>
    %178 = arith.addf %173, %177 : vector<4x288xf32>
    %c2_201 = arith.constant 2 : index
    %c5_202 = arith.constant 5 : index
    %c0_203 = arith.constant 0 : index
    %c0_204 = arith.constant 0 : index
    %179 = vector.load %arg6[%c2_201, %c5_202, %c0_203, %c0_204] : memref<3x9x4x12xbf16, #tpu.memory_space<vmem>>, vector<1x1x4x12xbf16>
    %180 = vector.shape_cast %179 : vector<1x1x4x12xbf16> to vector<4x12xbf16>
    %c0_205 = arith.constant 0 : index
    %c20_206 = arith.constant 20 : index
    %181 = vector.load %arg9[%c0_205, %c20_206] : memref<12x384xbf16, #tpu.memory_space<vmem>>, vector<12x288xbf16>
    %cst_207 = arith.constant dense<0.000000e+00> : vector<4x288xf32>
    %182 = tpu.matmul %180, %181, %cst_207 {dimension_numbers = #tpu.dot_dimension_numbers<[1], [0], [0], [1], [0, 0, 1, 1], [], []>} : vector<4x12xbf16>, vector<12x288xbf16>, vector<4x288xf32> -> vector<4x288xf32>
    %183 = arith.addf %178, %182 : vector<4x288xf32>
    %c2_208 = arith.constant 2 : index
    %c6_209 = arith.constant 6 : index
    %c0_210 = arith.constant 0 : index
    %c0_211 = arith.constant 0 : index
    %184 = vector.load %arg6[%c2_208, %c6_209, %c0_210, %c0_211] : memref<3x9x4x12xbf16, #tpu.memory_space<vmem>>, vector<1x1x4x12xbf16>
    %185 = vector.shape_cast %184 : vector<1x1x4x12xbf16> to vector<4x12xbf16>
    %c0_212 = arith.constant 0 : index
    %c36_213 = arith.constant 36 : index
    %186 = vector.load %arg9[%c0_212, %c36_213] : memref<12x384xbf16, #tpu.memory_space<vmem>>, vector<12x288xbf16>
    %cst_214 = arith.constant dense<0.000000e+00> : vector<4x288xf32>
    %187 = tpu.matmul %185, %186, %cst_214 {dimension_numbers = #tpu.dot_dimension_numbers<[1], [0], [0], [1], [0, 0, 1, 1], [], []>} : vector<4x12xbf16>, vector<12x288xbf16>, vector<4x288xf32> -> vector<4x288xf32>
    %188 = arith.addf %183, %187 : vector<4x288xf32>
    %c2_215 = arith.constant 2 : index
    %c7_216 = arith.constant 7 : index
    %c0_217 = arith.constant 0 : index
    %c0_218 = arith.constant 0 : index
    %189 = vector.load %arg6[%c2_215, %c7_216, %c0_217, %c0_218] : memref<3x9x4x12xbf16, #tpu.memory_space<vmem>>, vector<1x1x4x12xbf16>
    %190 = vector.shape_cast %189 : vector<1x1x4x12xbf16> to vector<4x12xbf16>
    %c0_219 = arith.constant 0 : index
    %c37_220 = arith.constant 37 : index
    %191 = vector.load %arg9[%c0_219, %c37_220] : memref<12x384xbf16, #tpu.memory_space<vmem>>, vector<12x288xbf16>
    %cst_221 = arith.constant dense<0.000000e+00> : vector<4x288xf32>
    %192 = tpu.matmul %190, %191, %cst_221 {dimension_numbers = #tpu.dot_dimension_numbers<[1], [0], [0], [1], [0, 0, 1, 1], [], []>} : vector<4x12xbf16>, vector<12x288xbf16>, vector<4x288xf32> -> vector<4x288xf32>
    %193 = arith.addf %188, %192 : vector<4x288xf32>
    %c2_222 = arith.constant 2 : index
    %c8_223 = arith.constant 8 : index
    %c0_224 = arith.constant 0 : index
    %c0_225 = arith.constant 0 : index
    %194 = vector.load %arg6[%c2_222, %c8_223, %c0_224, %c0_225] : memref<3x9x4x12xbf16, #tpu.memory_space<vmem>>, vector<1x1x4x12xbf16>
    %195 = vector.shape_cast %194 : vector<1x1x4x12xbf16> to vector<4x12xbf16>
    %c0_226 = arith.constant 0 : index
    %c38_227 = arith.constant 38 : index
    %196 = vector.load %arg9[%c0_226, %c38_227] : memref<12x384xbf16, #tpu.memory_space<vmem>>, vector<12x288xbf16>
    %cst_228 = arith.constant dense<0.000000e+00> : vector<4x288xf32>
    %197 = tpu.matmul %195, %196, %cst_228 {dimension_numbers = #tpu.dot_dimension_numbers<[1], [0], [0], [1], [0, 0, 1, 1], [], []>} : vector<4x12xbf16>, vector<12x288xbf16>, vector<4x288xf32> -> vector<4x288xf32>
    %198 = arith.addf %193, %197 : vector<4x288xf32>
    %c0_229 = arith.constant 0 : index
    %c2_230 = arith.constant 2 : index
    %199 = vector.load %arg5[%c0_229, %c2_230] : memref<4x3xf32, #tpu.memory_space<vmem>>, vector<4x1xf32>
    %200 = vector.broadcast %199 : vector<4x1xf32> to vector<4x288xf32>
    %201 = arith.addf %198, %200 : vector<4x288xf32>
    %c0_231 = arith.constant 0 : index
    %c8_232 = arith.constant 8 : index
    %c0_233 = arith.constant 0 : index
    %202 = vector.load %arg7[%c0_231, %c8_232, %c0_233] : memref<1x12x288xf32, #tpu.memory_space<vmem>>, vector<1x4x288xf32>
    %203 = vector.shape_cast %202 : vector<1x4x288xf32> to vector<4x288xf32>
    %204 = vector.shape_cast %201 : vector<4x288xf32> to vector<1x4x288xf32>
    tpu.vector_store %arg7[%c0_231, %c8_232, %c0_233], %204 {strides = array<i32>} : memref<1x12x288xf32, #tpu.memory_space<vmem>>, vector<1x4x288xf32>,
    return
  }
  func.func @transform_0(%arg0: i32) -> (i32, i32, i32) {
    %c0_i32 = arith.constant 0 : i32
    %c0_i32_0 = arith.constant 0 : i32
    %c0_i32_1 = arith.constant 0 : i32
    return %arg0, %c0_i32, %c0_i32_0 : i32, i32, i32
  }
  func.func @transform_1(%arg0: i32) -> (i32, i32) {
    %c0_i32 = arith.constant 0 : i32
    %c0_i32_0 = arith.constant 0 : i32
    %c0_i32_1 = arith.constant 0 : i32
    return %c0_i32, %c0_i32_0 : i32, i32
  }
  func.func @transform_2(%arg0: i32) -> (i32, i32) {
    %c0_i32 = arith.constant 0 : i32
    %c0_i32_0 = arith.constant 0 : i32
    %c0_i32_1 = arith.constant 0 : i32
    return %c0_i32, %c0_i32_0 : i32, i32
  }
  func.func @transform_3(%arg0: i32) -> (i32, i32) {
    %c0_i32 = arith.constant 0 : i32
    %c0_i32_0 = arith.constant 0 : i32
    %c0_i32_1 = arith.constant 0 : i32
    return %c0_i32, %c0_i32_0 : i32, i32
  }
  func.func @transform_4(%arg0: i32) -> (i32, i32) {
    %c0_i32 = arith.constant 0 : i32
    %c0_i32_0 = arith.constant 0 : i32
    %c0_i32_1 = arith.constant 0 : i32
    return %c0_i32, %c0_i32_0 : i32, i32
  }
  func.func @transform_5(%arg0: i32) -> (i32, i32, i32, i32) {
    %c0_i32 = arith.constant 0 : i32
    %c0_i32_0 = arith.constant 0 : i32
    %c0_i32_1 = arith.constant 0 : i32
    %c0_i32_2 = arith.constant 0 : i32
    %c0_i32_3 = arith.constant 0 : i32
    return %c0_i32, %c0_i32_0, %c0_i32_1, %c0_i32_2 : i32, i32, i32, i32
  }
  func.func @transform_6(%arg0: i32) -> (i32, i32, i32) {
    %c0_i32 = arith.constant 0 : i32
    %c0_i32_0 = arith.constant 0 : i32
    %c0_i32_1 = arith.constant 0 : i32
    return %arg0, %c0_i32, %c0_i32_0 : i32, i32, i32
  }
}

</mosaic_0001>

<llo_original>
// kernel: dense_block_forward.1
$region0: #{dense_block_forward.1}
  #allocation0 [shape = 'u32[]', space=smem, size = 0x4, offset = 0x4, fixed_abs, tag = 'smem constant byte address 0x4 - core index']
  #allocation1 [shape = 'u32[144,128]{1,0:T(1,128)}', space=vmem, size = 0x12000, scoped, tag = 'internal scratch']
  #allocation2 [shape = 'f32[12,288]{1,0:T(8,128)}', space=vmem, size = 0x6000, scoped, tag = 'scratch operand']
  #allocation3 [shape = 'bf16[12,384]{1,0:T(8,128)(2,1)}', space=vmem, size = 0x3000, scoped, tag = 'scratch operand']
  %s0 = inlined_call_operand.hbm [shape: f32[2,4,288], index: 0, kind: input, shape index: {}]
  %s1 = inlined_call_operand.hbm [shape: f32[1,288], index: 1, kind: input, shape index: {}]
  %s2 = inlined_call_operand.hbm [shape: f32[12,3], index: 2, kind: input, shape index: {}]
  %s3 = inlined_call_operand.hbm [shape: f32[12,3], index: 3, kind: input, shape index: {}]
  %s4 = inlined_call_operand.hbm [shape: f32[4,3], index: 4, kind: input, shape index: {}]
  %s5 = inlined_call_operand.hbm [shape: bf16[3,9,4,12], index: 5, kind: input, shape index: {}]
  %s6 = inlined_call_operand.hbm [shape: f32[2,12,288], index: 6, kind: output, shape index: {}]
  %s7 = sld [smem:[#allocation0]]
  $region81: #{dense_block_forward.1} parent=0
    _
  %s9 = ssub.s32 1, %s7
  %s10 = scalar_select 0, %s9, %s7
  $region1: #{dense_block_forward.1} parent=0
    #allocation4 [shape = 'u8[12288]{0}', space=vmem, size = 0x3000, scoped, tag = 'input window, operand 0']
    #allocation5 [shape = 's32[2]{0}', space=sflag, size = 0x8, scoped, tag = 'scoped memory for dense_block_forward.1']
    #allocation6 [shape = 's32[2]{0}', space=sflag, size = 0x8, scoped, tag = 'scoped memory for dense_block_forward.1']
    #allocation7 [shape = 'u8[1536]{0}', space=vmem, size = 0x800, scoped, tag = 'input window, operand 1, single buffered']
    #allocation8 [shape = 's32[1]{0}', space=sflag, size = 0x4, scoped, tag = 'scoped memory for dense_block_forward.1']
    #allocation9 [shape = 'u8[8192]{0}', space=vmem, size = 0x2000, scoped, tag = 'input window, operand 2, single buffered']
    #allocation10 [shape = 'u8[8192]{0}', space=vmem, size = 0x2000, scoped, tag = 'input window, operand 3, single buffered']
    #allocation11 [shape = 's32[1]{0}', space=sflag, size = 0x4, scoped, tag = 'scoped memory for dense_block_forward.1']
    #allocation12 [shape = 'u8[2048]{0}', space=vmem, size = 0x800, scoped, tag = 'input window, operand 4, single buffered']
    #allocation13 [shape = 'u8[27648]{0}', space=vmem, size = 0x6c00, scoped, tag = 'input window, operand 5, single buffered']
    #allocation14 [shape = 's32[1]{0}', space=sflag, size = 0x4, scoped, tag = 'scoped memory for dense_block_forward.1']
    #allocation15 [shape = 'u8[49152]{0}', space=vmem, size = 0xc000, scoped, tag = 'output window, operand 0']
    %11 = vsyncpa [#allocation5], 0
    %s12 = scalar_lea.sflag [#allocation5], 1
    %13 = vsyncpa %s12, 0
    %14 = vsyncpa [#allocation8], 0
    %15 = vsyncpa [#allocation11], 0
    %16 = vsyncpa [#allocation14], 0
    %17 = vsyncpa [#allocation6], 0
    %s18 = scalar_lea.sflag [#allocation6], 1
    %19 = vsyncpa %s18, 0
    loop: start=0, step=1, limit=4
    $region2: #{dense_block_forward.1} parent=1 // loop_pre_header
      _
    $region3: #{dense_block_forward.1} parent=1 // loop_header
      %s21 = sphi 0, %s25
      %p22 = scmp.ge.s32.totalorder %s21, 4
      %s31 = sphi 0, %s33
      %s34 = sphi 0, %s31
      %s35 = sphi 0, %s34
      %s51 = sphi 0, %s35
      %s55 = sphi 0, %s55
      %s57 = sphi 0, %s55
      %s58 = sphi 0, %s57
      %s72 = sphi 0, %s58
      %s76 = sphi 0, %s76
      %s78 = sphi 0, %s76
      %s79 = sphi 0, %s78
      %s93 = sphi 0, %s79
      %s97 = sphi 0, %s97
      %s99 = sphi 0, %s97
      %s100 = sphi 0, %s99
      %s114 = sphi 0, %s100
      %s118 = sphi 0, %s118
      %s120 = sphi 0, %s118
      %s121 = sphi 0, %s120
      %s135 = sphi 0, %s121
      %s139 = sphi 0, %s139
      %s141 = sphi 0, %s139
      %s142 = sphi 0, %s141
      %s156 = sphi 0, %s142
      %s162 = sphi 0, %s164
      %s165 = sphi 0, %s162
      %s166 = sphi 0, %s165
      %s182 = sphi 0, %s166
    $region4: #{dense_block_forward.1} parent=1 // loop_header_branch
      %24 = sbr.rel (%p22) target = $region8
    $region5: #{dense_block_forward.1} parent=1 // loop_body
      %s26 = ssub.s32 %s21, 1
      %s27 = ssub.s32 %s21, 2
      %s28 = sadd.s32 %s21, 1
      %s29 = ssub.s32 %s21, %s28
      %p30 = scmp.eq.s32.totalorder %s29, 0
      %s32 = sadd.s32 %s31, 1
      %s33 = scalar_select %p30, %s31, %s32
      %p36 = pneg %p30
      %p37 = scmp.eq.s32.totalorder %s21, 1
      %p38 = por %p36, %p37
      %p39 = scmp.ne.s32.totalorder %s31, %s34
      %p40 = scmp.eq.s32.totalorder %s21, 0
      %p41 = por %p39, %p40
      %p42 = scmp.ne.s32.totalorder %s31, %s34
      %p43 = scmp.eq.s32.totalorder %s26, 1
      %p44 = por %p42, %p43
      %p45 = scmp.ne.s32.totalorder %s34, %s35
      %p46 = scmp.eq.s32.totalorder %s26, 0
      %p47 = por %p45, %p46
      %p48 = scmp.ne.s32.totalorder %s34, %s35
      %p49 = scmp.eq.s32.totalorder %s27, 1
      %p50 = por %p48, %p49
      %p52 = scmp.ne.s32.totalorder %s35, %s51
      %p53 = scmp.eq.s32.totalorder %s27, 0
      %p54 = por %p52, %p53
      %s56 = sadd.s32 %s55, 1
      %p59 = scmp.eq.s32.totalorder %s21, 1
      %p60 = scmp.ne.s32.totalorder %s55, %s57
      %p61 = scmp.eq.s32.totalorder %s21, 0
      %p62 = por %p60, %p61
      %p63 = scmp.ne.s32.totalorder %s55, %s57
      %p64 = scmp.eq.s32.totalorder %s26, 1
      %p65 = por %p63, %p64
      %p66 = scmp.ne.s32.totalorder %s57, %s58
      %p67 = scmp.eq.s32.totalorder %s26, 0
      %p68 = por %p66, %p67
      %p69 = scmp.ne.s32.totalorder %s57, %s58
      %p70 = scmp.eq.s32.totalorder %s27, 1
      %p71 = por %p69, %p70
      %p73 = scmp.ne.s32.totalorder %s58, %s72
      %p74 = scmp.eq.s32.totalorder %s27, 0
      %p75 = por %p73, %p74
      %s77 = sadd.s32 %s76, 1
      %p80 = scmp.eq.s32.totalorder %s21, 1
      %p81 = scmp.ne.s32.totalorder %s76, %s78
      %p82 = scmp.eq.s32.totalorder %s21, 0
      %p83 = por %p81, %p82
      %p84 = scmp.ne.s32.totalorder %s76, %s78
      %p85 = scmp.eq.s32.totalorder %s26, 1
      %p86 = por %p84, %p85
      %p87 = scmp.ne.s32.totalorder %s78, %s79
      %p88 = scmp.eq.s32.totalorder %s26, 0
      %p89 = por %p87, %p88
      %p90 = scmp.ne.s32.totalorder %s78, %s79
      %p91 = scmp.eq.s32.totalorder %s27, 1
      %p92 = por %p90, %p91
      %p94 = scmp.ne.s32.totalorder %s79, %s93
      %p95 = scmp.eq.s32.totalorder %s27, 0
      %p96 = por %p94, %p95
      %s98 = sadd.s32 %s97, 1
      %p101 = scmp.eq.s32.totalorder %s21, 1
      %p102 = scmp.ne.s32.totalorder %s97, %s99
      %p103 = scmp.eq.s32.totalorder %s21, 0
      %p104 = por %p102, %p103
      %p105 = scmp.ne.s32.totalorder %s97, %s99
      %p106 = scmp.eq.s32.totalorder %s26, 1
      %p107 = por %p105, %p106
      %p108 = scmp.ne.s32.totalorder %s99, %s100
      %p109 = scmp.eq.s32.totalorder %s26, 0
      %p110 = por %p108, %p109
      %p111 = scmp.ne.s32.totalorder %s99, %s100
      %p112 = scmp.eq.s32.totalorder %s27, 1
      %p113 = por %p111, %p112
      %p115 = scmp.ne.s32.totalorder %s100, %s114
      %p116 = scmp.eq.s32.totalorder %s27, 0
      %p117 = por %p115, %p116
      %s119 = sadd.s32 %s118, 1
      %p122 = scmp.eq.s32.totalorder %s21, 1
      %p123 = scmp.ne.s32.totalorder %s118, %s120
      %p124 = scmp.eq.s32.totalorder %s21, 0
      %p125 = por %p123, %p124
      %p126 = scmp.ne.s32.totalorder %s118, %s120
      %p127 = scmp.eq.s32.totalorder %s26, 1
      %p128 = por %p126, %p127
      %p129 = scmp.ne.s32.totalorder %s120, %s121
      %p130 = scmp.eq.s32.totalorder %s26, 0
      %p131 = por %p129, %p130
      %p132 = scmp.ne.s32.totalorder %s120, %s121
      %p133 = scmp.eq.s32.totalorder %s27, 1
      %p134 = por %p132, %p133
      %p136 = scmp.ne.s32.totalorder %s121, %s135
      %p137 = scmp.eq.s32.totalorder %s27, 0
      %p138 = por %p136, %p137
      %s140 = sadd.s32 %s139, 1
      %p143 = scmp.eq.s32.totalorder %s21, 1
      %p144 = scmp.ne.s32.totalorder %s139, %s141
      %p145 = scmp.eq.s32.totalorder %s21, 0
      %p146 = por %p144, %p145
      %p147 = scmp.ne.s32.totalorder %s139, %s141
      %p148 = scmp.eq.s32.totalorder %s26, 1
      %p149 = por %p147, %p148
      %p150 = scmp.ne.s32.totalorder %s141, %s142
      %p151 = scmp.eq.s32.totalorder %s26, 0
      %p152 = por %p150, %p151
      %p153 = scmp.ne.s32.totalorder %s141, %s142
      %p154 = scmp.eq.s32.totalorder %s27, 1
      %p155 = por %p153, %p154
      %p157 = scmp.ne.s32.totalorder %s142, %s156
      %p158 = scmp.eq.s32.totalorder %s27, 0
      %p159 = por %p157, %p158
      %s160 = ssub.s32 %s21, %s28
      %p161 = scmp.eq.s32.totalorder %s160, 0
      %s163 = sadd.s32 %s162, 1
      %s164 = scalar_select %p161, %s162, %s163
      %p167 = pneg %p161
      %p168 = scmp.eq.s32.totalorder %s21, 1
      %p169 = por %p167, %p168
      %p170 = scmp.ne.s32.totalorder %s162, %s165
      %p171 = scmp.eq.s32.totalorder %s21, 0
      %p172 = por %p170, %p171
      %p173 = scmp.ne.s32.totalorder %s162, %s165
      %p174 = scmp.eq.s32.totalorder %s26, 1
      %p175 = por %p173, %p174
      %p176 = scmp.ne.s32.totalorder %s165, %s166
      %p177 = scmp.eq.s32.totalorder %s26, 0
      %p178 = por %p176, %p177
      %p179 = scmp.ne.s32.totalorder %s165, %s166
      %p180 = scmp.eq.s32.totalorder %s27, 1
      %p181 = por %p179, %p180
      %p183 = scmp.ne.s32.totalorder %s166, %s182
      %p184 = scmp.eq.s32.totalorder %s27, 0
      %p185 = por %p183, %p184
      %p186 = scmp.le.s32.totalorder 1, %s21
      %p187 = scmp.lt.s32.totalorder %s21, 3
      %p188 = pnand %p186, %p187
      %p189 = pneg %p188
      // Predicated region
      $region9: #{dense_block_forward.1} parent=5 // pred_check
        _
      $region10: #{dense_block_forward.1} parent=5 // pred_check_branch
        %191 = sbr.rel (%p188) target = $region12
      $region11: #{dense_block_forward.1} parent=5 // pred_region
        %s192 = ssub.s32 %s21, 1
        // Predicated region
        $region13: #{dense_block_forward.1} parent=11 // pred_check
          %p193 = pneg %p68
        $region14: #{dense_block_forward.1} parent=11 // pred_check_branch
          %195 = sbr.rel (%p193) target = $region16
        $region15: #{dense_block_forward.1} parent=11 // pred_region
          %s197 = ssub.s32 48, 48
          %198 = vsyncadd [#allocation8], %s197
          %s200 = sshll.u32 [#allocation7], 4
          %s201 = int_to_ptr.vmem [resolvable:$true] %s200
          %203 = dma.hbm_to_vmem [thread:$0]  %s1, 48, %s201, [#allocation8]
        $region16: #{dense_block_forward.1} parent=11 // pred_fallthru
          _
        // Predicated region
        $region17: #{dense_block_forward.1} parent=11 // pred_check
          %p204 = pneg %p89
        $region18: #{dense_block_forward.1} parent=11 // pred_check_branch
          %206 = sbr.rel (%p204) target = $region20
        $region19: #{dense_block_forward.1} parent=11 // pred_region
          %s208 = ssub.s32 256, 256
          %209 = vsyncadd [#allocation8], %s208
          %s210 = sshll.u32 [#allocation9], 4
          %s211 = int_to_ptr.vmem [resolvable:$true] %s210
          %216 = dma.hbm_to_vmem [thread:$0]  %s2, 256, %s211, [#allocation8], 128, 128, 8
        $region20: #{dense_block_forward.1} parent=11 // pred_fallthru
          _
        // Predicated region
        $region21: #{dense_block_forward.1} parent=11 // pred_check
          %p217 = pneg %p110
        $region22: #{dense_block_forward.1} parent=11 // pred_check_branch
          %219 = sbr.rel (%p217) target = $region24
        $region23: #{dense_block_forward.1} parent=11 // pred_region
          %s221 = ssub.s32 256, 256
          %222 = vsyncadd [#allocation11], %s221
          %s223 = sshll.u32 [#allocation10], 4
          %s224 = int_to_ptr.vmem [resolvable:$true] %s223
          %229 = dma.hbm_to_vmem [thread:$0]  %s3, 256, %s224, [#allocation11], 128, 128, 8
        $region24: #{dense_block_forward.1} parent=11 // pred_fallthru
          _
        // Predicated region
        $region25: #{dense_block_forward.1} parent=11 // pred_check
          %p230 = pneg %p131
        $region26: #{dense_block_forward.1} parent=11 // pred_check_branch
          %232 = sbr.rel (%p230) target = $region28
        $region27: #{dense_block_forward.1} parent=11 // pred_region
          %s234 = ssub.s32 64, 64
          %235 = vsyncadd [#allocation11], %s234
          %s237 = sshll.u32 [#allocation12], 4
          %s238 = int_to_ptr.vmem [resolvable:$true] %s237
          %240 = dma.hbm_to_vmem [thread:$0]  %s4, 64, %s238, [#allocation11]
        $region28: #{dense_block_forward.1} parent=11 // pred_fallthru
          _
        // Predicated region
        $region29: #{dense_block_forward.1} parent=11 // pred_check
          %p241 = pneg %p152
        $region30: #{dense_block_forward.1} parent=11 // pred_check_branch
          %243 = sbr.rel (%p241) target = $region32
        $region31: #{dense_block_forward.1} parent=11 // pred_region
          %s245 = ssub.s32 864, 864
          %246 = vsyncadd [#allocation14], %s245
          %s247 = sshll.u32 [#allocation13], 4
          %s248 = int_to_ptr.vmem [resolvable:$true] %s247
          %253 = dma.hbm_to_vmem [thread:$0]  %s5, 864, %s248, [#allocation14], 32, 32, 2
        $region32: #{dense_block_forward.1} parent=11 // pred_fallthru
          _
      $region12: #{dense_block_forward.1} parent=5 // pred_fallthru
        _
      %p254 = scmp.lt.s32.totalorder %s21, 2
      // Predicated region
      $region33: #{dense_block_forward.1} parent=5 // pred_check
        %p255 = pneg %p254
      $region34: #{dense_block_forward.1} parent=5 // pred_check_branch
        %257 = sbr.rel (%p255) target = $region36
      $region35: #{dense_block_forward.1} parent=5 // pred_region
        // Predicated region
        $region37: #{dense_block_forward.1} parent=35 // pred_check
          %p258 = pneg %p41
        $region38: #{dense_block_forward.1} parent=35 // pred_check_branch
          %260 = sbr.rel (%p258) target = $region40
        $region39: #{dense_block_forward.1} parent=35 // pred_region
          %s261 = sand.u32 %s31, 1
          %s262 = scalar_lea.sflag [#allocation5], %s261
          %s263 = sand.u32 %s31, 1
          %s264 = smul.addr %s263, 12
          %s265 = scalar_lea.vmem [#allocation4], %s264
          %s267 = ssub.s32 192, 192
          %268 = vsyncadd %s262, %s267
          %s269 = smul.addr %s21, 3
          %s270 = smul.addr %s269, 64
          %s271 = scalar_lea.hbm %s0, %s270
          %s273 = sshll.u32 %s265, 4
          %s274 = int_to_ptr.vmem [resolvable:$true] %s273
          %276 = dma.hbm_to_vmem [thread:$0]  %s271, 192, %s274, %s262
        $region40: #{dense_block_forward.1} parent=35 // pred_fallthru
          _
      $region36: #{dense_block_forward.1} parent=5 // pred_fallthru
        _
      %p277 = scmp.le.s32.totalorder 1, %s21
      %p278 = scmp.lt.s32.totalorder %s21, 3
      %p279 = pnand %p277, %p278
      %p280 = pneg %p279
      // Predicated region
      $region41: #{dense_block_forward.1} parent=5 // pred_check
        _
      $region42: #{dense_block_forward.1} parent=5 // pred_check_branch
        %282 = sbr.rel (%p279) target = $region44
      $region43: #{dense_block_forward.1} parent=5 // pred_region
        %s283 = ssub.s32 %s21, 1
        %s284 = sand.u32 %s34, 1
        %s285 = scalar_lea.sflag [#allocation5], %s284
        %s286 = sand.u32 %s34, 1
        %s287 = smul.addr %s286, 12
        %s288 = scalar_lea.vmem [#allocation4], %s287
        // Predicated region
        $region45: #{dense_block_forward.1} parent=43 // pred_check
          %p289 = pneg %p47
        $region46: #{dense_block_forward.1} parent=43 // pred_check_branch
          %291 = sbr.rel (%p289) target = $region48
        $region47: #{dense_block_forward.1} parent=43 // pred_region
          %292 = dma.done %s285, 192
        $region48: #{dense_block_forward.1} parent=43 // pred_fallthru
          _
        // Predicated region
        $region49: #{dense_block_forward.1} parent=43 // pred_check
          %p293 = pneg %p68
        $region50: #{dense_block_forward.1} parent=43 // pred_check_branch
          %295 = sbr.rel (%p293) target = $region52
        $region51: #{dense_block_forward.1} parent=43 // pred_region
          %296 = dma.done [#allocation8], 48
        $region52: #{dense_block_forward.1} parent=43 // pred_fallthru
          _
        // Predicated region
        $region53: #{dense_block_forward.1} parent=43 // pred_check
          %p297 = pneg %p89
        $region54: #{dense_block_forward.1} parent=43 // pred_check_branch
          %299 = sbr.rel (%p297) target = $region56
        $region55: #{dense_block_forward.1} parent=43 // pred_region
          %300 = dma.done [#allocation8], 256
        $region56: #{dense_block_forward.1} parent=43 // pred_fallthru
          _
        // Predicated region
        $region57: #{dense_block_forward.1} parent=43 // pred_check
          %p301 = pneg %p110
        $region58: #{dense_block_forward.1} parent=43 // pred_check_branch
          %303 = sbr.rel (%p301) target = $region60
        $region59: #{dense_block_forward.1} parent=43 // pred_region
          %304 = dma.done [#allocation11], 256
        $region60: #{dense_block_forward.1} parent=43 // pred_fallthru
          _
        // Predicated region
        $region61: #{dense_block_forward.1} parent=43 // pred_check
          %p305 = pneg %p131
        $region62: #{dense_block_forward.1} parent=43 // pred_check_branch
          %307 = sbr.rel (%p305) target = $region64
        $region63: #{dense_block_forward.1} parent=43 // pred_region
          %308 = dma.done [#allocation11], 64
        $region64: #{dense_block_forward.1} parent=43 // pred_fallthru
          _
        // Predicated region
        $region65: #{dense_block_forward.1} parent=43 // pred_check
          %p309 = pneg %p152
        $region66: #{dense_block_forward.1} parent=43 // pred_check_branch
          %311 = sbr.rel (%p309) target = $region68
        $region67: #{dense_block_forward.1} parent=43 // pred_region
          %312 = dma.done [#allocation14], 864
        $region68: #{dense_block_forward.1} parent=43 // pred_fallthru
          _
        %s313 = sand.u32 %s34, 1
        %s314 = scalar_lea.sflag [#allocation5], %s313
        %s315 = sand.u32 %s34, 1
        %s316 = smul.addr %s315, 12
        %s317 = scalar_lea.vmem [#allocation4], %s316
        %p318 = pneg %p47
        %p319 = pneg %p44
        %p320 = pneg %p68
        %p321 = pneg %p65
        %p322 = pneg %p89
        %p323 = pneg %p86
        %p324 = pneg %p110
        %p325 = pneg %p107
        %p326 = pneg %p131
        %p327 = pneg %p128
        %p328 = pneg %p152
        %p329 = pneg %p149
        %p330 = pneg %p178
        %p331 = pneg %p175
        %s332 = sand.u32 %s165, 1
        %s333 = scalar_lea.sflag [#allocation6], %s332
        %s334 = sand.u32 %s165, 1
        %s335 = smul.addr %s334, 48
        %s336 = scalar_lea.vmem [#allocation15], %s335
        %vm338 = vcmask 150528
        %339 = vst.msk [vmem:[#allocation3] sm:$0xf] %vm338, 0
        %vm340 = vcmask 148480
        %341 = vst.msk [vmem:[#allocation3 + $0xc] sm:$0x3] %vm340, 0
        %vm342 = vcmask 1043864
        %343 = vst.msk [vmem:[#allocation3 + $0x8] sm:$0xf] %vm342, 0
        %vm344 = vcmask 1041816
        %345 = vst.msk [vmem:[#allocation3 + $0x14] sm:$0x3] %vm344, 0
        %v346 = vld [vmem:[%s288] sm:$0xff]
        %v347 = vld [vmem:[%s288 + $0x8] sm:$0xf]
        %v349 = vcombine.high %v346, %v346
        %351 = vst [vmem:[#allocation2] sm:$0xf] %v346
        %352 = vst [vmem:[#allocation2 + $0x8] sm:$0xf] %v349
        %vm353 = vcmask 257024
        %354 = vst.msk [vmem:[#allocation2 + $0x10] sm:$0xf] %vm353, %v347
        %v355 = vld [vmem:[#allocation7] sm:$0x7]
        %v356 = vld [vmem:[#allocation2] sm:$0xf]
        %v357 = vld [vmem:[#allocation2 + $0x8] sm:$0xf]
        %v358 = vld [vmem:[#allocation2 + $0x10] sm:$0xf]
        %v359 = vld [vmem:[#allocation9] sm:$0xf]
        %361 = vset.pattern.permute.xlu0 0
        %362 = vperm.xlu0 %361, %v359
        %v363 = vpop.permute.xlu0 %362
        %v365 = vmul.f32 %v356, %v363
        %v366 = vmul.f32 %v357, %v363
        %v367 = vmul.f32 %v358, %v363
        %v368 = vld [vmem:[#allocation10] sm:$0xf]
        %370 = vset.pattern.permute.xlu0 0
        %371 = vperm.xlu0 %370, %v368
        %v372 = vpop.permute.xlu0 %371
        %v374 = vadd.f32 %v365, %v372
        %v375 = vadd.f32 %v366, %v372
        %v376 = vadd.f32 %v367, %v372
        %v377 = vmax.f32 %v374, 0.0
        %v378 = vmax.f32 %v375, 0.0
        %v379 = vmax.f32 %v376, 0.0
        %v381 = vlaneseq
        %v382 = vshrl.u32 %v381, 7
        %v383 = vsub.s32 0, %v382
        %v384 = vrot.slane %v355, %v383
        %v385 = vlaneseq
        %v386 = vshrl.u32 %v385, 7
        %v387 = vsub.s32 1, %v386
        %v388 = vrot.slane %v355, %v387
        %v389 = vlaneseq
        %v390 = vshrl.u32 %v389, 7
        %v391 = vsub.s32 2, %v390
        %v392 = vrot.slane %v355, %v391
        %v396 = vmul.f32 %v377, %v384
        %v397 = vmul.f32 %v378, %v388
        %v398 = vmul.f32 %v379, %v392
        %v399 = vpack.c.bf16 %v396, %v396
        %v400 = vpack.c.bf16 %v397, %v397
        %v401 = vpack.c.bf16 %v398, %v398
        %v405 = vunpack.c.l.b16 %v399
        %v406 = vunpack.c.l.b16 %v400
        %v407 = vunpack.c.l.b16 %v401
        %v408 = vpack.c.b16 %v406, %v405
        %v409 = vpack.c.b16 %v407, %v407
        %410 = vrot.lane.b32.xlu0 %v408, 19
        %v411 = vpop.permute.xlu0 %410
        %412 = vrot.lane.b32.xlu0 %v409, 19
        %v413 = vpop.permute.xlu0 %412
        %v414 = vrot.slane %v411, 4
        %vm415 = vcmask 154624
        %v416 = vsel %vm415, %v414, %v411
        %v417 = vsel %vm415, %v414, %v413
        %vm420 = vcmask 1041560
        %vm421 = vcmask 1045508
        %vm422 = vmor %vm421, %vm420
        %423 = vst.msk [vmem:[#allocation3] sm:$0x33] %vm422, %v416
        %vm424 = vcmask 410624
        %425 = vst.msk [vmem:[#allocation3 + $0x8] sm:$0x3] %vm424, %v417
        %v426 = vld [vmem:[#allocation13] sm:$0x3]
        %v427 = vld [vmem:[#allocation3] sm:$0x33]
        %v428 = vld [vmem:[#allocation3 + $0x8] sm:$0x3]
        %s429 = scalar_lea.vmem [#allocation13], 2
        %v430 = vld [vmem:[%s429] sm:$0x3]
        %v433 = vunpack.c.l.b16 %v427
        %v434 = vunpack.c.h.b16 %v427
        %v435 = vunpack.c.l.b16 %v428
        %v436 = vpack.c.b16 %v433, %v433
        %v437 = vpack.c.b16 %v434, %v434
        %v438 = vpack.c.b16 %v435, %v435
        %439 = vrot.lane.b32.xlu0 %v436, 127
        %v440 = vpop.permute.xlu0 %439
        %441 = vrot.lane.b32.xlu0 %v437, 127
        %v442 = vpop.permute.xlu0 %441
        %443 = vrot.lane.b32.xlu0 %v438, 127
        %v444 = vpop.permute.xlu0 %443
        %vm445 = vcmask 1039360
        %v446 = vsel %vm445, %v440, %v442
        %v447 = vsel %vm445, %v442, %v444
        %vm448 = vcmask 31744
        %v450 = vsel %vm448, %v430, 0
        %vm452 = vcmask 1041408
        %v454 = vsel %vm452, %v446, 0
        %v457 = vsel %vm452, %v447, 0
        %v460 = vsel %vm452, %v444, 0
        %462 = vmatprep.subr.bf16.mxu0 %v457
        %463 = vmatpush1.bf16.msra.mxu0 %v454
        %464 = vmatprep.subr.bf16.mxu0 0
        %465 = vmatpush1.bf16.msra.mxu0 0
        %466 = vmatprep.subr.bf16.mxu0 0
        %467 = vmatpush1.bf16.msra.mxu0 0
        %468 = vmatprep.subr.bf16.mxu0 0
        %469 = vmatpush1.bf16.msra.mxu0 0
        %470 = vmatprep.subr.bf16.mxu0 0
        %471 = vmatpush1.bf16.msra.mxu0 0
        %472 = vmatprep.subr.bf16.mxu0 0
        %473 = vmatpush1.bf16.msra.mxu0 0
        %474 = vmatprep.subr.bf16.mxu0 0
        %475 = vmatpush1.bf16.msra.mxu0 0
        %476 = vmatprep.subr.bf16.mxu0 0
        %477 = vmatpush1.bf16.msra.mxu0 0
        %478 = vmatprep.subr.bf16.mxu0 0
        %479 = vmatpush1.bf16.msra.mxu0 0
        %480 = vmatprep.subr.bf16.mxu0 0
        %481 = vmatpush1.bf16.msra.mxu0 0
        %482 = vmatprep.subr.bf16.mxu0 0
        %483 = vmatpush1.bf16.msra.mxu0 0
        %484 = vmatprep.subr.bf16.mxu0 0
        %485 = vmatpush1.bf16.msra.mxu0 0
        %486 = vmatprep.subr.bf16.mxu0 0
        %487 = vmatpush1.bf16.msra.mxu0 0
        %488 = vmatprep.subr.bf16.mxu0 0
        %489 = vmatpush1.bf16.msra.mxu0 0
        %490 = vmatprep.subr.bf16.mxu0 0
        %491 = vmatpush1.bf16.msra.mxu0 0
        %492 = vmatprep.subr.bf16.mxu0 0
        %493 = vmatpush1.bf16.msra.mxu0 0
        %494 = vmatprep.mubr.bf16.mxu0 0
        %495 = vmatmul.mubr.bf16.gmra.mrb[0].mxu0 %v450
        %v496 = vpop.f32.mrb[0].mxu0
        %v497 = vadd.f32 0.0, %v496
        %v498 = vpop.f32.mrb[0].mxu0
        %v499 = vadd.f32 0.0, %v498
        %v500 = vpop.f32.mrb[0].mxu0
        %v501 = vpop.f32.mrb[0].mxu0
        %502 = vdwg.mxu0
        %503 = vmatprep.subr.bf16.mxu0 0
        %504 = vmatpush1.bf16.msra.mxu0 %v460
        %505 = vmatprep.subr.bf16.mxu0 0
        %506 = vmatpush1.bf16.msra.mxu0 0
        %507 = vmatprep.subr.bf16.mxu0 0
        %508 = vmatpush1.bf16.msra.mxu0 0
        %509 = vmatprep.subr.bf16.mxu0 0
        %510 = vmatpush1.bf16.msra.mxu0 0
        %511 = vmatprep.subr.bf16.mxu0 0
        %512 = vmatpush1.bf16.msra.mxu0 0
        %513 = vmatprep.subr.bf16.mxu0 0
        %514 = vmatpush1.bf16.msra.mxu0 0
        %515 = vmatprep.subr.bf16.mxu0 0
        %516 = vmatpush1.bf16.msra.mxu0 0
        %517 = vmatprep.subr.bf16.mxu0 0
        %518 = vmatpush1.bf16.msra.mxu0 0
        %519 = vmatprep.subr.bf16.mxu0 0
        %520 = vmatpush1.bf16.msra.mxu0 0
        %521 = vmatprep.subr.bf16.mxu0 0
        %522 = vmatpush1.bf16.msra.mxu0 0
        %523 = vmatprep.subr.bf16.mxu0 0
        %524 = vmatpush1.bf16.msra.mxu0 0
        %525 = vmatprep.subr.bf16.mxu0 0
        %526 = vmatpush1.bf16.msra.mxu0 0
        %527 = vmatprep.subr.bf16.mxu0 0
        %528 = vmatpush1.bf16.msra.mxu0 0
        %529 = vmatprep.subr.bf16.mxu0 0
        %530 = vmatpush1.bf16.msra.mxu0 0
        %531 = vmatprep.subr.bf16.mxu0 0
        %532 = vmatpush1.bf16.msra.mxu0 0
        %533 = vmatprep.subr.bf16.mxu0 0
        %534 = vmatpush1.bf16.msra.mxu0 0
        %535 = vmatprep.mubr.bf16.mxu0 0
        %536 = vmatmul.mubr.bf16.gmra.mrb[0].mxu0 %v450
        %v537 = vpop.f32.mrb[0].mxu0
        %v538 = vadd.f32 0.0, %v537
        %v539 = vpop.f32.mrb[0].mxu0
        %v540 = vpop.f32.mrb[0].mxu0
        %v541 = vpop.f32.mrb[0].mxu0
        %542 = vdwg.mxu0
        %v544 = vsel %vm448, %v426, 0
        %v547 = vsel %vm452, %v436, 0
        %v550 = vsel %vm452, %v437, 0
        %v553 = vsel %vm452, %v438, 0
        %555 = vmatprep.subr.bf16.mxu0 %v550
        %556 = vmatpush1.bf16.msra.mxu0 %v547
        %557 = vmatprep.subr.bf16.mxu0 0
        %558 = vmatpush1.bf16.msra.mxu0 0
        %559 = vmatprep.subr.bf16.mxu0 0
        %560 = vmatpush1.bf16.msra.mxu0 0
        %561 = vmatprep.subr.bf16.mxu0 0
        %562 = vmatpush1.bf16.msra.mxu0 0
        %563 = vmatprep.subr.bf16.mxu0 0
        %564 = vmatpush1.bf16.msra.mxu0 0
        %565 = vmatprep.subr.bf16.mxu0 0
        %566 = vmatpush1.bf16.msra.mxu0 0
        %567 = vmatprep.subr.bf16.mxu0 0
        %568 = vmatpush1.bf16.msra.mxu0 0
        %569 = vmatprep.subr.bf16.mxu0 0
        %570 = vmatpush1.bf16.msra.mxu0 0
        %571 = vmatprep.subr.bf16.mxu0 0
        %572 = vmatpush1.bf16.msra.mxu0 0
        %573 = vmatprep.subr.bf16.mxu0 0
        %574 = vmatpush1.bf16.msra.mxu0 0
        %575 = vmatprep.subr.bf16.mxu0 0
        %576 = vmatpush1.bf16.msra.mxu0 0
        %577 = vmatprep.subr.bf16.mxu0 0
        %578 = vmatpush1.bf16.msra.mxu0 0
        %579 = vmatprep.subr.bf16.mxu0 0
        %580 = vmatpush1.bf16.msra.mxu0 0
        %581 = vmatprep.subr.bf16.mxu0 0
        %582 = vmatpush1.bf16.msra.mxu0 0
        %583 = vmatprep.subr.bf16.mxu0 0
        %584 = vmatpush1.bf16.msra.mxu0 0
        %585 = vmatprep.subr.bf16.mxu0 0
        %586 = vmatpush1.bf16.msra.mxu0 0
        %587 = vmatprep.mubr.bf16.mxu0 0
        %588 = vmatmul.mubr.bf16.gmra.mrb[0].mxu0 %v544
        %v589 = vpop.f32.mrb[0].mxu0
        %v590 = vadd.f32 %v497, %v589
        %v591 = vpop.f32.mrb[0].mxu0
        %v592 = vadd.f32 %v499, %v591
        %v593 = vpop.f32.mrb[0].mxu0
        %v594 = vpop.f32.mrb[0].mxu0
        %595 = vdwg.mxu0
        %596 = vmatprep.subr.bf16.mxu0 0
        %597 = vmatpush1.bf16.msra.mxu0 %v553
        %598 = vmatprep.subr.bf16.mxu0 0
        %599 = vmatpush1.bf16.msra.mxu0 0
        %600 = vmatprep.subr.bf16.mxu0 0
        %601 = vmatpush1.bf16.msra.mxu0 0
        %602 = vmatprep.subr.bf16.mxu0 0
        %603 = vmatpush1.bf16.msra.mxu0 0
        %604 = vmatprep.subr.bf16.mxu0 0
        %605 = vmatpush1.bf16.msra.mxu0 0
        %606 = vmatprep.subr.bf16.mxu0 0
        %607 = vmatpush1.bf16.msra.mxu0 0
        %608 = vmatprep.subr.bf16.mxu0 0
        %609 = vmatpush1.bf16.msra.mxu0 0
        %610 = vmatprep.subr.bf16.mxu0 0
        %611 = vmatpush1.bf16.msra.mxu0 0
        %612 = vmatprep.subr.bf16.mxu0 0
        %613 = vmatpush1.bf16.msra.mxu0 0
        %614 = vmatprep.subr.bf16.mxu0 0
        %615 = vmatpush1.bf16.msra.mxu0 0
        %616 = vmatprep.subr.bf16.mxu0 0
        %617 = vmatpush1.bf16.msra.mxu0 0
        %618 = vmatprep.subr.bf16.mxu0 0
        %619 = vmatpush1.bf16.msra.mxu0 0
        %620 = vmatprep.subr.bf16.mxu0 0
        %621 = vmatpush1.bf16.msra.mxu0 0
        %622 = vmatprep.subr.bf16.mxu0 0
        %623 = vmatpush1.bf16.msra.mxu0 0
        %624 = vmatprep.subr.bf16.mxu0 0
        %625 = vmatpush1.bf16.msra.mxu0 0
        %626 = vmatprep.subr.bf16.mxu0 0
        %627 = vmatpush1.bf16.msra.mxu0 0
        %628 = vmatprep.mubr.bf16.mxu0 0
        %629 = vmatmul.mubr.bf16.gmra.mrb[0].mxu0 %v544
        %v630 = vpop.f32.mrb[0].mxu0
        %v631 = vadd.f32 %v538, %v630
        %v632 = vpop.f32.mrb[0].mxu0
        %v633 = vpop.f32.mrb[0].mxu0
        %v634 = vpop.f32.mrb[0].mxu0
        %635 = vdwg.mxu0
        %s636 = scalar_lea.vmem [#allocation13], 4
        %v637 = vld [vmem:[%s636] sm:$0x3]
        %638 = vrot.lane.b32.xlu0 %v436, 126
        %v639 = vpop.permute.xlu0 %638
        %640 = vrot.lane.b32.xlu0 %v437, 126
        %v641 = vpop.permute.xlu0 %640
        %642 = vrot.lane.b32.xlu0 %v438, 126
        %v643 = vpop.permute.xlu0 %642
        %vm644 = vcmask 1031168
        %v645 = vsel %vm644, %v639, %v641
        %v646 = vsel %vm644, %v641, %v643
        %v648 = vsel %vm448, %v637, 0
        %v651 = vsel %vm452, %v645, 0
        %v654 = vsel %vm452, %v646, 0
        %v657 = vsel %vm452, %v643, 0
        %659 = vmatprep.subr.bf16.mxu0 %v654
        %660 = vmatpush1.bf16.msra.mxu0 %v651
        %661 = vmatprep.subr.bf16.mxu0 0
        %662 = vmatpush1.bf16.msra.mxu0 0
        %663 = vmatprep.subr.bf16.mxu0 0
        %664 = vmatpush1.bf16.msra.mxu0 0
        %665 = vmatprep.subr.bf16.mxu0 0
        %666 = vmatpush1.bf16.msra.mxu0 0
        %667 = vmatprep.subr.bf16.mxu0 0
        %668 = vmatpush1.bf16.msra.mxu0 0
        %669 = vmatprep.subr.bf16.mxu0 0
        %670 = vmatpush1.bf16.msra.mxu0 0
        %671 = vmatprep.subr.bf16.mxu0 0
        %672 = vmatpush1.bf16.msra.mxu0 0
        %673 = vmatprep.subr.bf16.mxu0 0
        %674 = vmatpush1.bf16.msra.mxu0 0
        %675 = vmatprep.subr.bf16.mxu0 0
        %676 = vmatpush1.bf16.msra.mxu0 0
        %677 = vmatprep.subr.bf16.mxu0 0
        %678 = vmatpush1.bf16.msra.mxu0 0
        %679 = vmatprep.subr.bf16.mxu0 0
        %680 = vmatpush1.bf16.msra.mxu0 0
        %681 = vmatprep.subr.bf16.mxu0 0
        %682 = vmatpush1.bf16.msra.mxu0 0
        %683 = vmatprep.subr.bf16.mxu0 0
        %684 = vmatpush1.bf16.msra.mxu0 0
        %685 = vmatprep.subr.bf16.mxu0 0
        %686 = vmatpush1.bf16.msra.mxu0 0
        %687 = vmatprep.subr.bf16.mxu0 0
        %688 = vmatpush1.bf16.msra.mxu0 0
        %689 = vmatprep.subr.bf16.mxu0 0
        %690 = vmatpush1.bf16.msra.mxu0 0
        %691 = vmatprep.mubr.bf16.mxu0 0
        %692 = vmatmul.mubr.bf16.gmra.mrb[0].mxu0 %v648
        %v693 = vpop.f32.mrb[0].mxu0
        %v694 = vadd.f32 0.0, %v693
        %v695 = vpop.f32.mrb[0].mxu0
        %v696 = vadd.f32 0.0, %v695
        %v697 = vpop.f32.mrb[0].mxu0
        %v698 = vpop.f32.mrb[0].mxu0
        %699 = vdwg.mxu0
        %700 = vmatprep.subr.bf16.mxu0 0
        %701 = vmatpush1.bf16.msra.mxu0 %v657
        %702 = vmatprep.subr.bf16.mxu0 0
        %703 = vmatpush1.bf16.msra.mxu0 0
        %704 = vmatprep.subr.bf16.mxu0 0
        %705 = vmatpush1.bf16.msra.mxu0 0
        %706 = vmatprep.subr.bf16.mxu0 0
        %707 = vmatpush1.bf16.msra.mxu0 0
        %708 = vmatprep.subr.bf16.mxu0 0
        %709 = vmatpush1.bf16.msra.mxu0 0
        %710 = vmatprep.subr.bf16.mxu0 0
        %711 = vmatpush1.bf16.msra.mxu0 0
        %712 = vmatprep.subr.bf16.mxu0 0
        %713 = vmatpush1.bf16.msra.mxu0 0
        %714 = vmatprep.subr.bf16.mxu0 0
        %715 = vmatpush1.bf16.msra.mxu0 0
        %716 = vmatprep.subr.bf16.mxu0 0
        %717 = vmatpush1.bf16.msra.mxu0 0
        %718 = vmatprep.subr.bf16.mxu0 0
        %719 = vmatpush1.bf16.msra.mxu0 0
        %720 = vmatprep.subr.bf16.mxu0 0
        %721 = vmatpush1.bf16.msra.mxu0 0
        %722 = vmatprep.subr.bf16.mxu0 0
        %723 = vmatpush1.bf16.msra.mxu0 0
        %724 = vmatprep.subr.bf16.mxu0 0
        %725 = vmatpush1.bf16.msra.mxu0 0
        %726 = vmatprep.subr.bf16.mxu0 0
        %727 = vmatpush1.bf16.msra.mxu0 0
        %728 = vmatprep.subr.bf16.mxu0 0
        %729 = vmatpush1.bf16.msra.mxu0 0
        %730 = vmatprep.subr.bf16.mxu0 0
        %731 = vmatpush1.bf16.msra.mxu0 0
        %732 = vmatprep.mubr.bf16.mxu0 0
        %733 = vmatmul.mubr.bf16.gmra.mrb[0].mxu0 %v648
        %v734 = vpop.f32.mrb[0].mxu0
        %v735 = vadd.f32 0.0, %v734
        %v736 = vpop.f32.mrb[0].mxu0
        %v737 = vpop.f32.mrb[0].mxu0
        %v738 = vpop.f32.mrb[0].mxu0
        %739 = vdwg.mxu0
        %v740 = vadd.f32 %v590, %v694
        %v741 = vadd.f32 %v592, %v696
        %v742 = vadd.f32 %v631, %v735
        %s743 = scalar_lea.vmem [#allocation13], 6
        %v744 = vld [vmem:[%s743] sm:$0x3]
        %745 = vrot.lane.b32.xlu0 %v436, 110
        %v746 = vpop.permute.xlu0 %745
        %747 = vrot.lane.b32.xlu0 %v437, 110
        %v748 = vpop.permute.xlu0 %747
        %749 = vrot.lane.b32.xlu0 %v438, 110
        %v750 = vpop.permute.xlu0 %749
        %vm751 = vcmask 900096
        %v752 = vsel %vm751, %v746, %v748
        %v753 = vsel %vm751, %v748, %v750
        %v755 = vsel %vm448, %v744, 0
        %v758 = vsel %vm452, %v752, 0
        %v761 = vsel %vm452, %v753, 0
        %v764 = vsel %vm452, %v750, 0
        %766 = vmatprep.subr.bf16.mxu0 %v761
        %767 = vmatpush1.bf16.msra.mxu0 %v758
        %768 = vmatprep.subr.bf16.mxu0 0
        %769 = vmatpush1.bf16.msra.mxu0 0
        %770 = vmatprep.subr.bf16.mxu0 0
        %771 = vmatpush1.bf16.msra.mxu0 0
        %772 = vmatprep.subr.bf16.mxu0 0
        %773 = vmatpush1.bf16.msra.mxu0 0
        %774 = vmatprep.subr.bf16.mxu0 0
        %775 = vmatpush1.bf16.msra.mxu0 0
        %776 = vmatprep.subr.bf16.mxu0 0
        %777 = vmatpush1.bf16.msra.mxu0 0
        %778 = vmatprep.subr.bf16.mxu0 0
        %779 = vmatpush1.bf16.msra.mxu0 0
        %780 = vmatprep.subr.bf16.mxu0 0
        %781 = vmatpush1.bf16.msra.mxu0 0
        %782 = vmatprep.subr.bf16.mxu0 0
        %783 = vmatpush1.bf16.msra.mxu0 0
        %784 = vmatprep.subr.bf16.mxu0 0
        %785 = vmatpush1.bf16.msra.mxu0 0
        %786 = vmatprep.subr.bf16.mxu0 0
        %787 = vmatpush1.bf16.msra.mxu0 0
        %788 = vmatprep.subr.bf16.mxu0 0
        %789 = vmatpush1.bf16.msra.mxu0 0
        %790 = vmatprep.subr.bf16.mxu0 0
        %791 = vmatpush1.bf16.msra.mxu0 0
        %792 = vmatprep.subr.bf16.mxu0 0
        %793 = vmatpush1.bf16.msra.mxu0 0
        %794 = vmatprep.subr.bf16.mxu0 0
        %795 = vmatpush1.bf16.msra.mxu0 0
        %796 = vmatprep.subr.bf16.mxu0 0
        %797 = vmatpush1.bf16.msra.mxu0 0
        %798 = vmatprep.mubr.bf16.mxu0 0
        %799 = vmatmul.mubr.bf16.gmra.mrb[0].mxu0 %v755
        %v800 = vpop.f32.mrb[0].mxu0
        %v801 = vadd.f32 0.0, %v800
        %v802 = vpop.f32.mrb[0].mxu0
        %v803 = vadd.f32 0.0, %v802
        %v804 = vpop.f32.mrb[0].mxu0
        %v805 = vpop.f32.mrb[0].mxu0
        %806 = vdwg.mxu0
        %807 = vmatprep.subr.bf16.mxu0 0
        %808 = vmatpush1.bf16.msra.mxu0 %v764
        %809 = vmatprep.subr.bf16.mxu0 0
        %810 = vmatpush1.bf16.msra.mxu0 0
        %811 = vmatprep.subr.bf16.mxu0 0
        %812 = vmatpush1.bf16.msra.mxu0 0
        %813 = vmatprep.subr.bf16.mxu0 0
        %814 = vmatpush1.bf16.msra.mxu0 0
        %815 = vmatprep.subr.bf16.mxu0 0
        %816 = vmatpush1.bf16.msra.mxu0 0
        %817 = vmatprep.subr.bf16.mxu0 0
        %818 = vmatpush1.bf16.msra.mxu0 0
        %819 = vmatprep.subr.bf16.mxu0 0
        %820 = vmatpush1.bf16.msra.mxu0 0
        %821 = vmatprep.subr.bf16.mxu0 0
        %822 = vmatpush1.bf16.msra.mxu0 0
        %823 = vmatprep.subr.bf16.mxu0 0
        %824 = vmatpush1.bf16.msra.mxu0 0
        %825 = vmatprep.subr.bf16.mxu0 0
        %826 = vmatpush1.bf16.msra.mxu0 0
        %827 = vmatprep.subr.bf16.mxu0 0
        %828 = vmatpush1.bf16.msra.mxu0 0
        %829 = vmatprep.subr.bf16.mxu0 0
        %830 = vmatpush1.bf16.msra.mxu0 0
        %831 = vmatprep.subr.bf16.mxu0 0
        %832 = vmatpush1.bf16.msra.mxu0 0
        %833 = vmatprep.subr.bf16.mxu0 0
        %834 = vmatpush1.bf16.msra.mxu0 0
        %835 = vmatprep.subr.bf16.mxu0 0
        %836 = vmatpush1.bf16.msra.mxu0 0
        %837 = vmatprep.subr.bf16.mxu0 0
        %838 = vmatpush1.bf16.msra.mxu0 0
        %839 = vmatprep.mubr.bf16.mxu0 0
        %840 = vmatmul.mubr.bf16.gmra.mrb[0].mxu0 %v755
        %v841 = vpop.f32.mrb[0].mxu0
        %v842 = vadd.f32 0.0, %v841
        %v843 = vpop.f32.mrb[0].mxu0
        %v844 = vpop.f32.mrb[0].mxu0
        %v845 = vpop.f32.mrb[0].mxu0
        %846 = vdwg.mxu0
        %v847 = vadd.f32 %v740, %v801
        %v848 = vadd.f32 %v741, %v803
        %v849 = vadd.f32 %v742, %v842
        %s850 = scalar_lea.vmem [#allocation13], 8
        %v851 = vld [vmem:[%s850] sm:$0x3]
        %852 = vrot.lane.b32.xlu0 %v436, 109
        %v853 = vpop.permute.xlu0 %852
        %854 = vrot.lane.b32.xlu0 %v437, 109
        %v855 = vpop.permute.xlu0 %854
        %856 = vrot.lane.b32.xlu0 %v438, 109
        %v857 = vpop.permute.xlu0 %856
        %vm858 = vcmask 891904
        %v859 = vsel %vm858, %v853, %v855
        %v860 = vsel %vm858, %v855, %v857
        %v862 = vsel %vm448, %v851, 0
        %v865 = vsel %vm452, %v859, 0
        %v868 = vsel %vm452, %v860, 0
        %v871 = vsel %vm452, %v857, 0
        %873 = vmatprep.subr.bf16.mxu0 %v868
        %874 = vmatpush1.bf16.msra.mxu0 %v865
        %875 = vmatprep.subr.bf16.mxu0 0
        %876 = vmatpush1.bf16.msra.mxu0 0
        %877 = vmatprep.subr.bf16.mxu0 0
        %878 = vmatpush1.bf16.msra.mxu0 0
        %879 = vmatprep.subr.bf16.mxu0 0
        %880 = vmatpush1.bf16.msra.mxu0 0
        %881 = vmatprep.subr.bf16.mxu0 0
        %882 = vmatpush1.bf16.msra.mxu0 0
        %883 = vmatprep.subr.bf16.mxu0 0
        %884 = vmatpush1.bf16.msra.mxu0 0
        %885 = vmatprep.subr.bf16.mxu0 0
        %886 = vmatpush1.bf16.msra.mxu0 0
        %887 = vmatprep.subr.bf16.mxu0 0
        %888 = vmatpush1.bf16.msra.mxu0 0
        %889 = vmatprep.subr.bf16.mxu0 0
        %890 = vmatpush1.bf16.msra.mxu0 0
        %891 = vmatprep.subr.bf16.mxu0 0
        %892 = vmatpush1.bf16.msra.mxu0 0
        %893 = vmatprep.subr.bf16.mxu0 0
        %894 = vmatpush1.bf16.msra.mxu0 0
        %895 = vmatprep.subr.bf16.mxu0 0
        %896 = vmatpush1.bf16.msra.mxu0 0
        %897 = vmatprep.subr.bf16.mxu0 0
        %898 = vmatpush1.bf16.msra.mxu0 0
        %899 = vmatprep.subr.bf16.mxu0 0
        %900 = vmatpush1.bf16.msra.mxu0 0
        %901 = vmatprep.subr.bf16.mxu0 0
        %902 = vmatpush1.bf16.msra.mxu0 0
        %903 = vmatprep.subr.bf16.mxu0 0
        %904 = vmatpush1.bf16.msra.mxu0 0
        %905 = vmatprep.mubr.bf16.mxu0 0
        %906 = vmatmul.mubr.bf16.gmra.mrb[0].mxu0 %v862
        %v907 = vpop.f32.mrb[0].mxu0
        %v908 = vadd.f32 0.0, %v907
        %v909 = vpop.f32.mrb[0].mxu0
        %v910 = vadd.f32 0.0, %v909
        %v911 = vpop.f32.mrb[0].mxu0
        %v912 = vpop.f32.mrb[0].mxu0
        %913 = vdwg.mxu0
        %914 = vmatprep.subr.bf16.mxu0 0
        %915 = vmatpush1.bf16.msra.mxu0 %v871
        %916 = vmatprep.subr.bf16.mxu0 0
        %917 = vmatpush1.bf16.msra.mxu0 0
        %918 = vmatprep.subr.bf16.mxu0 0
        %919 = vmatpush1.bf16.msra.mxu0 0
        %920 = vmatprep.subr.bf16.mxu0 0
        %921 = vmatpush1.bf16.msra.mxu0 0
        %922 = vmatprep.subr.bf16.mxu0 0
        %923 = vmatpush1.bf16.msra.mxu0 0
        %924 = vmatprep.subr.bf16.mxu0 0
        %925 = vmatpush1.bf16.msra.mxu0 0
        %926 = vmatprep.subr.bf16.mxu0 0
        %927 = vmatpush1.bf16.msra.mxu0 0
        %928 = vmatprep.subr.bf16.mxu0 0
        %929 = vmatpush1.bf16.msra.mxu0 0
        %930 = vmatprep.subr.bf16.mxu0 0
        %931 = vmatpush1.bf16.msra.mxu0 0
        %932 = vmatprep.subr.bf16.mxu0 0
        %933 = vmatpush1.bf16.msra.mxu0 0
        %934 = vmatprep.subr.bf16.mxu0 0
        %935 = vmatpush1.bf16.msra.mxu0 0
        %936 = vmatprep.subr.bf16.mxu0 0
        %937 = vmatpush1.bf16.msra.mxu0 0
        %938 = vmatprep.subr.bf16.mxu0 0
        %939 = vmatpush1.bf16.msra.mxu0 0
        %940 = vmatprep.subr.bf16.mxu0 0
        %941 = vmatpush1.bf16.msra.mxu0 0
        %942 = vmatprep.subr.bf16.mxu0 0
        %943 = vmatpush1.bf16.msra.mxu0 0
        %944 = vmatprep.subr.bf16.mxu0 0
        %945 = vmatpush1.bf16.msra.mxu0 0
        %946 = vmatprep.mubr.bf16.mxu0 0
        %947 = vmatmul.mubr.bf16.gmra.mrb[0].mxu0 %v862
        %v948 = vpop.f32.mrb[0].mxu0
        %v949 = vadd.f32 0.0, %v948
        %v950 = vpop.f32.mrb[0].mxu0
        %v951 = vpop.f32.mrb[0].mxu0
        %v952 = vpop.f32.mrb[0].mxu0
        %953 = vdwg.mxu0
        %v954 = vadd.f32 %v847, %v908
        %v955 = vadd.f32 %v848, %v910
        %v956 = vadd.f32 %v849, %v949
        %s957 = scalar_lea.vmem [#allocation13], 10
        %v958 = vld [vmem:[%s957] sm:$0x3]
        %959 = vrot.lane.b32.xlu0 %v436, 108
        %v960 = vpop.permute.xlu0 %959
        %961 = vrot.lane.b32.xlu0 %v437, 108
        %v962 = vpop.permute.xlu0 %961
        %963 = vrot.lane.b32.xlu0 %v438, 108
        %v964 = vpop.permute.xlu0 %963
        %vm965 = vcmask 883712
        %v966 = vsel %vm965, %v960, %v962
        %v967 = vsel %vm965, %v962, %v964
        %v969 = vsel %vm448, %v958, 0
        %v972 = vsel %vm452, %v966, 0
        %v975 = vsel %vm452, %v967, 0
        %v978 = vsel %vm452, %v964, 0
        %980 = vmatprep.subr.bf16.mxu0 %v975
        %981 = vmatpush1.bf16.msra.mxu0 %v972
        %982 = vmatprep.subr.bf16.mxu0 0
        %983 = vmatpush1.bf16.msra.mxu0 0
        %984 = vmatprep.subr.bf16.mxu0 0
        %985 = vmatpush1.bf16.msra.mxu0 0
        %986 = vmatprep.subr.bf16.mxu0 0
        %987 = vmatpush1.bf16.msra.mxu0 0
        %988 = vmatprep.subr.bf16.mxu0 0
        %989 = vmatpush1.bf16.msra.mxu0 0
        %990 = vmatprep.subr.bf16.mxu0 0
        %991 = vmatpush1.bf16.msra.mxu0 0
        %992 = vmatprep.subr.bf16.mxu0 0
        %993 = vmatpush1.bf16.msra.mxu0 0
        %994 = vmatprep.subr.bf16.mxu0 0
        %995 = vmatpush1.bf16.msra.mxu0 0
        %996 = vmatprep.subr.bf16.mxu0 0
        %997 = vmatpush1.bf16.msra.mxu0 0
        %998 = vmatprep.subr.bf16.mxu0 0
        %999 = vmatpush1.bf16.msra.mxu0 0
        %1000 = vmatprep.subr.bf16.mxu0 0
        %1001 = vmatpush1.bf16.msra.mxu0 0
        %1002 = vmatprep.subr.bf16.mxu0 0
        %1003 = vmatpush1.bf16.msra.mxu0 0
        %1004 = vmatprep.subr.bf16.mxu0 0
        %1005 = vmatpush1.bf16.msra.mxu0 0
        %1006 = vmatprep.subr.bf16.mxu0 0
        %1007 = vmatpush1.bf16.msra.mxu0 0
        %1008 = vmatprep.subr.bf16.mxu0 0
        %1009 = vmatpush1.bf16.msra.mxu0 0
        %1010 = vmatprep.subr.bf16.mxu0 0
        %1011 = vmatpush1.bf16.msra.mxu0 0
        %1012 = vmatprep.mubr.bf16.mxu0 0
        %1013 = vmatmul.mubr.bf16.gmra.mrb[0].mxu0 %v969
        %v1014 = vpop.f32.mrb[0].mxu0
        %v1015 = vadd.f32 0.0, %v1014
        %v1016 = vpop.f32.mrb[0].mxu0
        %v1017 = vadd.f32 0.0, %v1016
        %v1018 = vpop.f32.mrb[0].mxu0
        %v1019 = vpop.f32.mrb[0].mxu0
        %1020 = vdwg.mxu0
        %1021 = vmatprep.subr.bf16.mxu0 0
        %1022 = vmatpush1.bf16.msra.mxu0 %v978
        %1023 = vmatprep.subr.bf16.mxu0 0
        %1024 = vmatpush1.bf16.msra.mxu0 0
        %1025 = vmatprep.subr.bf16.mxu0 0
        %1026 = vmatpush1.bf16.msra.mxu0 0
        %1027 = vmatprep.subr.bf16.mxu0 0
        %1028 = vmatpush1.bf16.msra.mxu0 0
        %1029 = vmatprep.subr.bf16.mxu0 0
        %1030 = vmatpush1.bf16.msra.mxu0 0
        %1031 = vmatprep.subr.bf16.mxu0 0
        %1032 = vmatpush1.bf16.msra.mxu0 0
        %1033 = vmatprep.subr.bf16.mxu0 0
        %1034 = vmatpush1.bf16.msra.mxu0 0
        %1035 = vmatprep.subr.bf16.mxu0 0
        %1036 = vmatpush1.bf16.msra.mxu0 0
        %1037 = vmatprep.subr.bf16.mxu0 0
        %1038 = vmatpush1.bf16.msra.mxu0 0
        %1039 = vmatprep.subr.bf16.mxu0 0
        %1040 = vmatpush1.bf16.msra.mxu0 0
        %1041 = vmatprep.subr.bf16.mxu0 0
        %1042 = vmatpush1.bf16.msra.mxu0 0
        %1043 = vmatprep.subr.bf16.mxu0 0
        %1044 = vmatpush1.bf16.msra.mxu0 0
        %1045 = vmatprep.subr.bf16.mxu0 0
        %1046 = vmatpush1.bf16.msra.mxu0 0
        %1047 = vmatprep.subr.bf16.mxu0 0
        %1048 = vmatpush1.bf16.msra.mxu0 0
        %1049 = vmatprep.subr.bf16.mxu0 0
        %1050 = vmatpush1.bf16.msra.mxu0 0
        %1051 = vmatprep.subr.bf16.mxu0 0
        %1052 = vmatpush1.bf16.msra.mxu0 0
        %1053 = vmatprep.mubr.bf16.mxu0 0
        %1054 = vmatmul.mubr.bf16.gmra.mrb[0].mxu0 %v969
        %v1055 = vpop.f32.mrb[0].mxu0
        %v1056 = vadd.f32 0.0, %v1055
        %v1057 = vpop.f32.mrb[0].mxu0
        %v1058 = vpop.f32.mrb[0].mxu0
        %v1059 = vpop.f32.mrb[0].mxu0
        %1060 = vdwg.mxu0
        %v1061 = vadd.f32 %v954, %v1015
        %v1062 = vadd.f32 %v955, %v1017
        %v1063 = vadd.f32 %v956, %v1056
        %s1064 = scalar_lea.vmem [#allocation13], 12
        %v1065 = vld [vmem:[%s1064] sm:$0x3]
        %1066 = vrot.lane.b32.xlu0 %v436, 92
        %v1067 = vpop.permute.xlu0 %1066
        %1068 = vrot.lane.b32.xlu0 %v437, 92
        %v1069 = vpop.permute.xlu0 %1068
        %1070 = vrot.lane.b32.xlu0 %v438, 92
        %v1071 = vpop.permute.xlu0 %1070
        %vm1072 = vcmask 752640
        %v1073 = vsel %vm1072, %v1067, %v1069
        %v1074 = vsel %vm1072, %v1069, %v1071
        %v1076 = vsel %vm448, %v1065, 0
        %v1079 = vsel %vm452, %v1073, 0
        %v1082 = vsel %vm452, %v1074, 0
        %v1085 = vsel %vm452, %v1071, 0
        %1087 = vmatprep.subr.bf16.mxu0 %v1082
        %1088 = vmatpush1.bf16.msra.mxu0 %v1079
        %1089 = vmatprep.subr.bf16.mxu0 0
        %1090 = vmatpush1.bf16.msra.mxu0 0
        %1091 = vmatprep.subr.bf16.mxu0 0
        %1092 = vmatpush1.bf16.msra.mxu0 0
        %1093 = vmatprep.subr.bf16.mxu0 0
        %1094 = vmatpush1.bf16.msra.mxu0 0
        %1095 = vmatprep.subr.bf16.mxu0 0
        %1096 = vmatpush1.bf16.msra.mxu0 0
        %1097 = vmatprep.subr.bf16.mxu0 0
        %1098 = vmatpush1.bf16.msra.mxu0 0
        %1099 = vmatprep.subr.bf16.mxu0 0
        %1100 = vmatpush1.bf16.msra.mxu0 0
        %1101 = vmatprep.subr.bf16.mxu0 0
        %1102 = vmatpush1.bf16.msra.mxu0 0
        %1103 = vmatprep.subr.bf16.mxu0 0
        %1104 = vmatpush1.bf16.msra.mxu0 0
        %1105 = vmatprep.subr.bf16.mxu0 0
        %1106 = vmatpush1.bf16.msra.mxu0 0
        %1107 = vmatprep.subr.bf16.mxu0 0
        %1108 = vmatpush1.bf16.msra.mxu0 0
        %1109 = vmatprep.subr.bf16.mxu0 0
        %1110 = vmatpush1.bf16.msra.mxu0 0
        %1111 = vmatprep.subr.bf16.mxu0 0
        %1112 = vmatpush1.bf16.msra.mxu0 0
        %1113 = vmatprep.subr.bf16.mxu0 0
        %1114 = vmatpush1.bf16.msra.mxu0 0
        %1115 = vmatprep.subr.bf16.mxu0 0
        %1116 = vmatpush1.bf16.msra.mxu0 0
        %1117 = vmatprep.subr.bf16.mxu0 0
        %1118 = vmatpush1.bf16.msra.mxu0 0
        %1119 = vmatprep.mubr.bf16.mxu0 0
        %1120 = vmatmul.mubr.bf16.gmra.mrb[0].mxu0 %v1076
        %v1121 = vpop.f32.mrb[0].mxu0
        %v1122 = vadd.f32 0.0, %v1121
        %v1123 = vpop.f32.mrb[0].mxu0
        %v1124 = vadd.f32 0.0, %v1123
        %v1125 = vpop.f32.mrb[0].mxu0
        %v1126 = vpop.f32.mrb[0].mxu0
        %1127 = vdwg.mxu0
        %1128 = vmatprep.subr.bf16.mxu0 0
        %1129 = vmatpush1.bf16.msra.mxu0 %v1085
        %1130 = vmatprep.subr.bf16.mxu0 0
        %1131 = vmatpush1.bf16.msra.mxu0 0
        %1132 = vmatprep.subr.bf16.mxu0 0
        %1133 = vmatpush1.bf16.msra.mxu0 0
        %1134 = vmatprep.subr.bf16.mxu0 0
        %1135 = vmatpush1.bf16.msra.mxu0 0
        %1136 = vmatprep.subr.bf16.mxu0 0
        %1137 = vmatpush1.bf16.msra.mxu0 0
        %1138 = vmatprep.subr.bf16.mxu0 0
        %1139 = vmatpush1.bf16.msra.mxu0 0
        %1140 = vmatprep.subr.bf16.mxu0 0
        %1141 = vmatpush1.bf16.msra.mxu0 0
        %1142 = vmatprep.subr.bf16.mxu0 0
        %1143 = vmatpush1.bf16.msra.mxu0 0
        %1144 = vmatprep.subr.bf16.mxu0 0
        %1145 = vmatpush1.bf16.msra.mxu0 0
        %1146 = vmatprep.subr.bf16.mxu0 0
        %1147 = vmatpush1.bf16.msra.mxu0 0
        %1148 = vmatprep.subr.bf16.mxu0 0
        %1149 = vmatpush1.bf16.msra.mxu0 0
        %1150 = vmatprep.subr.bf16.mxu0 0
        %1151 = vmatpush1.bf16.msra.mxu0 0
        %1152 = vmatprep.subr.bf16.mxu0 0
        %1153 = vmatpush1.bf16.msra.mxu0 0
        %1154 = vmatprep.subr.bf16.mxu0 0
        %1155 = vmatpush1.bf16.msra.mxu0 0
        %1156 = vmatprep.subr.bf16.mxu0 0
        %1157 = vmatpush1.bf16.msra.mxu0 0
        %1158 = vmatprep.subr.bf16.mxu0 0
        %1159 = vmatpush1.bf16.msra.mxu0 0
        %1160 = vmatprep.mubr.bf16.mxu0 0
        %1161 = vmatmul.mubr.bf16.gmra.mrb[0].mxu0 %v1076
        %v1162 = vpop.f32.mrb[0].mxu0
        %v1163 = vadd.f32 0.0, %v1162
        %v1164 = vpop.f32.mrb[0].mxu0
        %v1165 = vpop.f32.mrb[0].mxu0
        %v1166 = vpop.f32.mrb[0].mxu0
        %1167 = vdwg.mxu0
        %v1168 = vadd.f32 %v1061, %v1122
        %v1169 = vadd.f32 %v1062, %v1124
        %v1170 = vadd.f32 %v1063, %v1163
        %s1171 = scalar_lea.vmem [#allocation13], 14
        %v1172 = vld [vmem:[%s1171] sm:$0x3]
        %1173 = vrot.lane.b32.xlu0 %v436, 91
        %v1174 = vpop.permute.xlu0 %1173
        %1175 = vrot.lane.b32.xlu0 %v437, 91
        %v1176 = vpop.permute.xlu0 %1175
        %1177 = vrot.lane.b32.xlu0 %v438, 91
        %v1178 = vpop.permute.xlu0 %1177
        %vm1179 = vcmask 744448
        %v1180 = vsel %vm1179, %v1174, %v1176
        %v1181 = vsel %vm1179, %v1176, %v1178
        %v1183 = vsel %vm448, %v1172, 0
        %v1186 = vsel %vm452, %v1180, 0
        %v1189 = vsel %vm452, %v1181, 0
        %v1192 = vsel %vm452, %v1178, 0
        %1194 = vmatprep.subr.bf16.mxu0 %v1189
        %1195 = vmatpush1.bf16.msra.mxu0 %v1186
        %1196 = vmatprep.subr.bf16.mxu0 0
        %1197 = vmatpush1.bf16.msra.mxu0 0
        %1198 = vmatprep.subr.bf16.mxu0 0
        %1199 = vmatpush1.bf16.msra.mxu0 0
        %1200 = vmatprep.subr.bf16.mxu0 0
        %1201 = vmatpush1.bf16.msra.mxu0 0
        %1202 = vmatprep.subr.bf16.mxu0 0
        %1203 = vmatpush1.bf16.msra.mxu0 0
        %1204 = vmatprep.subr.bf16.mxu0 0
        %1205 = vmatpush1.bf16.msra.mxu0 0
        %1206 = vmatprep.subr.bf16.mxu0 0
        %1207 = vmatpush1.bf16.msra.mxu0 0
        %1208 = vmatprep.subr.bf16.mxu0 0
        %1209 = vmatpush1.bf16.msra.mxu0 0
        %1210 = vmatprep.subr.bf16.mxu0 0
        %1211 = vmatpush1.bf16.msra.mxu0 0
        %1212 = vmatprep.subr.bf16.mxu0 0
        %1213 = vmatpush1.bf16.msra.mxu0 0
        %1214 = vmatprep.subr.bf16.mxu0 0
        %1215 = vmatpush1.bf16.msra.mxu0 0
        %1216 = vmatprep.subr.bf16.mxu0 0
        %1217 = vmatpush1.bf16.msra.mxu0 0
        %1218 = vmatprep.subr.bf16.mxu0 0
        %1219 = vmatpush1.bf16.msra.mxu0 0
        %1220 = vmatprep.subr.bf16.mxu0 0
        %1221 = vmatpush1.bf16.msra.mxu0 0
        %1222 = vmatprep.subr.bf16.mxu0 0
        %1223 = vmatpush1.bf16.msra.mxu0 0
        %1224 = vmatprep.subr.bf16.mxu0 0
        %1225 = vmatpush1.bf16.msra.mxu0 0
        %1226 = vmatprep.mubr.bf16.mxu0 0
        %1227 = vmatmul.mubr.bf16.gmra.mrb[0].mxu0 %v1183
        %v1228 = vpop.f32.mrb[0].mxu0
        %v1229 = vadd.f32 0.0, %v1228
        %v1230 = vpop.f32.mrb[0].mxu0
        %v1231 = vadd.f32 0.0, %v1230
        %v1232 = vpop.f32.mrb[0].mxu0
        %v1233 = vpop.f32.mrb[0].mxu0
        %1234 = vdwg.mxu0
        %1235 = vmatprep.subr.bf16.mxu0 0
        %1236 = vmatpush1.bf16.msra.mxu0 %v1192
        %1237 = vmatprep.subr.bf16.mxu0 0
        %1238 = vmatpush1.bf16.msra.mxu0 0
        %1239 = vmatprep.subr.bf16.mxu0 0
        %1240 = vmatpush1.bf16.msra.mxu0 0
        %1241 = vmatprep.subr.bf16.mxu0 0
        %1242 = vmatpush1.bf16.msra.mxu0 0
        %1243 = vmatprep.subr.bf16.mxu0 0
        %1244 = vmatpush1.bf16.msra.mxu0 0
        %1245 = vmatprep.subr.bf16.mxu0 0
        %1246 = vmatpush1.bf16.msra.mxu0 0
        %1247 = vmatprep.subr.bf16.mxu0 0
        %1248 = vmatpush1.bf16.msra.mxu0 0
        %1249 = vmatprep.subr.bf16.mxu0 0
        %1250 = vmatpush1.bf16.msra.mxu0 0
        %1251 = vmatprep.subr.bf16.mxu0 0
        %1252 = vmatpush1.bf16.msra.mxu0 0
        %1253 = vmatprep.subr.bf16.mxu0 0
        %1254 = vmatpush1.bf16.msra.mxu0 0
        %1255 = vmatprep.subr.bf16.mxu0 0
        %1256 = vmatpush1.bf16.msra.mxu0 0
        %1257 = vmatprep.subr.bf16.mxu0 0
        %1258 = vmatpush1.bf16.msra.mxu0 0
        %1259 = vmatprep.subr.bf16.mxu0 0
        %1260 = vmatpush1.bf16.msra.mxu0 0
        %1261 = vmatprep.subr.bf16.mxu0 0
        %1262 = vmatpush1.bf16.msra.mxu0 0
        %1263 = vmatprep.subr.bf16.mxu0 0
        %1264 = vmatpush1.bf16.msra.mxu0 0
        %1265 = vmatprep.subr.bf16.mxu0 0
        %1266 = vmatpush1.bf16.msra.mxu0 0
        %1267 = vmatprep.mubr.bf16.mxu0 0
        %1268 = vmatmul.mubr.bf16.gmra.mrb[0].mxu0 %v1183
        %v1269 = vpop.f32.mrb[0].mxu0
        %v1270 = vadd.f32 0.0, %v1269
        %v1271 = vpop.f32.mrb[0].mxu0
        %v1272 = vpop.f32.mrb[0].mxu0
        %v1273 = vpop.f32.mrb[0].mxu0
        %1274 = vdwg.mxu0
        %v1275 = vadd.f32 %v1168, %v1229
        %v1276 = vadd.f32 %v1169, %v1231
        %v1277 = vadd.f32 %v1170, %v1270
        %s1278 = scalar_lea.vmem [#allocation13], 16
        %v1279 = vld [vmem:[%s1278] sm:$0x3]
        %1280 = vrot.lane.b32.xlu0 %v436, 90
        %v1281 = vpop.permute.xlu0 %1280
        %1282 = vrot.lane.b32.xlu0 %v437, 90
        %v1283 = vpop.permute.xlu0 %1282
        %1284 = vrot.lane.b32.xlu0 %v438, 90
        %v1285 = vpop.permute.xlu0 %1284
        %vm1286 = vcmask 736256
        %v1287 = vsel %vm1286, %v1281, %v1283
        %v1288 = vsel %vm1286, %v1283, %v1285
        %v1290 = vsel %vm448, %v1279, 0
        %v1293 = vsel %vm452, %v1287, 0
        %v1296 = vsel %vm452, %v1288, 0
        %v1299 = vsel %vm452, %v1285, 0
        %1301 = vmatprep.subr.bf16.mxu0 %v1296
        %1302 = vmatpush1.bf16.msra.mxu0 %v1293
        %1303 = vmatprep.subr.bf16.mxu0 0
        %1304 = vmatpush1.bf16.msra.mxu0 0
        %1305 = vmatprep.subr.bf16.mxu0 0
        %1306 = vmatpush1.bf16.msra.mxu0 0
        %1307 = vmatprep.subr.bf16.mxu0 0
        %1308 = vmatpush1.bf16.msra.mxu0 0
        %1309 = vmatprep.subr.bf16.mxu0 0
        %1310 = vmatpush1.bf16.msra.mxu0 0
        %1311 = vmatprep.subr.bf16.mxu0 0
        %1312 = vmatpush1.bf16.msra.mxu0 0
        %1313 = vmatprep.subr.bf16.mxu0 0
        %1314 = vmatpush1.bf16.msra.mxu0 0
        %1315 = vmatprep.subr.bf16.mxu0 0
        %1316 = vmatpush1.bf16.msra.mxu0 0
        %1317 = vmatprep.subr.bf16.mxu0 0
        %1318 = vmatpush1.bf16.msra.mxu0 0
        %1319 = vmatprep.subr.bf16.mxu0 0
        %1320 = vmatpush1.bf16.msra.mxu0 0
        %1321 = vmatprep.subr.bf16.mxu0 0
        %1322 = vmatpush1.bf16.msra.mxu0 0
        %1323 = vmatprep.subr.bf16.mxu0 0
        %1324 = vmatpush1.bf16.msra.mxu0 0
        %1325 = vmatprep.subr.bf16.mxu0 0
        %1326 = vmatpush1.bf16.msra.mxu0 0
        %1327 = vmatprep.subr.bf16.mxu0 0
        %1328 = vmatpush1.bf16.msra.mxu0 0
        %1329 = vmatprep.subr.bf16.mxu0 0
        %1330 = vmatpush1.bf16.msra.mxu0 0
        %1331 = vmatprep.subr.bf16.mxu0 0
        %1332 = vmatpush1.bf16.msra.mxu0 0
        %1333 = vmatprep.mubr.bf16.mxu0 0
        %1334 = vmatmul.mubr.bf16.gmra.mrb[0].mxu0 %v1290
        %v1335 = vpop.f32.mrb[0].mxu0
        %v1336 = vadd.f32 0.0, %v1335
        %v1337 = vpop.f32.mrb[0].mxu0
        %v1338 = vadd.f32 0.0, %v1337
        %v1339 = vpop.f32.mrb[0].mxu0
        %v1340 = vpop.f32.mrb[0].mxu0
        %1341 = vdwg.mxu0
        %1342 = vmatprep.subr.bf16.mxu0 0
        %1343 = vmatpush1.bf16.msra.mxu0 %v1299
        %1344 = vmatprep.subr.bf16.mxu0 0
        %1345 = vmatpush1.bf16.msra.mxu0 0
        %1346 = vmatprep.subr.bf16.mxu0 0
        %1347 = vmatpush1.bf16.msra.mxu0 0
        %1348 = vmatprep.subr.bf16.mxu0 0
        %1349 = vmatpush1.bf16.msra.mxu0 0
        %1350 = vmatprep.subr.bf16.mxu0 0
        %1351 = vmatpush1.bf16.msra.mxu0 0
        %1352 = vmatprep.subr.bf16.mxu0 0
        %1353 = vmatpush1.bf16.msra.mxu0 0
        %1354 = vmatprep.subr.bf16.mxu0 0
        %1355 = vmatpush1.bf16.msra.mxu0 0
        %1356 = vmatprep.subr.bf16.mxu0 0
        %1357 = vmatpush1.bf16.msra.mxu0 0
        %1358 = vmatprep.subr.bf16.mxu0 0
        %1359 = vmatpush1.bf16.msra.mxu0 0
        %1360 = vmatprep.subr.bf16.mxu0 0
        %1361 = vmatpush1.bf16.msra.mxu0 0
        %1362 = vmatprep.subr.bf16.mxu0 0
        %1363 = vmatpush1.bf16.msra.mxu0 0
        %1364 = vmatprep.subr.bf16.mxu0 0
        %1365 = vmatpush1.bf16.msra.mxu0 0
        %1366 = vmatprep.subr.bf16.mxu0 0
        %1367 = vmatpush1.bf16.msra.mxu0 0
        %1368 = vmatprep.subr.bf16.mxu0 0
        %1369 = vmatpush1.bf16.msra.mxu0 0
        %1370 = vmatprep.subr.bf16.mxu0 0
        %1371 = vmatpush1.bf16.msra.mxu0 0
        %1372 = vmatprep.subr.bf16.mxu0 0
        %1373 = vmatpush1.bf16.msra.mxu0 0
        %1374 = vmatprep.mubr.bf16.mxu0 0
        %1375 = vmatmul.mubr.bf16.gmra.mrb[0].mxu0 %v1290
        %v1376 = vpop.f32.mrb[0].mxu0
        %v1377 = vadd.f32 0.0, %v1376
        %v1378 = vpop.f32.mrb[0].mxu0
        %v1379 = vpop.f32.mrb[0].mxu0
        %v1380 = vpop.f32.mrb[0].mxu0
        %1381 = vdwg.mxu0
        %v1382 = vadd.f32 %v1275, %v1336
        %v1383 = vadd.f32 %v1276, %v1338
        %v1384 = vadd.f32 %v1277, %v1377
        %v1385 = vld [vmem:[#allocation12] sm:$0xf]
        %1387 = vset.pattern.permute.xlu0 0
        %1388 = vperm.xlu0 %1387, %v1385
        %v1389 = vpop.permute.xlu0 %1388
        %v1391 = vadd.f32 %v1382, %v1389
        %v1392 = vadd.f32 %v1383, %v1389
        %v1393 = vadd.f32 %v1384, %v1389
        %1394 = vst [vmem:[%s336] sm:$0xf] %v1391
        %1395 = vst [vmem:[%s336 + $0x8] sm:$0xf] %v1392
        %1396 = vst.msk [vmem:[%s336 + $0x10] sm:$0xf] %vm353, %v1393
        %v1400 = vrot.slane %v1391, 4
        %v1401 = vrot.slane %v1392, 4
        %v1402 = vrot.slane %v1393, 4
        %1406 = vst [vmem:[#allocation2] sm:$0xf0] %v1400
        %1407 = vst [vmem:[#allocation2 + $0x8] sm:$0xf0] %v1401
        %vm1408 = vcmask 261124
        %1409 = vst.msk [vmem:[#allocation2 + $0x10] sm:$0xf0] %vm1408, %v1402
        %v1410 = vld [vmem:[#allocation2] sm:$0xff]
        %v1411 = vld [vmem:[#allocation2 + $0x8] sm:$0xff]
        %v1412 = vld [vmem:[#allocation2 + $0x10] sm:$0xff]
        %v1413 = vld [vmem:[#allocation9] sm:$0xff]
        %1415 = vset.pattern.permute.xlu0 1
        %1416 = vperm.xlu0 %1415, %v1413
        %v1417 = vpop.permute.xlu0 %1416
        %v1419 = vmul.f32 %v1410, %v1417
        %v1420 = vmul.f32 %v1411, %v1417
        %v1421 = vmul.f32 %v1412, %v1417
        %v1422 = vld [vmem:[#allocation10] sm:$0xff]
        %1424 = vset.pattern.permute.xlu0 1
        %1425 = vperm.xlu0 %1424, %v1422
        %v1426 = vpop.permute.xlu0 %1425
        %v1428 = vadd.f32 %v1419, %v1426
        %v1429 = vadd.f32 %v1420, %v1426
        %v1430 = vadd.f32 %v1421, %v1426
        %v1431 = vmax.f32 %v1428, 0.0
        %v1432 = vmax.f32 %v1429, 0.0
        %v1433 = vmax.f32 %v1430, 0.0
        %v1434 = vmul.f32 %v1431, %v384
        %v1435 = vmul.f32 %v1432, %v388
        %v1436 = vmul.f32 %v1433, %v392
        %v1437 = vpack.c.bf16 %v1434, %v1434
        %v1438 = vpack.c.bf16 %v1435, %v1435
        %v1439 = vpack.c.bf16 %v1436, %v1436
        %v1443 = vunpack.c.l.b16 %v1437
        %v1444 = vunpack.c.l.b16 %v1438
        %v1445 = vunpack.c.l.b16 %v1439
        %v1446 = vpack.c.b16 %v1444, %v1443
        %v1447 = vpack.c.b16 %v1445, %v1445
        %1448 = vrot.lane.b32.xlu0 %v1446, 19
        %v1449 = vpop.permute.xlu0 %1448
        %1450 = vrot.lane.b32.xlu0 %v1447, 19
        %v1451 = vpop.permute.xlu0 %1450
        %v1452 = vrot.slane %v1449, 4
        %v1453 = vsel %vm415, %v1452, %v1449
        %v1454 = vsel %vm415, %v1452, %v1451
        %vm1457 = vcmask 1043608
        %vm1458 = vcmask 1047556
        %vm1459 = vmor %vm1458, %vm1457
        %1460 = vst.msk [vmem:[#allocation3] sm:$0xff] %vm1459, %v1453
        %vm1461 = vcmask 412672
        %1462 = vst.msk [vmem:[#allocation3 + $0x8] sm:$0xf] %vm1461, %v1454
        %s1463 = scalar_lea.vmem [#allocation13], 18
        %v1464 = vld [vmem:[%s1463] sm:$0x3]
        %v1465 = vld [vmem:[#allocation3] sm:$0xff]
        %v1466 = vld [vmem:[#allocation3 + $0x8] sm:$0xf]
        %s1467 = scalar_lea.vmem [#allocation13], 20
        %v1468 = vld [vmem:[%s1467] sm:$0x3]
        %v1471 = vunpack.c.l.b16 %v1465
        %v1472 = vunpack.c.h.b16 %v1465
        %v1473 = vunpack.c.l.b16 %v1466
        %v1474 = vpack.c.b16 %v1471, %v1471
        %v1475 = vpack.c.b16 %v1472, %v1472
        %v1476 = vpack.c.b16 %v1473, %v1473
        %1477 = vrot.lane.b32.xlu0 %v1474, 127
        %v1478 = vpop.permute.xlu0 %1477
        %1479 = vrot.lane.b32.xlu0 %v1475, 127
        %v1480 = vpop.permute.xlu0 %1479
        %1481 = vrot.lane.b32.xlu0 %v1476, 127
        %v1482 = vpop.permute.xlu0 %1481
        %v1483 = vsel %vm445, %v1478, %v1480
        %v1484 = vsel %vm445, %v1480, %v1482
        %vm1485 = vcmask 64512
        %v1487 = vsel %vm1485, %v1468, 0
        %vm1489 = vcmask 1043456
        %v1491 = vsel %vm1489, %v1483, 0
        %v1494 = vsel %vm1489, %v1484, 0
        %v1497 = vsel %vm1489, %v1482, 0
        %1499 = vmatprep.subr.bf16.mxu0 %v1494
        %1500 = vmatpush1.bf16.msra.mxu0 %v1491
        %1501 = vmatprep.subr.bf16.mxu0 0
        %1502 = vmatpush1.bf16.msra.mxu0 0
        %1503 = vmatprep.subr.bf16.mxu0 0
        %1504 = vmatpush1.bf16.msra.mxu0 0
        %1505 = vmatprep.subr.bf16.mxu0 0
        %1506 = vmatpush1.bf16.msra.mxu0 0
        %1507 = vmatprep.subr.bf16.mxu0 0
        %1508 = vmatpush1.bf16.msra.mxu0 0
        %1509 = vmatprep.subr.bf16.mxu0 0
        %1510 = vmatpush1.bf16.msra.mxu0 0
        %1511 = vmatprep.subr.bf16.mxu0 0
        %1512 = vmatpush1.bf16.msra.mxu0 0
        %1513 = vmatprep.subr.bf16.mxu0 0
        %1514 = vmatpush1.bf16.msra.mxu0 0
        %1515 = vmatprep.subr.bf16.mxu0 0
        %1516 = vmatpush1.bf16.msra.mxu0 0
        %1517 = vmatprep.subr.bf16.mxu0 0
        %1518 = vmatpush1.bf16.msra.mxu0 0
        %1519 = vmatprep.subr.bf16.mxu0 0
        %1520 = vmatpush1.bf16.msra.mxu0 0
        %1521 = vmatprep.subr.bf16.mxu0 0
        %1522 = vmatpush1.bf16.msra.mxu0 0
        %1523 = vmatprep.subr.bf16.mxu0 0
        %1524 = vmatpush1.bf16.msra.mxu0 0
        %1525 = vmatprep.subr.bf16.mxu0 0
        %1526 = vmatpush1.bf16.msra.mxu0 0
        %1527 = vmatprep.subr.bf16.mxu0 0
        %1528 = vmatpush1.bf16.msra.mxu0 0
        %1529 = vmatprep.subr.bf16.mxu0 0
        %1530 = vmatpush1.bf16.msra.mxu0 0
        %1531 = vmatprep.mubr.bf16.mxu0 0
        %1532 = vmatmul.mubr.bf16.gmra.mrb[0].mxu0 %v1487
        %v1533 = vpop.f32.mrb[0].mxu0
        %v1534 = vadd.f32 0.0, %v1533
        %v1535 = vpop.f32.mrb[0].mxu0
        %v1536 = vadd.f32 0.0, %v1535
        %v1537 = vpop.f32.mrb[0].mxu0
        %v1538 = vpop.f32.mrb[0].mxu0
        %1539 = vdwg.mxu0
        %1540 = vmatprep.subr.bf16.mxu0 0
        %1541 = vmatpush1.bf16.msra.mxu0 %v1497
        %1542 = vmatprep.subr.bf16.mxu0 0
        %1543 = vmatpush1.bf16.msra.mxu0 0
        %1544 = vmatprep.subr.bf16.mxu0 0
        %1545 = vmatpush1.bf16.msra.mxu0 0
        %1546 = vmatprep.subr.bf16.mxu0 0
        %1547 = vmatpush1.bf16.msra.mxu0 0
        %1548 = vmatprep.subr.bf16.mxu0 0
        %1549 = vmatpush1.bf16.msra.mxu0 0
        %1550 = vmatprep.subr.bf16.mxu0 0
        %1551 = vmatpush1.bf16.msra.mxu0 0
        %1552 = vmatprep.subr.bf16.mxu0 0
        %1553 = vmatpush1.bf16.msra.mxu0 0
        %1554 = vmatprep.subr.bf16.mxu0 0
        %1555 = vmatpush1.bf16.msra.mxu0 0
        %1556 = vmatprep.subr.bf16.mxu0 0
        %1557 = vmatpush1.bf16.msra.mxu0 0
        %1558 = vmatprep.subr.bf16.mxu0 0
        %1559 = vmatpush1.bf16.msra.mxu0 0
        %1560 = vmatprep.subr.bf16.mxu0 0
        %1561 = vmatpush1.bf16.msra.mxu0 0
        %1562 = vmatprep.subr.bf16.mxu0 0
        %1563 = vmatpush1.bf16.msra.mxu0 0
        %1564 = vmatprep.subr.bf16.mxu0 0
        %1565 = vmatpush1.bf16.msra.mxu0 0
        %1566 = vmatprep.subr.bf16.mxu0 0
        %1567 = vmatpush1.bf16.msra.mxu0 0
        %1568 = vmatprep.subr.bf16.mxu0 0
        %1569 = vmatpush1.bf16.msra.mxu0 0
        %1570 = vmatprep.subr.bf16.mxu0 0
        %1571 = vmatpush1.bf16.msra.mxu0 0
        %1572 = vmatprep.mubr.bf16.mxu0 0
        %1573 = vmatmul.mubr.bf16.gmra.mrb[0].mxu0 %v1487
        %v1574 = vpop.f32.mrb[0].mxu0
        %v1575 = vadd.f32 0.0, %v1574
        %v1576 = vpop.f32.mrb[0].mxu0
        %v1577 = vpop.f32.mrb[0].mxu0
        %v1578 = vpop.f32.mrb[0].mxu0
        %1579 = vdwg.mxu0
        %v1581 = vsel %vm1485, %v1464, 0
        %v1584 = vsel %vm1489, %v1474, 0
        %v1587 = vsel %vm1489, %v1475, 0
        %v1590 = vsel %vm1489, %v1476, 0
        %1592 = vmatprep.subr.bf16.mxu0 %v1587
        %1593 = vmatpush1.bf16.msra.mxu0 %v1584
        %1594 = vmatprep.subr.bf16.mxu0 0
        %1595 = vmatpush1.bf16.msra.mxu0 0
        %1596 = vmatprep.subr.bf16.mxu0 0
        %1597 = vmatpush1.bf16.msra.mxu0 0
        %1598 = vmatprep.subr.bf16.mxu0 0
        %1599 = vmatpush1.bf16.msra.mxu0 0
        %1600 = vmatprep.subr.bf16.mxu0 0
        %1601 = vmatpush1.bf16.msra.mxu0 0
        %1602 = vmatprep.subr.bf16.mxu0 0
        %1603 = vmatpush1.bf16.msra.mxu0 0
        %1604 = vmatprep.subr.bf16.mxu0 0
        %1605 = vmatpush1.bf16.msra.mxu0 0
        %1606 = vmatprep.subr.bf16.mxu0 0
        %1607 = vmatpush1.bf16.msra.mxu0 0
        %1608 = vmatprep.subr.bf16.mxu0 0
        %1609 = vmatpush1.bf16.msra.mxu0 0
        %1610 = vmatprep.subr.bf16.mxu0 0
        %1611 = vmatpush1.bf16.msra.mxu0 0
        %1612 = vmatprep.subr.bf16.mxu0 0
        %1613 = vmatpush1.bf16.msra.mxu0 0
        %1614 = vmatprep.subr.bf16.mxu0 0
        %1615 = vmatpush1.bf16.msra.mxu0 0
        %1616 = vmatprep.subr.bf16.mxu0 0
        %1617 = vmatpush1.bf16.msra.mxu0 0
        %1618 = vmatprep.subr.bf16.mxu0 0
        %1619 = vmatpush1.bf16.msra.mxu0 0
        %1620 = vmatprep.subr.bf16.mxu0 0
        %1621 = vmatpush1.bf16.msra.mxu0 0
        %1622 = vmatprep.subr.bf16.mxu0 0
        %1623 = vmatpush1.bf16.msra.mxu0 0
        %1624 = vmatprep.mubr.bf16.mxu0 0
        %1625 = vmatmul.mubr.bf16.gmra.mrb[0].mxu0 %v1581
        %v1626 = vpop.f32.mrb[0].mxu0
        %v1627 = vadd.f32 %v1534, %v1626
        %v1628 = vpop.f32.mrb[0].mxu0
        %v1629 = vadd.f32 %v1536, %v1628
        %v1630 = vpop.f32.mrb[0].mxu0
        %v1631 = vpop.f32.mrb[0].mxu0
        %1632 = vdwg.mxu0
        %1633 = vmatprep.subr.bf16.mxu0 0
        %1634 = vmatpush1.bf16.msra.mxu0 %v1590
        %1635 = vmatprep.subr.bf16.mxu0 0
        %1636 = vmatpush1.bf16.msra.mxu0 0
        %1637 = vmatprep.subr.bf16.mxu0 0
        %1638 = vmatpush1.bf16.msra.mxu0 0
        %1639 = vmatprep.subr.bf16.mxu0 0
        %1640 = vmatpush1.bf16.msra.mxu0 0
        %1641 = vmatprep.subr.bf16.mxu0 0
        %1642 = vmatpush1.bf16.msra.mxu0 0
        %1643 = vmatprep.subr.bf16.mxu0 0
        %1644 = vmatpush1.bf16.msra.mxu0 0
        %1645 = vmatprep.subr.bf16.mxu0 0
        %1646 = vmatpush1.bf16.msra.mxu0 0
        %1647 = vmatprep.subr.bf16.mxu0 0
        %1648 = vmatpush1.bf16.msra.mxu0 0
        %1649 = vmatprep.subr.bf16.mxu0 0
        %1650 = vmatpush1.bf16.msra.mxu0 0
        %1651 = vmatprep.subr.bf16.mxu0 0
        %1652 = vmatpush1.bf16.msra.mxu0 0
        %1653 = vmatprep.subr.bf16.mxu0 0
        %1654 = vmatpush1.bf16.msra.mxu0 0
        %1655 = vmatprep.subr.bf16.mxu0 0
        %1656 = vmatpush1.bf16.msra.mxu0 0
        %1657 = vmatprep.subr.bf16.mxu0 0
        %1658 = vmatpush1.bf16.msra.mxu0 0
        %1659 = vmatprep.subr.bf16.mxu0 0
        %1660 = vmatpush1.bf16.msra.mxu0 0
        %1661 = vmatprep.subr.bf16.mxu0 0
        %1662 = vmatpush1.bf16.msra.mxu0 0
        %1663 = vmatprep.subr.bf16.mxu0 0
        %1664 = vmatpush1.bf16.msra.mxu0 0
        %1665 = vmatprep.mubr.bf16.mxu0 0
        %1666 = vmatmul.mubr.bf16.gmra.mrb[0].mxu0 %v1581
        %v1667 = vpop.f32.mrb[0].mxu0
        %v1668 = vadd.f32 %v1575, %v1667
        %v1669 = vpop.f32.mrb[0].mxu0
        %v1670 = vpop.f32.mrb[0].mxu0
        %v1671 = vpop.f32.mrb[0].mxu0
        %1672 = vdwg.mxu0
        %s1673 = scalar_lea.vmem [#allocation13], 22
        %v1674 = vld [vmem:[%s1673] sm:$0x3]
        %1675 = vrot.lane.b32.xlu0 %v1474, 126
        %v1676 = vpop.permute.xlu0 %1675
        %1677 = vrot.lane.b32.xlu0 %v1475, 126
        %v1678 = vpop.permute.xlu0 %1677
        %1679 = vrot.lane.b32.xlu0 %v1476, 126
        %v1680 = vpop.permute.xlu0 %1679
        %v1681 = vsel %vm644, %v1676, %v1678
        %v1682 = vsel %vm644, %v1678, %v1680
        %v1684 = vsel %vm1485, %v1674, 0
        %v1687 = vsel %vm1489, %v1681, 0
        %v1690 = vsel %vm1489, %v1682, 0
        %v1693 = vsel %vm1489, %v1680, 0
        %1695 = vmatprep.subr.bf16.mxu0 %v1690
        %1696 = vmatpush1.bf16.msra.mxu0 %v1687
        %1697 = vmatprep.subr.bf16.mxu0 0
        %1698 = vmatpush1.bf16.msra.mxu0 0
        %1699 = vmatprep.subr.bf16.mxu0 0
        %1700 = vmatpush1.bf16.msra.mxu0 0
        %1701 = vmatprep.subr.bf16.mxu0 0
        %1702 = vmatpush1.bf16.msra.mxu0 0
        %1703 = vmatprep.subr.bf16.mxu0 0
        %1704 = vmatpush1.bf16.msra.mxu0 0
        %1705 = vmatprep.subr.bf16.mxu0 0
        %1706 = vmatpush1.bf16.msra.mxu0 0
        %1707 = vmatprep.subr.bf16.mxu0 0
        %1708 = vmatpush1.bf16.msra.mxu0 0
        %1709 = vmatprep.subr.bf16.mxu0 0
        %1710 = vmatpush1.bf16.msra.mxu0 0
        %1711 = vmatprep.subr.bf16.mxu0 0
        %1712 = vmatpush1.bf16.msra.mxu0 0
        %1713 = vmatprep.subr.bf16.mxu0 0
        %1714 = vmatpush1.bf16.msra.mxu0 0
        %1715 = vmatprep.subr.bf16.mxu0 0
        %1716 = vmatpush1.bf16.msra.mxu0 0
        %1717 = vmatprep.subr.bf16.mxu0 0
        %1718 = vmatpush1.bf16.msra.mxu0 0
        %1719 = vmatprep.subr.bf16.mxu0 0
        %1720 = vmatpush1.bf16.msra.mxu0 0
        %1721 = vmatprep.subr.bf16.mxu0 0
        %1722 = vmatpush1.bf16.msra.mxu0 0
        %1723 = vmatprep.subr.bf16.mxu0 0
        %1724 = vmatpush1.bf16.msra.mxu0 0
        %1725 = vmatprep.subr.bf16.mxu0 0
        %1726 = vmatpush1.bf16.msra.mxu0 0
        %1727 = vmatprep.mubr.bf16.mxu0 0
        %1728 = vmatmul.mubr.bf16.gmra.mrb[0].mxu0 %v1684
        %v1729 = vpop.f32.mrb[0].mxu0
        %v1730 = vadd.f32 0.0, %v1729
        %v1731 = vpop.f32.mrb[0].mxu0
        %v1732 = vadd.f32 0.0, %v1731
        %v1733 = vpop.f32.mrb[0].mxu0
        %v1734 = vpop.f32.mrb[0].mxu0
        %1735 = vdwg.mxu0
        %1736 = vmatprep.subr.bf16.mxu0 0
        %1737 = vmatpush1.bf16.msra.mxu0 %v1693
        %1738 = vmatprep.subr.bf16.mxu0 0
        %1739 = vmatpush1.bf16.msra.mxu0 0
        %1740 = vmatprep.subr.bf16.mxu0 0
        %1741 = vmatpush1.bf16.msra.mxu0 0
        %1742 = vmatprep.subr.bf16.mxu0 0
        %1743 = vmatpush1.bf16.msra.mxu0 0
        %1744 = vmatprep.subr.bf16.mxu0 0
        %1745 = vmatpush1.bf16.msra.mxu0 0
        %1746 = vmatprep.subr.bf16.mxu0 0
        %1747 = vmatpush1.bf16.msra.mxu0 0
        %1748 = vmatprep.subr.bf16.mxu0 0
        %1749 = vmatpush1.bf16.msra.mxu0 0
        %1750 = vmatprep.subr.bf16.mxu0 0
        %1751 = vmatpush1.bf16.msra.mxu0 0
        %1752 = vmatprep.subr.bf16.mxu0 0
        %1753 = vmatpush1.bf16.msra.mxu0 0
        %1754 = vmatprep.subr.bf16.mxu0 0
        %1755 = vmatpush1.bf16.msra.mxu0 0
        %1756 = vmatprep.subr.bf16.mxu0 0
        %1757 = vmatpush1.bf16.msra.mxu0 0
        %1758 = vmatprep.subr.bf16.mxu0 0
        %1759 = vmatpush1.bf16.msra.mxu0 0
        %1760 = vmatprep.subr.bf16.mxu0 0
        %1761 = vmatpush1.bf16.msra.mxu0 0
        %1762 = vmatprep.subr.bf16.mxu0 0
        %1763 = vmatpush1.bf16.msra.mxu0 0
        %1764 = vmatprep.subr.bf16.mxu0 0
        %1765 = vmatpush1.bf16.msra.mxu0 0
        %1766 = vmatprep.subr.bf16.mxu0 0
        %1767 = vmatpush1.bf16.msra.mxu0 0
        %1768 = vmatprep.mubr.bf16.mxu0 0
        %1769 = vmatmul.mubr.bf16.gmra.mrb[0].mxu0 %v1684
        %v1770 = vpop.f32.mrb[0].mxu0
        %v1771 = vadd.f32 0.0, %v1770
        %v1772 = vpop.f32.mrb[0].mxu0
        %v1773 = vpop.f32.mrb[0].mxu0
        %v1774 = vpop.f32.mrb[0].mxu0
        %1775 = vdwg.mxu0
        %v1776 = vadd.f32 %v1627, %v1730
        %v1777 = vadd.f32 %v1629, %v1732
        %v1778 = vadd.f32 %v1668, %v1771
        %s1779 = scalar_lea.vmem [#allocation13], 24
        %v1780 = vld [vmem:[%s1779] sm:$0x3]
        %1781 = vrot.lane.b32.xlu0 %v1474, 110
        %v1782 = vpop.permute.xlu0 %1781
        %1783 = vrot.lane.b32.xlu0 %v1475, 110
        %v1784 = vpop.permute.xlu0 %1783
        %1785 = vrot.lane.b32.xlu0 %v1476, 110
        %v1786 = vpop.permute.xlu0 %1785
        %v1787 = vsel %vm751, %v1782, %v1784
        %v1788 = vsel %vm751, %v1784, %v1786
        %v1790 = vsel %vm1485, %v1780, 0
        %v1793 = vsel %vm1489, %v1787, 0
        %v1796 = vsel %vm1489, %v1788, 0
        %v1799 = vsel %vm1489, %v1786, 0
        %1801 = vmatprep.subr.bf16.mxu0 %v1796
        %1802 = vmatpush1.bf16.msra.mxu0 %v1793
        %1803 = vmatprep.subr.bf16.mxu0 0
        %1804 = vmatpush1.bf16.msra.mxu0 0
        %1805 = vmatprep.subr.bf16.mxu0 0
        %1806 = vmatpush1.bf16.msra.mxu0 0
        %1807 = vmatprep.subr.bf16.mxu0 0
        %1808 = vmatpush1.bf16.msra.mxu0 0
        %1809 = vmatprep.subr.bf16.mxu0 0
        %1810 = vmatpush1.bf16.msra.mxu0 0
        %1811 = vmatprep.subr.bf16.mxu0 0
        %1812 = vmatpush1.bf16.msra.mxu0 0
        %1813 = vmatprep.subr.bf16.mxu0 0
        %1814 = vmatpush1.bf16.msra.mxu0 0
        %1815 = vmatprep.subr.bf16.mxu0 0
        %1816 = vmatpush1.bf16.msra.mxu0 0
        %1817 = vmatprep.subr.bf16.mxu0 0
        %1818 = vmatpush1.bf16.msra.mxu0 0
        %1819 = vmatprep.subr.bf16.mxu0 0
        %1820 = vmatpush1.bf16.msra.mxu0 0
        %1821 = vmatprep.subr.bf16.mxu0 0
        %1822 = vmatpush1.bf16.msra.mxu0 0
        %1823 = vmatprep.subr.bf16.mxu0 0
        %1824 = vmatpush1.bf16.msra.mxu0 0
        %1825 = vmatprep.subr.bf16.mxu0 0
        %1826 = vmatpush1.bf16.msra.mxu0 0
        %1827 = vmatprep.subr.bf16.mxu0 0
        %1828 = vmatpush1.bf16.msra.mxu0 0
        %1829 = vmatprep.subr.bf16.mxu0 0
        %1830 = vmatpush1.bf16.msra.mxu0 0
        %1831 = vmatprep.subr.bf16.mxu0 0
        %1832 = vmatpush1.bf16.msra.mxu0 0
        %1833 = vmatprep.mubr.bf16.mxu0 0
        %1834 = vmatmul.mubr.bf16.gmra.mrb[0].mxu0 %v1790
        %v1835 = vpop.f32.mrb[0].mxu0
        %v1836 = vadd.f32 0.0, %v1835
        %v1837 = vpop.f32.mrb[0].mxu0
        %v1838 = vadd.f32 0.0, %v1837
        %v1839 = vpop.f32.mrb[0].mxu0
        %v1840 = vpop.f32.mrb[0].mxu0
        %1841 = vdwg.mxu0
        %1842 = vmatprep.subr.bf16.mxu0 0
        %1843 = vmatpush1.bf16.msra.mxu0 %v1799
        %1844 = vmatprep.subr.bf16.mxu0 0
        %1845 = vmatpush1.bf16.msra.mxu0 0
        %1846 = vmatprep.subr.bf16.mxu0 0
        %1847 = vmatpush1.bf16.msra.mxu0 0
        %1848 = vmatprep.subr.bf16.mxu0 0
        %1849 = vmatpush1.bf16.msra.mxu0 0
        %1850 = vmatprep.subr.bf16.mxu0 0
        %1851 = vmatpush1.bf16.msra.mxu0 0
        %1852 = vmatprep.subr.bf16.mxu0 0
        %1853 = vmatpush1.bf16.msra.mxu0 0
        %1854 = vmatprep.subr.bf16.mxu0 0
        %1855 = vmatpush1.bf16.msra.mxu0 0
        %1856 = vmatprep.subr.bf16.mxu0 0
        %1857 = vmatpush1.bf16.msra.mxu0 0
        %1858 = vmatprep.subr.bf16.mxu0 0
        %1859 = vmatpush1.bf16.msra.mxu0 0
        %1860 = vmatprep.subr.bf16.mxu0 0
        %1861 = vmatpush1.bf16.msra.mxu0 0
        %1862 = vmatprep.subr.bf16.mxu0 0
        %1863 = vmatpush1.bf16.msra.mxu0 0
        %1864 = vmatprep.subr.bf16.mxu0 0
        %1865 = vmatpush1.bf16.msra.mxu0 0
        %1866 = vmatprep.subr.bf16.mxu0 0
        %1867 = vmatpush1.bf16.msra.mxu0 0
        %1868 = vmatprep.subr.bf16.mxu0 0
        %1869 = vmatpush1.bf16.msra.mxu0 0
        %1870 = vmatprep.subr.bf16.mxu0 0
        %1871 = vmatpush1.bf16.msra.mxu0 0
        %1872 = vmatprep.subr.bf16.mxu0 0
        %1873 = vmatpush1.bf16.msra.mxu0 0
        %1874 = vmatprep.mubr.bf16.mxu0 0
        %1875 = vmatmul.mubr.bf16.gmra.mrb[0].mxu0 %v1790
        %v1876 = vpop.f32.mrb[0].mxu0
        %v1877 = vadd.f32 0.0, %v1876
        %v1878 = vpop.f32.mrb[0].mxu0
        %v1879 = vpop.f32.mrb[0].mxu0
        %v1880 = vpop.f32.mrb[0].mxu0
        %1881 = vdwg.mxu0
        %v1882 = vadd.f32 %v1776, %v1836
        %v1883 = vadd.f32 %v1777, %v1838
        %v1884 = vadd.f32 %v1778, %v1877
        %s1885 = scalar_lea.vmem [#allocation13], 26
        %v1886 = vld [vmem:[%s1885] sm:$0x3]
        %1887 = vrot.lane.b32.xlu0 %v1474, 109
        %v1888 = vpop.permute.xlu0 %1887
        %1889 = vrot.lane.b32.xlu0 %v1475, 109
        %v1890 = vpop.permute.xlu0 %1889
        %1891 = vrot.lane.b32.xlu0 %v1476, 109
        %v1892 = vpop.permute.xlu0 %1891
        %v1893 = vsel %vm858, %v1888, %v1890
        %v1894 = vsel %vm858, %v1890, %v1892
        %v1896 = vsel %vm1485, %v1886, 0
        %v1899 = vsel %vm1489, %v1893, 0
        %v1902 = vsel %vm1489, %v1894, 0
        %v1905 = vsel %vm1489, %v1892, 0
        %1907 = vmatprep.subr.bf16.mxu0 %v1902
        %1908 = vmatpush1.bf16.msra.mxu0 %v1899
        %1909 = vmatprep.subr.bf16.mxu0 0
        %1910 = vmatpush1.bf16.msra.mxu0 0
        %1911 = vmatprep.subr.bf16.mxu0 0
        %1912 = vmatpush1.bf16.msra.mxu0 0
        %1913 = vmatprep.subr.bf16.mxu0 0
        %1914 = vmatpush1.bf16.msra.mxu0 0
        %1915 = vmatprep.subr.bf16.mxu0 0
        %1916 = vmatpush1.bf16.msra.mxu0 0
        %1917 = vmatprep.subr.bf16.mxu0 0
        %1918 = vmatpush1.bf16.msra.mxu0 0
        %1919 = vmatprep.subr.bf16.mxu0 0
        %1920 = vmatpush1.bf16.msra.mxu0 0
        %1921 = vmatprep.subr.bf16.mxu0 0
        %1922 = vmatpush1.bf16.msra.mxu0 0
        %1923 = vmatprep.subr.bf16.mxu0 0
        %1924 = vmatpush1.bf16.msra.mxu0 0
        %1925 = vmatprep.subr.bf16.mxu0 0
        %1926 = vmatpush1.bf16.msra.mxu0 0
        %1927 = vmatprep.subr.bf16.mxu0 0
        %1928 = vmatpush1.bf16.msra.mxu0 0
        %1929 = vmatprep.subr.bf16.mxu0 0
        %1930 = vmatpush1.bf16.msra.mxu0 0
        %1931 = vmatprep.subr.bf16.mxu0 0
        %1932 = vmatpush1.bf16.msra.mxu0 0
        %1933 = vmatprep.subr.bf16.mxu0 0
        %1934 = vmatpush1.bf16.msra.mxu0 0
        %1935 = vmatprep.subr.bf16.mxu0 0
        %1936 = vmatpush1.bf16.msra.mxu0 0
        %1937 = vmatprep.subr.bf16.mxu0 0
        %1938 = vmatpush1.bf16.msra.mxu0 0
        %1939 = vmatprep.mubr.bf16.mxu0 0
        %1940 = vmatmul.mubr.bf16.gmra.mrb[0].mxu0 %v1896
        %v1941 = vpop.f32.mrb[0].mxu0
        %v1942 = vadd.f32 0.0, %v1941
        %v1943 = vpop.f32.mrb[0].mxu0
        %v1944 = vadd.f32 0.0, %v1943
        %v1945 = vpop.f32.mrb[0].mxu0
        %v1946 = vpop.f32.mrb[0].mxu0
        %1947 = vdwg.mxu0
        %1948 = vmatprep.subr.bf16.mxu0 0
        %1949 = vmatpush1.bf16.msra.mxu0 %v1905
        %1950 = vmatprep.subr.bf16.mxu0 0
        %1951 = vmatpush1.bf16.msra.mxu0 0
        %1952 = vmatprep.subr.bf16.mxu0 0
        %1953 = vmatpush1.bf16.msra.mxu0 0
        %1954 = vmatprep.subr.bf16.mxu0 0
        %1955 = vmatpush1.bf16.msra.mxu0 0
        %1956 = vmatprep.subr.bf16.mxu0 0
        %1957 = vmatpush1.bf16.msra.mxu0 0
        %1958 = vmatprep.subr.bf16.mxu0 0
        %1959 = vmatpush1.bf16.msra.mxu0 0
        %1960 = vmatprep.subr.bf16.mxu0 0
        %1961 = vmatpush1.bf16.msra.mxu0 0
        %1962 = vmatprep.subr.bf16.mxu0 0
        %1963 = vmatpush1.bf16.msra.mxu0 0
        %1964 = vmatprep.subr.bf16.mxu0 0
        %1965 = vmatpush1.bf16.msra.mxu0 0
        %1966 = vmatprep.subr.bf16.mxu0 0
        %1967 = vmatpush1.bf16.msra.mxu0 0
        %1968 = vmatprep.subr.bf16.mxu0 0
        %1969 = vmatpush1.bf16.msra.mxu0 0
        %1970 = vmatprep.subr.bf16.mxu0 0
        %1971 = vmatpush1.bf16.msra.mxu0 0
        %1972 = vmatprep.subr.bf16.mxu0 0
        %1973 = vmatpush1.bf16.msra.mxu0 0
        %1974 = vmatprep.subr.bf16.mxu0 0
        %1975 = vmatpush1.bf16.msra.mxu0 0
        %1976 = vmatprep.subr.bf16.mxu0 0
        %1977 = vmatpush1.bf16.msra.mxu0 0
        %1978 = vmatprep.subr.bf16.mxu0 0
        %1979 = vmatpush1.bf16.msra.mxu0 0
        %1980 = vmatprep.mubr.bf16.mxu0 0
        %1981 = vmatmul.mubr.bf16.gmra.mrb[0].mxu0 %v1896
        %v1982 = vpop.f32.mrb[0].mxu0
        %v1983 = vadd.f32 0.0, %v1982
        %v1984 = vpop.f32.mrb[0].mxu0
        %v1985 = vpop.f32.mrb[0].mxu0
        %v1986 = vpop.f32.mrb[0].mxu0
        %1987 = vdwg.mxu0
        %v1988 = vadd.f32 %v1882, %v1942
        %v1989 = vadd.f32 %v1883, %v1944
        %v1990 = vadd.f32 %v1884, %v1983
        %s1991 = scalar_lea.vmem [#allocation13], 28
        %v1992 = vld [vmem:[%s1991] sm:$0x3]
        %1993 = vrot.lane.b32.xlu0 %v1474, 108
        %v1994 = vpop.permute.xlu0 %1993
        %1995 = vrot.lane.b32.xlu0 %v1475, 108
        %v1996 = vpop.permute.xlu0 %1995
        %1997 = vrot.lane.b32.xlu0 %v1476, 108
        %v1998 = vpop.permute.xlu0 %1997
        %v1999 = vsel %vm965, %v1994, %v1996
        %v2000 = vsel %vm965, %v1996, %v1998
        %v2002 = vsel %vm1485, %v1992, 0
        %v2005 = vsel %vm1489, %v1999, 0
        %v2008 = vsel %vm1489, %v2000, 0
        %v2011 = vsel %vm1489, %v1998, 0
        %2013 = vmatprep.subr.bf16.mxu0 %v2008
        %2014 = vmatpush1.bf16.msra.mxu0 %v2005
        %2015 = vmatprep.subr.bf16.mxu0 0
        %2016 = vmatpush1.bf16.msra.mxu0 0
        %2017 = vmatprep.subr.bf16.mxu0 0
        %2018 = vmatpush1.bf16.msra.mxu0 0
        %2019 = vmatprep.subr.bf16.mxu0 0
        %2020 = vmatpush1.bf16.msra.mxu0 0
        %2021 = vmatprep.subr.bf16.mxu0 0
        %2022 = vmatpush1.bf16.msra.mxu0 0
        %2023 = vmatprep.subr.bf16.mxu0 0
        %2024 = vmatpush1.bf16.msra.mxu0 0
        %2025 = vmatprep.subr.bf16.mxu0 0
        %2026 = vmatpush1.bf16.msra.mxu0 0
        %2027 = vmatprep.subr.bf16.mxu0 0
        %2028 = vmatpush1.bf16.msra.mxu0 0
        %2029 = vmatprep.subr.bf16.mxu0 0
        %2030 = vmatpush1.bf16.msra.mxu0 0
        %2031 = vmatprep.subr.bf16.mxu0 0
        %2032 = vmatpush1.bf16.msra.mxu0 0
        %2033 = vmatprep.subr.bf16.mxu0 0
        %2034 = vmatpush1.bf16.msra.mxu0 0
        %2035 = vmatprep.subr.bf16.mxu0 0
        %2036 = vmatpush1.bf16.msra.mxu0 0
        %2037 = vmatprep.subr.bf16.mxu0 0
        %2038 = vmatpush1.bf16.msra.mxu0 0
        %2039 = vmatprep.subr.bf16.mxu0 0
        %2040 = vmatpush1.bf16.msra.mxu0 0
        %2041 = vmatprep.subr.bf16.mxu0 0
        %2042 = vmatpush1.bf16.msra.mxu0 0
        %2043 = vmatprep.subr.bf16.mxu0 0
        %2044 = vmatpush1.bf16.msra.mxu0 0
        %2045 = vmatprep.mubr.bf16.mxu0 0
        %2046 = vmatmul.mubr.bf16.gmra.mrb[0].mxu0 %v2002
        %v2047 = vpop.f32.mrb[0].mxu0
        %v2048 = vadd.f32 0.0, %v2047
        %v2049 = vpop.f32.mrb[0].mxu0
        %v2050 = vadd.f32 0.0, %v2049
        %v2051 = vpop.f32.mrb[0].mxu0
        %v2052 = vpop.f32.mrb[0].mxu0
        %2053 = vdwg.mxu0
        %2054 = vmatprep.subr.bf16.mxu0 0
        %2055 = vmatpush1.bf16.msra.mxu0 %v2011
        %2056 = vmatprep.subr.bf16.mxu0 0
        %2057 = vmatpush1.bf16.msra.mxu0 0
        %2058 = vmatprep.subr.bf16.mxu0 0
        %2059 = vmatpush1.bf16.msra.mxu0 0
        %2060 = vmatprep.subr.bf16.mxu0 0
        %2061 = vmatpush1.bf16.msra.mxu0 0
        %2062 = vmatprep.subr.bf16.mxu0 0
        %2063 = vmatpush1.bf16.msra.mxu0 0
        %2064 = vmatprep.subr.bf16.mxu0 0
        %2065 = vmatpush1.bf16.msra.mxu0 0
        %2066 = vmatprep.subr.bf16.mxu0 0
        %2067 = vmatpush1.bf16.msra.mxu0 0
        %2068 = vmatprep.subr.bf16.mxu0 0
        %2069 = vmatpush1.bf16.msra.mxu0 0
        %2070 = vmatprep.subr.bf16.mxu0 0
        %2071 = vmatpush1.bf16.msra.mxu0 0
        %2072 = vmatprep.subr.bf16.mxu0 0
        %2073 = vmatpush1.bf16.msra.mxu0 0
        %2074 = vmatprep.subr.bf16.mxu0 0
        %2075 = vmatpush1.bf16.msra.mxu0 0
        %2076 = vmatprep.subr.bf16.mxu0 0
        %2077 = vmatpush1.bf16.msra.mxu0 0
        %2078 = vmatprep.subr.bf16.mxu0 0
        %2079 = vmatpush1.bf16.msra.mxu0 0
        %2080 = vmatprep.subr.bf16.mxu0 0
        %2081 = vmatpush1.bf16.msra.mxu0 0
        %2082 = vmatprep.subr.bf16.mxu0 0
        %2083 = vmatpush1.bf16.msra.mxu0 0
        %2084 = vmatprep.subr.bf16.mxu0 0
        %2085 = vmatpush1.bf16.msra.mxu0 0
        %2086 = vmatprep.mubr.bf16.mxu0 0
        %2087 = vmatmul.mubr.bf16.gmra.mrb[0].mxu0 %v2002
        %v2088 = vpop.f32.mrb[0].mxu0
        %v2089 = vadd.f32 0.0, %v2088
        %v2090 = vpop.f32.mrb[0].mxu0
        %v2091 = vpop.f32.mrb[0].mxu0
        %v2092 = vpop.f32.mrb[0].mxu0
        %2093 = vdwg.mxu0
        %v2094 = vadd.f32 %v1988, %v2048
        %v2095 = vadd.f32 %v1989, %v2050
        %v2096 = vadd.f32 %v1990, %v2089
        %s2097 = scalar_lea.vmem [#allocation13], 30
        %v2098 = vld [vmem:[%s2097] sm:$0x3]
        %2099 = vrot.lane.b32.xlu0 %v1474, 92
        %v2100 = vpop.permute.xlu0 %2099
        %2101 = vrot.lane.b32.xlu0 %v1475, 92
        %v2102 = vpop.permute.xlu0 %2101
        %2103 = vrot.lane.b32.xlu0 %v1476, 92
        %v2104 = vpop.permute.xlu0 %2103
        %v2105 = vsel %vm1072, %v2100, %v2102
        %v2106 = vsel %vm1072, %v2102, %v2104
        %v2108 = vsel %vm1485, %v2098, 0
        %v2111 = vsel %vm1489, %v2105, 0
        %v2114 = vsel %vm1489, %v2106, 0
        %v2117 = vsel %vm1489, %v2104, 0
        %2119 = vmatprep.subr.bf16.mxu0 %v2114
        %2120 = vmatpush1.bf16.msra.mxu0 %v2111
        %2121 = vmatprep.subr.bf16.mxu0 0
        %2122 = vmatpush1.bf16.msra.mxu0 0
        %2123 = vmatprep.subr.bf16.mxu0 0
        %2124 = vmatpush1.bf16.msra.mxu0 0
        %2125 = vmatprep.subr.bf16.mxu0 0
        %2126 = vmatpush1.bf16.msra.mxu0 0
        %2127 = vmatprep.subr.bf16.mxu0 0
        %2128 = vmatpush1.bf16.msra.mxu0 0
        %2129 = vmatprep.subr.bf16.mxu0 0
        %2130 = vmatpush1.bf16.msra.mxu0 0
        %2131 = vmatprep.subr.bf16.mxu0 0
        %2132 = vmatpush1.bf16.msra.mxu0 0
        %2133 = vmatprep.subr.bf16.mxu0 0
        %2134 = vmatpush1.bf16.msra.mxu0 0
        %2135 = vmatprep.subr.bf16.mxu0 0
        %2136 = vmatpush1.bf16.msra.mxu0 0
        %2137 = vmatprep.subr.bf16.mxu0 0
        %2138 = vmatpush1.bf16.msra.mxu0 0
        %2139 = vmatprep.subr.bf16.mxu0 0
        %2140 = vmatpush1.bf16.msra.mxu0 0
        %2141 = vmatprep.subr.bf16.mxu0 0
        %2142 = vmatpush1.bf16.msra.mxu0 0
        %2143 = vmatprep.subr.bf16.mxu0 0
        %2144 = vmatpush1.bf16.msra.mxu0 0
        %2145 = vmatprep.subr.bf16.mxu0 0
        %2146 = vmatpush1.bf16.msra.mxu0 0
        %2147 = vmatprep.subr.bf16.mxu0 0
        %2148 = vmatpush1.bf16.msra.mxu0 0
        %2149 = vmatprep.subr.bf16.mxu0 0
        %2150 = vmatpush1.bf16.msra.mxu0 0
        %2151 = vmatprep.mubr.bf16.mxu0 0
        %2152 = vmatmul.mubr.bf16.gmra.mrb[0].mxu0 %v2108
        %v2153 = vpop.f32.mrb[0].mxu0
        %v2154 = vadd.f32 0.0, %v2153
        %v2155 = vpop.f32.mrb[0].mxu0
        %v2156 = vadd.f32 0.0, %v2155
        %v2157 = vpop.f32.mrb[0].mxu0
        %v2158 = vpop.f32.mrb[0].mxu0
        %2159 = vdwg.mxu0
        %2160 = vmatprep.subr.bf16.mxu0 0
        %2161 = vmatpush1.bf16.msra.mxu0 %v2117
        %2162 = vmatprep.subr.bf16.mxu0 0
        %2163 = vmatpush1.bf16.msra.mxu0 0
        %2164 = vmatprep.subr.bf16.mxu0 0
        %2165 = vmatpush1.bf16.msra.mxu0 0
        %2166 = vmatprep.subr.bf16.mxu0 0
        %2167 = vmatpush1.bf16.msra.mxu0 0
        %2168 = vmatprep.subr.bf16.mxu0 0
        %2169 = vmatpush1.bf16.msra.mxu0 0
        %2170 = vmatprep.subr.bf16.mxu0 0
        %2171 = vmatpush1.bf16.msra.mxu0 0
        %2172 = vmatprep.subr.bf16.mxu0 0
        %2173 = vmatpush1.bf16.msra.mxu0 0
        %2174 = vmatprep.subr.bf16.mxu0 0
        %2175 = vmatpush1.bf16.msra.mxu0 0
        %2176 = vmatprep.subr.bf16.mxu0 0
        %2177 = vmatpush1.bf16.msra.mxu0 0
        %2178 = vmatprep.subr.bf16.mxu0 0
        %2179 = vmatpush1.bf16.msra.mxu0 0
        %2180 = vmatprep.subr.bf16.mxu0 0
        %2181 = vmatpush1.bf16.msra.mxu0 0
        %2182 = vmatprep.subr.bf16.mxu0 0
        %2183 = vmatpush1.bf16.msra.mxu0 0
        %2184 = vmatprep.subr.bf16.mxu0 0
        %2185 = vmatpush1.bf16.msra.mxu0 0
        %2186 = vmatprep.subr.bf16.mxu0 0
        %2187 = vmatpush1.bf16.msra.mxu0 0
        %2188 = vmatprep.subr.bf16.mxu0 0
        %2189 = vmatpush1.bf16.msra.mxu0 0
        %2190 = vmatprep.subr.bf16.mxu0 0
        %2191 = vmatpush1.bf16.msra.mxu0 0
        %2192 = vmatprep.mubr.bf16.mxu0 0
        %2193 = vmatmul.mubr.bf16.gmra.mrb[0].mxu0 %v2108
        %v2194 = vpop.f32.mrb[0].mxu0
        %v2195 = vadd.f32 0.0, %v2194
        %v2196 = vpop.f32.mrb[0].mxu0
        %v2197 = vpop.f32.mrb[0].mxu0
        %v2198 = vpop.f32.mrb[0].mxu0
        %2199 = vdwg.mxu0
        %v2200 = vadd.f32 %v2094, %v2154
        %v2201 = vadd.f32 %v2095, %v2156
        %v2202 = vadd.f32 %v2096, %v2195
        %s2203 = scalar_lea.vmem [#allocation13], 32
        %v2204 = vld [vmem:[%s2203] sm:$0x3]
        %2205 = vrot.lane.b32.xlu0 %v1474, 91
        %v2206 = vpop.permute.xlu0 %2205
        %2207 = vrot.lane.b32.xlu0 %v1475, 91
        %v2208 = vpop.permute.xlu0 %2207
        %2209 = vrot.lane.b32.xlu0 %v1476, 91
        %v2210 = vpop.permute.xlu0 %2209
        %v2211 = vsel %vm1179, %v2206, %v2208
        %v2212 = vsel %vm1179, %v2208, %v2210
        %v2214 = vsel %vm1485, %v2204, 0
        %v2217 = vsel %vm1489, %v2211, 0
        %v2220 = vsel %vm1489, %v2212, 0
        %v2223 = vsel %vm1489, %v2210, 0
        %2225 = vmatprep.subr.bf16.mxu0 %v2220
        %2226 = vmatpush1.bf16.msra.mxu0 %v2217
        %2227 = vmatprep.subr.bf16.mxu0 0
        %2228 = vmatpush1.bf16.msra.mxu0 0
        %2229 = vmatprep.subr.bf16.mxu0 0
        %2230 = vmatpush1.bf16.msra.mxu0 0
        %2231 = vmatprep.subr.bf16.mxu0 0
        %2232 = vmatpush1.bf16.msra.mxu0 0
        %2233 = vmatprep.subr.bf16.mxu0 0
        %2234 = vmatpush1.bf16.msra.mxu0 0
        %2235 = vmatprep.subr.bf16.mxu0 0
        %2236 = vmatpush1.bf16.msra.mxu0 0
        %2237 = vmatprep.subr.bf16.mxu0 0
        %2238 = vmatpush1.bf16.msra.mxu0 0
        %2239 = vmatprep.subr.bf16.mxu0 0
        %2240 = vmatpush1.bf16.msra.mxu0 0
        %2241 = vmatprep.subr.bf16.mxu0 0
        %2242 = vmatpush1.bf16.msra.mxu0 0
        %2243 = vmatprep.subr.bf16.mxu0 0
        %2244 = vmatpush1.bf16.msra.mxu0 0
        %2245 = vmatprep.subr.bf16.mxu0 0
        %2246 = vmatpush1.bf16.msra.mxu0 0
        %2247 = vmatprep.subr.bf16.mxu0 0
        %2248 = vmatpush1.bf16.msra.mxu0 0
        %2249 = vmatprep.subr.bf16.mxu0 0
        %2250 = vmatpush1.bf16.msra.mxu0 0
        %2251 = vmatprep.subr.bf16.mxu0 0
        %2252 = vmatpush1.bf16.msra.mxu0 0
        %2253 = vmatprep.subr.bf16.mxu0 0
        %2254 = vmatpush1.bf16.msra.mxu0 0
        %2255 = vmatprep.subr.bf16.mxu0 0
        %2256 = vmatpush1.bf16.msra.mxu0 0
        %2257 = vmatprep.mubr.bf16.mxu0 0
        %2258 = vmatmul.mubr.bf16.gmra.mrb[0].mxu0 %v2214
        %v2259 = vpop.f32.mrb[0].mxu0
        %v2260 = vadd.f32 0.0, %v2259
        %v2261 = vpop.f32.mrb[0].mxu0
        %v2262 = vadd.f32 0.0, %v2261
        %v2263 = vpop.f32.mrb[0].mxu0
        %v2264 = vpop.f32.mrb[0].mxu0
        %2265 = vdwg.mxu0
        %2266 = vmatprep.subr.bf16.mxu0 0
        %2267 = vmatpush1.bf16.msra.mxu0 %v2223
        %2268 = vmatprep.subr.bf16.mxu0 0
        %2269 = vmatpush1.bf16.msra.mxu0 0
        %2270 = vmatprep.subr.bf16.mxu0 0
        %2271 = vmatpush1.bf16.msra.mxu0 0
        %2272 = vmatprep.subr.bf16.mxu0 0
        %2273 = vmatpush1.bf16.msra.mxu0 0
        %2274 = vmatprep.subr.bf16.mxu0 0
        %2275 = vmatpush1.bf16.msra.mxu0 0
        %2276 = vmatprep.subr.bf16.mxu0 0
        %2277 = vmatpush1.bf16.msra.mxu0 0
        %2278 = vmatprep.subr.bf16.mxu0 0
        %2279 = vmatpush1.bf16.msra.mxu0 0
        %2280 = vmatprep.subr.bf16.mxu0 0
        %2281 = vmatpush1.bf16.msra.mxu0 0
        %2282 = vmatprep.subr.bf16.mxu0 0
        %2283 = vmatpush1.bf16.msra.mxu0 0
        %2284 = vmatprep.subr.bf16.mxu0 0
        %2285 = vmatpush1.bf16.msra.mxu0 0
        %2286 = vmatprep.subr.bf16.mxu0 0
        %2287 = vmatpush1.bf16.msra.mxu0 0
        %2288 = vmatprep.subr.bf16.mxu0 0
        %2289 = vmatpush1.bf16.msra.mxu0 0
        %2290 = vmatprep.subr.bf16.mxu0 0
        %2291 = vmatpush1.bf16.msra.mxu0 0
        %2292 = vmatprep.subr.bf16.mxu0 0
        %2293 = vmatpush1.bf16.msra.mxu0 0
        %2294 = vmatprep.subr.bf16.mxu0 0
        %2295 = vmatpush1.bf16.msra.mxu0 0
        %2296 = vmatprep.subr.bf16.mxu0 0
        %2297 = vmatpush1.bf16.msra.mxu0 0
        %2298 = vmatprep.mubr.bf16.mxu0 0
        %2299 = vmatmul.mubr.bf16.gmra.mrb[0].mxu0 %v2214
        %v2300 = vpop.f32.mrb[0].mxu0
        %v2301 = vadd.f32 0.0, %v2300
        %v2302 = vpop.f32.mrb[0].mxu0
        %v2303 = vpop.f32.mrb[0].mxu0
        %v2304 = vpop.f32.mrb[0].mxu0
        %2305 = vdwg.mxu0
        %v2306 = vadd.f32 %v2200, %v2260
        %v2307 = vadd.f32 %v2201, %v2262
        %v2308 = vadd.f32 %v2202, %v2301
        %s2309 = scalar_lea.vmem [#allocation13], 34
        %v2310 = vld [vmem:[%s2309] sm:$0x3]
        %2311 = vrot.lane.b32.xlu0 %v1474, 90
        %v2312 = vpop.permute.xlu0 %2311
        %2313 = vrot.lane.b32.xlu0 %v1475, 90
        %v2314 = vpop.permute.xlu0 %2313
        %2315 = vrot.lane.b32.xlu0 %v1476, 90
        %v2316 = vpop.permute.xlu0 %2315
        %v2317 = vsel %vm1286, %v2312, %v2314
        %v2318 = vsel %vm1286, %v2314, %v2316
        %v2320 = vsel %vm1485, %v2310, 0
        %v2323 = vsel %vm1489, %v2317, 0
        %v2326 = vsel %vm1489, %v2318, 0
        %v2329 = vsel %vm1489, %v2316, 0
        %2331 = vmatprep.subr.bf16.mxu0 %v2326
        %2332 = vmatpush1.bf16.msra.mxu0 %v2323
        %2333 = vmatprep.subr.bf16.mxu0 0
        %2334 = vmatpush1.bf16.msra.mxu0 0
        %2335 = vmatprep.subr.bf16.mxu0 0
        %2336 = vmatpush1.bf16.msra.mxu0 0
        %2337 = vmatprep.subr.bf16.mxu0 0
        %2338 = vmatpush1.bf16.msra.mxu0 0
        %2339 = vmatprep.subr.bf16.mxu0 0
        %2340 = vmatpush1.bf16.msra.mxu0 0
        %2341 = vmatprep.subr.bf16.mxu0 0
        %2342 = vmatpush1.bf16.msra.mxu0 0
        %2343 = vmatprep.subr.bf16.mxu0 0
        %2344 = vmatpush1.bf16.msra.mxu0 0
        %2345 = vmatprep.subr.bf16.mxu0 0
        %2346 = vmatpush1.bf16.msra.mxu0 0
        %2347 = vmatprep.subr.bf16.mxu0 0
        %2348 = vmatpush1.bf16.msra.mxu0 0
        %2349 = vmatprep.subr.bf16.mxu0 0
        %2350 = vmatpush1.bf16.msra.mxu0 0
        %2351 = vmatprep.subr.bf16.mxu0 0
        %2352 = vmatpush1.bf16.msra.mxu0 0
        %2353 = vmatprep.subr.bf16.mxu0 0
        %2354 = vmatpush1.bf16.msra.mxu0 0
        %2355 = vmatprep.subr.bf16.mxu0 0
        %2356 = vmatpush1.bf16.msra.mxu0 0
        %2357 = vmatprep.subr.bf16.mxu0 0
        %2358 = vmatpush1.bf16.msra.mxu0 0
        %2359 = vmatprep.subr.bf16.mxu0 0
        %2360 = vmatpush1.bf16.msra.mxu0 0
        %2361 = vmatprep.subr.bf16.mxu0 0
        %2362 = vmatpush1.bf16.msra.mxu0 0
        %2363 = vmatprep.mubr.bf16.mxu0 0
        %2364 = vmatmul.mubr.bf16.gmra.mrb[0].mxu0 %v2320
        %v2365 = vpop.f32.mrb[0].mxu0
        %v2366 = vadd.f32 0.0, %v2365
        %v2367 = vpop.f32.mrb[0].mxu0
        %v2368 = vadd.f32 0.0, %v2367
        %v2369 = vpop.f32.mrb[0].mxu0
        %v2370 = vpop.f32.mrb[0].mxu0
        %2371 = vdwg.mxu0
        %2372 = vmatprep.subr.bf16.mxu0 0
        %2373 = vmatpush1.bf16.msra.mxu0 %v2329
        %2374 = vmatprep.subr.bf16.mxu0 0
        %2375 = vmatpush1.bf16.msra.mxu0 0
        %2376 = vmatprep.subr.bf16.mxu0 0
        %2377 = vmatpush1.bf16.msra.mxu0 0
        %2378 = vmatprep.subr.bf16.mxu0 0
        %2379 = vmatpush1.bf16.msra.mxu0 0
        %2380 = vmatprep.subr.bf16.mxu0 0
        %2381 = vmatpush1.bf16.msra.mxu0 0
        %2382 = vmatprep.subr.bf16.mxu0 0
        %2383 = vmatpush1.bf16.msra.mxu0 0
        %2384 = vmatprep.subr.bf16.mxu0 0
        %2385 = vmatpush1.bf16.msra.mxu0 0
        %2386 = vmatprep.subr.bf16.mxu0 0
        %2387 = vmatpush1.bf16.msra.mxu0 0
        %2388 = vmatprep.subr.bf16.mxu0 0
        %2389 = vmatpush1.bf16.msra.mxu0 0
        %2390 = vmatprep.subr.bf16.mxu0 0
        %2391 = vmatpush1.bf16.msra.mxu0 0
        %2392 = vmatprep.subr.bf16.mxu0 0
        %2393 = vmatpush1.bf16.msra.mxu0 0
        %2394 = vmatprep.subr.bf16.mxu0 0
        %2395 = vmatpush1.bf16.msra.mxu0 0
        %2396 = vmatprep.subr.bf16.mxu0 0
        %2397 = vmatpush1.bf16.msra.mxu0 0
        %2398 = vmatprep.subr.bf16.mxu0 0
        %2399 = vmatpush1.bf16.msra.mxu0 0
        %2400 = vmatprep.subr.bf16.mxu0 0
        %2401 = vmatpush1.bf16.msra.mxu0 0
        %2402 = vmatprep.subr.bf16.mxu0 0
        %2403 = vmatpush1.bf16.msra.mxu0 0
        %2404 = vmatprep.mubr.bf16.mxu0 0
        %2405 = vmatmul.mubr.bf16.gmra.mrb[0].mxu0 %v2320
        %v2406 = vpop.f32.mrb[0].mxu0
        %v2407 = vadd.f32 0.0, %v2406
        %v2408 = vpop.f32.mrb[0].mxu0
        %v2409 = vpop.f32.mrb[0].mxu0
        %v2410 = vpop.f32.mrb[0].mxu0
        %2411 = vdwg.mxu0
        %v2412 = vadd.f32 %v2306, %v2366
        %v2413 = vadd.f32 %v2307, %v2368
        %v2414 = vadd.f32 %v2308, %v2407
        %v2415 = vld [vmem:[#allocation12] sm:$0xf]
        %2417 = vset.pattern.permute.xlu0 1
        %2418 = vperm.xlu0 %2417, %v2415
        %v2419 = vpop.permute.xlu0 %2418
        %v2421 = vadd.f32 %v2412, %v2419
        %v2422 = vadd.f32 %v2413, %v2419
        %v2423 = vadd.f32 %v2414, %v2419
        %v2427 = vrot.slane %v2421, 4
        %v2428 = vrot.slane %v2422, 4
        %v2429 = vrot.slane %v2423, 4
        %2433 = vst [vmem:[%s336] sm:$0xf0] %v2427
        %2434 = vst [vmem:[%s336 + $0x8] sm:$0xf0] %v2428
        %2435 = vst.msk [vmem:[%s336 + $0x10] sm:$0xf0] %vm1408, %v2429
        %2436 = vst [vmem:[#allocation2 + $0x18] sm:$0xf] %v2421
        %2437 = vst [vmem:[#allocation2 + $0x20] sm:$0xf] %v2422
        %2438 = vst.msk [vmem:[#allocation2 + $0x28] sm:$0xf] %vm353, %v2423
        %v2439 = vld [vmem:[#allocation2] sm:$0xff]
        %v2440 = vld [vmem:[#allocation2 + $0x8] sm:$0xff]
        %v2441 = vld [vmem:[#allocation2 + $0x10] sm:$0xff]
        %v2442 = vld [vmem:[#allocation2 + $0x18] sm:$0xf]
        %v2443 = vld [vmem:[#allocation2 + $0x20] sm:$0xf]
        %v2444 = vld [vmem:[#allocation2 + $0x28] sm:$0xf]
        %v2445 = vld [vmem:[#allocation9] sm:$0xff]
        %v2446 = vld [vmem:[#allocation9 + $0x8] sm:$0xf]
        %2448 = vset.pattern.permute.xlu0 2
        %2449 = vperm.xlu0 %2448, %v2445
        %v2450 = vpop.permute.xlu0 %2449
        %2453 = vset.pattern.permute.xlu0 2
        %2454 = vperm.xlu0 %2453, %v2446
        %v2455 = vpop.permute.xlu0 %2454
        %v2457 = vmul.f32 %v2439, %v2450
        %v2458 = vmul.f32 %v2440, %v2450
        %v2459 = vmul.f32 %v2441, %v2450
        %v2460 = vmul.f32 %v2442, %v2455
        %v2461 = vmul.f32 %v2443, %v2455
        %v2462 = vmul.f32 %v2444, %v2455
        %v2463 = vld [vmem:[#allocation10] sm:$0xff]
        %v2464 = vld [vmem:[#allocation10 + $0x8] sm:$0xf]
        %2466 = vset.pattern.permute.xlu0 2
        %2467 = vperm.xlu0 %2466, %v2463
        %v2468 = vpop.permute.xlu0 %2467
        %2471 = vset.pattern.permute.xlu0 2
        %2472 = vperm.xlu0 %2471, %v2464
        %v2473 = vpop.permute.xlu0 %2472
        %v2475 = vadd.f32 %v2457, %v2468
        %v2476 = vadd.f32 %v2458, %v2468
        %v2477 = vadd.f32 %v2459, %v2468
        %v2478 = vadd.f32 %v2460, %v2473
        %v2479 = vadd.f32 %v2461, %v2473
        %v2480 = vadd.f32 %v2462, %v2473
        %v2481 = vmax.f32 %v2475, 0.0
        %v2482 = vmax.f32 %v2476, 0.0
        %v2483 = vmax.f32 %v2477, 0.0
        %v2484 = vmax.f32 %v2478, 0.0
        %v2485 = vmax.f32 %v2479, 0.0
        %v2486 = vmax.f32 %v2480, 0.0
        %v2487 = vmul.f32 %v2481, %v384
        %v2488 = vmul.f32 %v2482, %v388
        %v2489 = vmul.f32 %v2483, %v392
        %v2490 = vmul.f32 %v2484, %v384
        %v2491 = vmul.f32 %v2485, %v388
        %v2492 = vmul.f32 %v2486, %v392
        %v2493 = vpack.c.bf16 %v2490, %v2487
        %v2494 = vpack.c.bf16 %v2491, %v2488
        %v2495 = vpack.c.bf16 %v2492, %v2489
        %v2499 = vunpack.c.l.b16 %v2493
        %v2500 = vunpack.c.l.b16 %v2494
        %v2501 = vunpack.c.l.b16 %v2495
        %v2502 = vunpack.c.h.b16 %v2493
        %v2503 = vunpack.c.h.b16 %v2494
        %v2504 = vunpack.c.h.b16 %v2495
        %v2505 = vpack.c.b16 %v2500, %v2499
        %v2506 = vpack.c.b16 %v2501, %v2501
        %v2507 = vpack.c.b16 %v2503, %v2502
        %v2508 = vpack.c.b16 %v2504, %v2504
        %2509 = vrot.lane.b32.xlu0 %v2505, 19
        %v2510 = vpop.permute.xlu0 %2509
        %2511 = vrot.lane.b32.xlu0 %v2506, 19
        %v2512 = vpop.permute.xlu0 %2511
        %2513 = vrot.lane.b32.xlu0 %v2507, 19
        %v2514 = vpop.permute.xlu0 %2513
        %2515 = vrot.lane.b32.xlu0 %v2508, 19
        %v2516 = vpop.permute.xlu0 %2515
        %v2517 = vrot.slane %v2510, 4
        %v2518 = vrot.slane %v2514, 4
        %v2519 = vsel %vm415, %v2517, %v2510
        %v2520 = vsel %vm415, %v2517, %v2512
        %v2521 = vsel %vm415, %v2518, %v2514
        %v2522 = vsel %vm415, %v2518, %v2516
        %2527 = vst.msk [vmem:[#allocation3] sm:$0xff] %vm1459, %v2519
        %2528 = vst.msk [vmem:[#allocation3 + $0x8] sm:$0xf] %vm1461, %v2520
        %2529 = vst.msk [vmem:[#allocation3 + $0xc] sm:$0x33] %vm422, %v2521
        %2530 = vst.msk [vmem:[#allocation3 + $0x14] sm:$0x3] %vm424, %v2522
        %s2531 = scalar_lea.vmem [#allocation13], 36
        %v2532 = vld [vmem:[%s2531] sm:$0x3]
        %v2533 = vld [vmem:[#allocation3] sm:$0xff]
        %v2534 = vld [vmem:[#allocation3 + $0x8] sm:$0xf]
        %v2535 = vld [vmem:[#allocation3 + $0xc] sm:$0x33]
        %v2536 = vld [vmem:[#allocation3 + $0x14] sm:$0x3]
        %s2537 = scalar_lea.vmem [#allocation13], 38
        %v2538 = vld [vmem:[%s2537] sm:$0x3]
        %v2543 = vunpack.c.l.b16 %v2533
        %v2544 = vunpack.c.h.b16 %v2533
        %v2545 = vunpack.c.l.b16 %v2534
        %v2546 = vunpack.c.l.b16 %v2535
        %v2547 = vunpack.c.h.b16 %v2535
        %v2548 = vunpack.c.l.b16 %v2536
        %v2549 = vpack.c.b16 %v2546, %v2543
        %v2550 = vpack.c.b16 %v2547, %v2544
        %v2551 = vpack.c.b16 %v2548, %v2545
        %2552 = vrot.lane.b32.xlu0 %v2549, 127
        %v2553 = vpop.permute.xlu0 %2552
        %2554 = vrot.lane.b32.xlu0 %v2550, 127
        %v2555 = vpop.permute.xlu0 %2554
        %2556 = vrot.lane.b32.xlu0 %v2551, 127
        %v2557 = vpop.permute.xlu0 %2556
        %v2558 = vsel %vm445, %v2553, %v2555
        %v2559 = vsel %vm445, %v2555, %v2557
        %vm2560 = vcmask 97280
        %v2562 = vsel %vm2560, %v2538, 0
        %vm2564 = vcmask 1045504
        %v2566 = vsel %vm2564, %v2558, 0
        %v2569 = vsel %vm2564, %v2559, 0
        %v2572 = vsel %vm2564, %v2557, 0
        %2574 = vmatprep.subr.bf16.mxu0 %v2569
        %2575 = vmatpush1.bf16.msra.mxu0 %v2566
        %2576 = vmatprep.subr.bf16.mxu0 0
        %2577 = vmatpush1.bf16.msra.mxu0 0
        %2578 = vmatprep.subr.bf16.mxu0 0
        %2579 = vmatpush1.bf16.msra.mxu0 0
        %2580 = vmatprep.subr.bf16.mxu0 0
        %2581 = vmatpush1.bf16.msra.mxu0 0
        %2582 = vmatprep.subr.bf16.mxu0 0
        %2583 = vmatpush1.bf16.msra.mxu0 0
        %2584 = vmatprep.subr.bf16.mxu0 0
        %2585 = vmatpush1.bf16.msra.mxu0 0
        %2586 = vmatprep.subr.bf16.mxu0 0
        %2587 = vmatpush1.bf16.msra.mxu0 0
        %2588 = vmatprep.subr.bf16.mxu0 0
        %2589 = vmatpush1.bf16.msra.mxu0 0
        %2590 = vmatprep.subr.bf16.mxu0 0
        %2591 = vmatpush1.bf16.msra.mxu0 0
        %2592 = vmatprep.subr.bf16.mxu0 0
        %2593 = vmatpush1.bf16.msra.mxu0 0
        %2594 = vmatprep.subr.bf16.mxu0 0
        %2595 = vmatpush1.bf16.msra.mxu0 0
        %2596 = vmatprep.subr.bf16.mxu0 0
        %2597 = vmatpush1.bf16.msra.mxu0 0
        %2598 = vmatprep.subr.bf16.mxu0 0
        %2599 = vmatpush1.bf16.msra.mxu0 0
        %2600 = vmatprep.subr.bf16.mxu0 0
        %2601 = vmatpush1.bf16.msra.mxu0 0
        %2602 = vmatprep.subr.bf16.mxu0 0
        %2603 = vmatpush1.bf16.msra.mxu0 0
        %2604 = vmatprep.subr.bf16.mxu0 0
        %2605 = vmatpush1.bf16.msra.mxu0 0
        %2606 = vmatprep.mubr.bf16.mxu0 0
        %2607 = vmatmul.mubr.bf16.gmra.mrb[0].mxu0 %v2562
        %v2608 = vpop.f32.mrb[0].mxu0
        %v2609 = vadd.f32 0.0, %v2608
        %v2610 = vpop.f32.mrb[0].mxu0
        %v2611 = vadd.f32 0.0, %v2610
        %v2612 = vpop.f32.mrb[0].mxu0
        %v2613 = vpop.f32.mrb[0].mxu0
        %2614 = vdwg.mxu0
        %2615 = vmatprep.subr.bf16.mxu0 0
        %2616 = vmatpush1.bf16.msra.mxu0 %v2572
        %2617 = vmatprep.subr.bf16.mxu0 0
        %2618 = vmatpush1.bf16.msra.mxu0 0
        %2619 = vmatprep.subr.bf16.mxu0 0
        %2620 = vmatpush1.bf16.msra.mxu0 0
        %2621 = vmatprep.subr.bf16.mxu0 0
        %2622 = vmatpush1.bf16.msra.mxu0 0
        %2623 = vmatprep.subr.bf16.mxu0 0
        %2624 = vmatpush1.bf16.msra.mxu0 0
        %2625 = vmatprep.subr.bf16.mxu0 0
        %2626 = vmatpush1.bf16.msra.mxu0 0
        %2627 = vmatprep.subr.bf16.mxu0 0
        %2628 = vmatpush1.bf16.msra.mxu0 0
        %2629 = vmatprep.subr.bf16.mxu0 0
        %2630 = vmatpush1.bf16.msra.mxu0 0
        %2631 = vmatprep.subr.bf16.mxu0 0
        %2632 = vmatpush1.bf16.msra.mxu0 0
        %2633 = vmatprep.subr.bf16.mxu0 0
        %2634 = vmatpush1.bf16.msra.mxu0 0
        %2635 = vmatprep.subr.bf16.mxu0 0
        %2636 = vmatpush1.bf16.msra.mxu0 0
        %2637 = vmatprep.subr.bf16.mxu0 0
        %2638 = vmatpush1.bf16.msra.mxu0 0
        %2639 = vmatprep.subr.bf16.mxu0 0
        %2640 = vmatpush1.bf16.msra.mxu0 0
        %2641 = vmatprep.subr.bf16.mxu0 0
        %2642 = vmatpush1.bf16.msra.mxu0 0
        %2643 = vmatprep.subr.bf16.mxu0 0
        %2644 = vmatpush1.bf16.msra.mxu0 0
        %2645 = vmatprep.subr.bf16.mxu0 0
        %2646 = vmatpush1.bf16.msra.mxu0 0
        %2647 = vmatprep.mubr.bf16.mxu0 0
        %2648 = vmatmul.mubr.bf16.gmra.mrb[0].mxu0 %v2562
        %v2649 = vpop.f32.mrb[0].mxu0
        %v2650 = vadd.f32 0.0, %v2649
        %v2651 = vpop.f32.mrb[0].mxu0
        %v2652 = vpop.f32.mrb[0].mxu0
        %v2653 = vpop.f32.mrb[0].mxu0
        %2654 = vdwg.mxu0
        %v2656 = vsel %vm2560, %v2532, 0
        %v2659 = vsel %vm2564, %v2549, 0
        %v2662 = vsel %vm2564, %v2550, 0
        %v2665 = vsel %vm2564, %v2551, 0
        %2667 = vmatprep.subr.bf16.mxu0 %v2662
        %2668 = vmatpush1.bf16.msra.mxu0 %v2659
        %2669 = vmatprep.subr.bf16.mxu0 0
        %2670 = vmatpush1.bf16.msra.mxu0 0
        %2671 = vmatprep.subr.bf16.mxu0 0
        %2672 = vmatpush1.bf16.msra.mxu0 0
        %2673 = vmatprep.subr.bf16.mxu0 0
        %2674 = vmatpush1.bf16.msra.mxu0 0
        %2675 = vmatprep.subr.bf16.mxu0 0
        %2676 = vmatpush1.bf16.msra.mxu0 0
        %2677 = vmatprep.subr.bf16.mxu0 0
        %2678 = vmatpush1.bf16.msra.mxu0 0
        %2679 = vmatprep.subr.bf16.mxu0 0
        %2680 = vmatpush1.bf16.msra.mxu0 0
        %2681 = vmatprep.subr.bf16.mxu0 0
        %2682 = vmatpush1.bf16.msra.mxu0 0
        %2683 = vmatprep.subr.bf16.mxu0 0
        %2684 = vmatpush1.bf16.msra.mxu0 0
        %2685 = vmatprep.subr.bf16.mxu0 0
        %2686 = vmatpush1.bf16.msra.mxu0 0
        %2687 = vmatprep.subr.bf16.mxu0 0
        %2688 = vmatpush1.bf16.msra.mxu0 0
        %2689 = vmatprep.subr.bf16.mxu0 0
        %2690 = vmatpush1.bf16.msra.mxu0 0
        %2691 = vmatprep.subr.bf16.mxu0 0
        %2692 = vmatpush1.bf16.msra.mxu0 0
        %2693 = vmatprep.subr.bf16.mxu0 0
        %2694 = vmatpush1.bf16.msra.mxu0 0
        %2695 = vmatprep.subr.bf16.mxu0 0
        %2696 = vmatpush1.bf16.msra.mxu0 0
        %2697 = vmatprep.subr.bf16.mxu0 0
        %2698 = vmatpush1.bf16.msra.mxu0 0
        %2699 = vmatprep.mubr.bf16.mxu0 0
        %2700 = vmatmul.mubr.bf16.gmra.mrb[0].mxu0 %v2656
        %v2701 = vpop.f32.mrb[0].mxu0
        %v2702 = vadd.f32 %v2609, %v2701
        %v2703 = vpop.f32.mrb[0].mxu0
        %v2704 = vadd.f32 %v2611, %v2703
        %v2705 = vpop.f32.mrb[0].mxu0
        %v2706 = vpop.f32.mrb[0].mxu0
        %2707 = vdwg.mxu0
        %2708 = vmatprep.subr.bf16.mxu0 0
        %2709 = vmatpush1.bf16.msra.mxu0 %v2665
        %2710 = vmatprep.subr.bf16.mxu0 0
        %2711 = vmatpush1.bf16.msra.mxu0 0
        %2712 = vmatprep.subr.bf16.mxu0 0
        %2713 = vmatpush1.bf16.msra.mxu0 0
        %2714 = vmatprep.subr.bf16.mxu0 0
        %2715 = vmatpush1.bf16.msra.mxu0 0
        %2716 = vmatprep.subr.bf16.mxu0 0
        %2717 = vmatpush1.bf16.msra.mxu0 0
        %2718 = vmatprep.subr.bf16.mxu0 0
        %2719 = vmatpush1.bf16.msra.mxu0 0
        %2720 = vmatprep.subr.bf16.mxu0 0
        %2721 = vmatpush1.bf16.msra.mxu0 0
        %2722 = vmatprep.subr.bf16.mxu0 0
        %2723 = vmatpush1.bf16.msra.mxu0 0
        %2724 = vmatprep.subr.bf16.mxu0 0
        %2725 = vmatpush1.bf16.msra.mxu0 0
        %2726 = vmatprep.subr.bf16.mxu0 0
        %2727 = vmatpush1.bf16.msra.mxu0 0
        %2728 = vmatprep.subr.bf16.mxu0 0
        %2729 = vmatpush1.bf16.msra.mxu0 0
        %2730 = vmatprep.subr.bf16.mxu0 0
        %2731 = vmatpush1.bf16.msra.mxu0 0
        %2732 = vmatprep.subr.bf16.mxu0 0
        %2733 = vmatpush1.bf16.msra.mxu0 0
        %2734 = vmatprep.subr.bf16.mxu0 0
        %2735 = vmatpush1.bf16.msra.mxu0 0
        %2736 = vmatprep.subr.bf16.mxu0 0
        %2737 = vmatpush1.bf16.msra.mxu0 0
        %2738 = vmatprep.subr.bf16.mxu0 0
        %2739 = vmatpush1.bf16.msra.mxu0 0
        %2740 = vmatprep.mubr.bf16.mxu0 0
        %2741 = vmatmul.mubr.bf16.gmra.mrb[0].mxu0 %v2656
        %v2742 = vpop.f32.mrb[0].mxu0
        %v2743 = vadd.f32 %v2650, %v2742
        %v2744 = vpop.f32.mrb[0].mxu0
        %v2745 = vpop.f32.mrb[0].mxu0
        %v2746 = vpop.f32.mrb[0].mxu0
        %2747 = vdwg.mxu0
        %s2748 = scalar_lea.vmem [#allocation13], 40
        %v2749 = vld [vmem:[%s2748] sm:$0x3]
        %2750 = vrot.lane.b32.xlu0 %v2549, 126
        %v2751 = vpop.permute.xlu0 %2750
        %2752 = vrot.lane.b32.xlu0 %v2550, 126
        %v2753 = vpop.permute.xlu0 %2752
        %2754 = vrot.lane.b32.xlu0 %v2551, 126
        %v2755 = vpop.permute.xlu0 %2754
        %v2756 = vsel %vm644, %v2751, %v2753
        %v2757 = vsel %vm644, %v2753, %v2755
        %v2759 = vsel %vm2560, %v2749, 0
        %v2762 = vsel %vm2564, %v2756, 0
        %v2765 = vsel %vm2564, %v2757, 0
        %v2768 = vsel %vm2564, %v2755, 0
        %2770 = vmatprep.subr.bf16.mxu0 %v2765
        %2771 = vmatpush1.bf16.msra.mxu0 %v2762
        %2772 = vmatprep.subr.bf16.mxu0 0
        %2773 = vmatpush1.bf16.msra.mxu0 0
        %2774 = vmatprep.subr.bf16.mxu0 0
        %2775 = vmatpush1.bf16.msra.mxu0 0
        %2776 = vmatprep.subr.bf16.mxu0 0
        %2777 = vmatpush1.bf16.msra.mxu0 0
        %2778 = vmatprep.subr.bf16.mxu0 0
        %2779 = vmatpush1.bf16.msra.mxu0 0
        %2780 = vmatprep.subr.bf16.mxu0 0
        %2781 = vmatpush1.bf16.msra.mxu0 0
        %2782 = vmatprep.subr.bf16.mxu0 0
        %2783 = vmatpush1.bf16.msra.mxu0 0
        %2784 = vmatprep.subr.bf16.mxu0 0
        %2785 = vmatpush1.bf16.msra.mxu0 0
        %2786 = vmatprep.subr.bf16.mxu0 0
        %2787 = vmatpush1.bf16.msra.mxu0 0
        %2788 = vmatprep.subr.bf16.mxu0 0
        %2789 = vmatpush1.bf16.msra.mxu0 0
        %2790 = vmatprep.subr.bf16.mxu0 0
        %2791 = vmatpush1.bf16.msra.mxu0 0
        %2792 = vmatprep.subr.bf16.mxu0 0
        %2793 = vmatpush1.bf16.msra.mxu0 0
        %2794 = vmatprep.subr.bf16.mxu0 0
        %2795 = vmatpush1.bf16.msra.mxu0 0
        %2796 = vmatprep.subr.bf16.mxu0 0
        %2797 = vmatpush1.bf16.msra.mxu0 0
        %2798 = vmatprep.subr.bf16.mxu0 0
        %2799 = vmatpush1.bf16.msra.mxu0 0
        %2800 = vmatprep.subr.bf16.mxu0 0
        %2801 = vmatpush1.bf16.msra.mxu0 0
        %2802 = vmatprep.mubr.bf16.mxu0 0
        %2803 = vmatmul.mubr.bf16.gmra.mrb[0].mxu0 %v2759
        %v2804 = vpop.f32.mrb[0].mxu0
        %v2805 = vadd.f32 0.0, %v2804
        %v2806 = vpop.f32.mrb[0].mxu0
        %v2807 = vadd.f32 0.0, %v2806
        %v2808 = vpop.f32.mrb[0].mxu0
        %v2809 = vpop.f32.mrb[0].mxu0
        %2810 = vdwg.mxu0
        %2811 = vmatprep.subr.bf16.mxu0 0
        %2812 = vmatpush1.bf16.msra.mxu0 %v2768
        %2813 = vmatprep.subr.bf16.mxu0 0
        %2814 = vmatpush1.bf16.msra.mxu0 0
        %2815 = vmatprep.subr.bf16.mxu0 0
        %2816 = vmatpush1.bf16.msra.mxu0 0
        %2817 = vmatprep.subr.bf16.mxu0 0
        %2818 = vmatpush1.bf16.msra.mxu0 0
        %2819 = vmatprep.subr.bf16.mxu0 0
        %2820 = vmatpush1.bf16.msra.mxu0 0
        %2821 = vmatprep.subr.bf16.mxu0 0
        %2822 = vmatpush1.bf16.msra.mxu0 0
        %2823 = vmatprep.subr.bf16.mxu0 0
        %2824 = vmatpush1.bf16.msra.mxu0 0
        %2825 = vmatprep.subr.bf16.mxu0 0
        %2826 = vmatpush1.bf16.msra.mxu0 0
        %2827 = vmatprep.subr.bf16.mxu0 0
        %2828 = vmatpush1.bf16.msra.mxu0 0
        %2829 = vmatprep.subr.bf16.mxu0 0
        %2830 = vmatpush1.bf16.msra.mxu0 0
        %2831 = vmatprep.subr.bf16.mxu0 0
        %2832 = vmatpush1.bf16.msra.mxu0 0
        %2833 = vmatprep.subr.bf16.mxu0 0
        %2834 = vmatpush1.bf16.msra.mxu0 0
        %2835 = vmatprep.subr.bf16.mxu0 0
        %2836 = vmatpush1.bf16.msra.mxu0 0
        %2837 = vmatprep.subr.bf16.mxu0 0
        %2838 = vmatpush1.bf16.msra.mxu0 0
        %2839 = vmatprep.subr.bf16.mxu0 0
        %2840 = vmatpush1.bf16.msra.mxu0 0
        %2841 = vmatprep.subr.bf16.mxu0 0
        %2842 = vmatpush1.bf16.msra.mxu0 0
        %2843 = vmatprep.mubr.bf16.mxu0 0
        %2844 = vmatmul.mubr.bf16.gmra.mrb[0].mxu0 %v2759
        %v2845 = vpop.f32.mrb[0].mxu0
        %v2846 = vadd.f32 0.0, %v2845
        %v2847 = vpop.f32.mrb[0].mxu0
        %v2848 = vpop.f32.mrb[0].mxu0
        %v2849 = vpop.f32.mrb[0].mxu0
        %2850 = vdwg.mxu0
        %v2851 = vadd.f32 %v2702, %v2805
        %v2852 = vadd.f32 %v2704, %v2807
        %v2853 = vadd.f32 %v2743, %v2846
        %s2854 = scalar_lea.vmem [#allocation13], 42
        %v2855 = vld [vmem:[%s2854] sm:$0x3]
        %2856 = vrot.lane.b32.xlu0 %v2549, 110
        %v2857 = vpop.permute.xlu0 %2856
        %2858 = vrot.lane.b32.xlu0 %v2550, 110
        %v2859 = vpop.permute.xlu0 %2858
        %2860 = vrot.lane.b32.xlu0 %v2551, 110
        %v2861 = vpop.permute.xlu0 %2860
        %v2862 = vsel %vm751, %v2857, %v2859
        %v2863 = vsel %vm751, %v2859, %v2861
        %v2865 = vsel %vm2560, %v2855, 0
        %v2868 = vsel %vm2564, %v2862, 0
        %v2871 = vsel %vm2564, %v2863, 0
        %v2874 = vsel %vm2564, %v2861, 0
        %2876 = vmatprep.subr.bf16.mxu0 %v2871
        %2877 = vmatpush1.bf16.msra.mxu0 %v2868
        %2878 = vmatprep.subr.bf16.mxu0 0
        %2879 = vmatpush1.bf16.msra.mxu0 0
        %2880 = vmatprep.subr.bf16.mxu0 0
        %2881 = vmatpush1.bf16.msra.mxu0 0
        %2882 = vmatprep.subr.bf16.mxu0 0
        %2883 = vmatpush1.bf16.msra.mxu0 0
        %2884 = vmatprep.subr.bf16.mxu0 0
        %2885 = vmatpush1.bf16.msra.mxu0 0
        %2886 = vmatprep.subr.bf16.mxu0 0
        %2887 = vmatpush1.bf16.msra.mxu0 0
        %2888 = vmatprep.subr.bf16.mxu0 0
        %2889 = vmatpush1.bf16.msra.mxu0 0
        %2890 = vmatprep.subr.bf16.mxu0 0
        %2891 = vmatpush1.bf16.msra.mxu0 0
        %2892 = vmatprep.subr.bf16.mxu0 0
        %2893 = vmatpush1.bf16.msra.mxu0 0
        %2894 = vmatprep.subr.bf16.mxu0 0
        %2895 = vmatpush1.bf16.msra.mxu0 0
        %2896 = vmatprep.subr.bf16.mxu0 0
        %2897 = vmatpush1.bf16.msra.mxu0 0
        %2898 = vmatprep.subr.bf16.mxu0 0
        %2899 = vmatpush1.bf16.msra.mxu0 0
        %2900 = vmatprep.subr.bf16.mxu0 0
        %2901 = vmatpush1.bf16.msra.mxu0 0
        %2902 = vmatprep.subr.bf16.mxu0 0
        %2903 = vmatpush1.bf16.msra.mxu0 0
        %2904 = vmatprep.subr.bf16.mxu0 0
        %2905 = vmatpush1.bf16.msra.mxu0 0
        %2906 = vmatprep.subr.bf16.mxu0 0
        %2907 = vmatpush1.bf16.msra.mxu0 0
        %2908 = vmatprep.mubr.bf16.mxu0 0
        %2909 = vmatmul.mubr.bf16.gmra.mrb[0].mxu0 %v2865
        %v2910 = vpop.f32.mrb[0].mxu0
        %v2911 = vadd.f32 0.0, %v2910
        %v2912 = vpop.f32.mrb[0].mxu0
        %v2913 = vadd.f32 0.0, %v2912
        %v2914 = vpop.f32.mrb[0].mxu0
        %v2915 = vpop.f32.mrb[0].mxu0
        %2916 = vdwg.mxu0
        %2917 = vmatprep.subr.bf16.mxu0 0
        %2918 = vmatpush1.bf16.msra.mxu0 %v2874
        %2919 = vmatprep.subr.bf16.mxu0 0
        %2920 = vmatpush1.bf16.msra.mxu0 0
        %2921 = vmatprep.subr.bf16.mxu0 0
        %2922 = vmatpush1.bf16.msra.mxu0 0
        %2923 = vmatprep.subr.bf16.mxu0 0
        %2924 = vmatpush1.bf16.msra.mxu0 0
        %2925 = vmatprep.subr.bf16.mxu0 0
        %2926 = vmatpush1.bf16.msra.mxu0 0
        %2927 = vmatprep.subr.bf16.mxu0 0
        %2928 = vmatpush1.bf16.msra.mxu0 0
        %2929 = vmatprep.subr.bf16.mxu0 0
        %2930 = vmatpush1.bf16.msra.mxu0 0
        %2931 = vmatprep.subr.bf16.mxu0 0
        %2932 = vmatpush1.bf16.msra.mxu0 0
        %2933 = vmatprep.subr.bf16.mxu0 0
        %2934 = vmatpush1.bf16.msra.mxu0 0
        %2935 = vmatprep.subr.bf16.mxu0 0
        %2936 = vmatpush1.bf16.msra.mxu0 0
        %2937 = vmatprep.subr.bf16.mxu0 0
        %2938 = vmatpush1.bf16.msra.mxu0 0
        %2939 = vmatprep.subr.bf16.mxu0 0
        %2940 = vmatpush1.bf16.msra.mxu0 0
        %2941 = vmatprep.subr.bf16.mxu0 0
        %2942 = vmatpush1.bf16.msra.mxu0 0
        %2943 = vmatprep.subr.bf16.mxu0 0
        %2944 = vmatpush1.bf16.msra.mxu0 0
        %2945 = vmatprep.subr.bf16.mxu0 0
        %2946 = vmatpush1.bf16.msra.mxu0 0
        %2947 = vmatprep.subr.bf16.mxu0 0
        %2948 = vmatpush1.bf16.msra.mxu0 0
        %2949 = vmatprep.mubr.bf16.mxu0 0
        %2950 = vmatmul.mubr.bf16.gmra.mrb[0].mxu0 %v2865
        %v2951 = vpop.f32.mrb[0].mxu0
        %v2952 = vadd.f32 0.0, %v2951
        %v2953 = vpop.f32.mrb[0].mxu0
        %v2954 = vpop.f32.mrb[0].mxu0
        %v2955 = vpop.f32.mrb[0].mxu0
        %2956 = vdwg.mxu0
        %v2957 = vadd.f32 %v2851, %v2911
        %v2958 = vadd.f32 %v2852, %v2913
        %v2959 = vadd.f32 %v2853, %v2952
        %s2960 = scalar_lea.vmem [#allocation13], 44
        %v2961 = vld [vmem:[%s2960] sm:$0x3]
        %2962 = vrot.lane.b32.xlu0 %v2549, 109
        %v2963 = vpop.permute.xlu0 %2962
        %2964 = vrot.lane.b32.xlu0 %v2550, 109
        %v2965 = vpop.permute.xlu0 %2964
        %2966 = vrot.lane.b32.xlu0 %v2551, 109
        %v2967 = vpop.permute.xlu0 %2966
        %v2968 = vsel %vm858, %v2963, %v2965
        %v2969 = vsel %vm858, %v2965, %v2967
        %v2971 = vsel %vm2560, %v2961, 0
        %v2974 = vsel %vm2564, %v2968, 0
        %v2977 = vsel %vm2564, %v2969, 0
        %v2980 = vsel %vm2564, %v2967, 0
        %2982 = vmatprep.subr.bf16.mxu0 %v2977
        %2983 = vmatpush1.bf16.msra.mxu0 %v2974
        %2984 = vmatprep.subr.bf16.mxu0 0
        %2985 = vmatpush1.bf16.msra.mxu0 0
        %2986 = vmatprep.subr.bf16.mxu0 0
        %2987 = vmatpush1.bf16.msra.mxu0 0
        %2988 = vmatprep.subr.bf16.mxu0 0
        %2989 = vmatpush1.bf16.msra.mxu0 0
        %2990 = vmatprep.subr.bf16.mxu0 0
        %2991 = vmatpush1.bf16.msra.mxu0 0
        %2992 = vmatprep.subr.bf16.mxu0 0
        %2993 = vmatpush1.bf16.msra.mxu0 0
        %2994 = vmatprep.subr.bf16.mxu0 0
        %2995 = vmatpush1.bf16.msra.mxu0 0
        %2996 = vmatprep.subr.bf16.mxu0 0
        %2997 = vmatpush1.bf16.msra.mxu0 0
        %2998 = vmatprep.subr.bf16.mxu0 0
        %2999 = vmatpush1.bf16.msra.mxu0 0
        %3000 = vmatprep.subr.bf16.mxu0 0
        %3001 = vmatpush1.bf16.msra.mxu0 0
        %3002 = vmatprep.subr.bf16.mxu0 0
        %3003 = vmatpush1.bf16.msra.mxu0 0
        %3004 = vmatprep.subr.bf16.mxu0 0
        %3005 = vmatpush1.bf16.msra.mxu0 0
        %3006 = vmatprep.subr.bf16.mxu0 0
        %3007 = vmatpush1.bf16.msra.mxu0 0
        %3008 = vmatprep.subr.bf16.mxu0 0
        %3009 = vmatpush1.bf16.msra.mxu0 0
        %3010 = vmatprep.subr.bf16.mxu0 0
        %3011 = vmatpush1.bf16.msra.mxu0 0
        %3012 = vmatprep.subr.bf16.mxu0 0
        %3013 = vmatpush1.bf16.msra.mxu0 0
        %3014 = vmatprep.mubr.bf16.mxu0 0
        %3015 = vmatmul.mubr.bf16.gmra.mrb[0].mxu0 %v2971
        %v3016 = vpop.f32.mrb[0].mxu0
        %v3017 = vadd.f32 0.0, %v3016
        %v3018 = vpop.f32.mrb[0].mxu0
        %v3019 = vadd.f32 0.0, %v3018
        %v3020 = vpop.f32.mrb[0].mxu0
        %v3021 = vpop.f32.mrb[0].mxu0
        %3022 = vdwg.mxu0
        %3023 = vmatprep.subr.bf16.mxu0 0
        %3024 = vmatpush1.bf16.msra.mxu0 %v2980
        %3025 = vmatprep.subr.bf16.mxu0 0
        %3026 = vmatpush1.bf16.msra.mxu0 0
        %3027 = vmatprep.subr.bf16.mxu0 0
        %3028 = vmatpush1.bf16.msra.mxu0 0
        %3029 = vmatprep.subr.bf16.mxu0 0
        %3030 = vmatpush1.bf16.msra.mxu0 0
        %3031 = vmatprep.subr.bf16.mxu0 0
        %3032 = vmatpush1.bf16.msra.mxu0 0
        %3033 = vmatprep.subr.bf16.mxu0 0
        %3034 = vmatpush1.bf16.msra.mxu0 0
        %3035 = vmatprep.subr.bf16.mxu0 0
        %3036 = vmatpush1.bf16.msra.mxu0 0
        %3037 = vmatprep.subr.bf16.mxu0 0
        %3038 = vmatpush1.bf16.msra.mxu0 0
        %3039 = vmatprep.subr.bf16.mxu0 0
        %3040 = vmatpush1.bf16.msra.mxu0 0
        %3041 = vmatprep.subr.bf16.mxu0 0
        %3042 = vmatpush1.bf16.msra.mxu0 0
        %3043 = vmatprep.subr.bf16.mxu0 0
        %3044 = vmatpush1.bf16.msra.mxu0 0
        %3045 = vmatprep.subr.bf16.mxu0 0
        %3046 = vmatpush1.bf16.msra.mxu0 0
        %3047 = vmatprep.subr.bf16.mxu0 0
        %3048 = vmatpush1.bf16.msra.mxu0 0
        %3049 = vmatprep.subr.bf16.mxu0 0
        %3050 = vmatpush1.bf16.msra.mxu0 0
        %3051 = vmatprep.subr.bf16.mxu0 0
        %3052 = vmatpush1.bf16.msra.mxu0 0
        %3053 = vmatprep.subr.bf16.mxu0 0
        %3054 = vmatpush1.bf16.msra.mxu0 0
        %3055 = vmatprep.mubr.bf16.mxu0 0
        %3056 = vmatmul.mubr.bf16.gmra.mrb[0].mxu0 %v2971
        %v3057 = vpop.f32.mrb[0].mxu0
        %v3058 = vadd.f32 0.0, %v3057
        %v3059 = vpop.f32.mrb[0].mxu0
        %v3060 = vpop.f32.mrb[0].mxu0
        %v3061 = vpop.f32.mrb[0].mxu0
        %3062 = vdwg.mxu0
        %v3063 = vadd.f32 %v2957, %v3017
        %v3064 = vadd.f32 %v2958, %v3019
        %v3065 = vadd.f32 %v2959, %v3058
        %s3066 = scalar_lea.vmem [#allocation13], 46
        %v3067 = vld [vmem:[%s3066] sm:$0x3]
        %3068 = vrot.lane.b32.xlu0 %v2549, 108
        %v3069 = vpop.permute.xlu0 %3068
        %3070 = vrot.lane.b32.xlu0 %v2550, 108
        %v3071 = vpop.permute.xlu0 %3070
        %3072 = vrot.lane.b32.xlu0 %v2551, 108
        %v3073 = vpop.permute.xlu0 %3072
        %v3074 = vsel %vm965, %v3069, %v3071
        %v3075 = vsel %vm965, %v3071, %v3073
        %v3077 = vsel %vm2560, %v3067, 0
        %v3080 = vsel %vm2564, %v3074, 0
        %v3083 = vsel %vm2564, %v3075, 0
        %v3086 = vsel %vm2564, %v3073, 0
        %3088 = vmatprep.subr.bf16.mxu0 %v3083
        %3089 = vmatpush1.bf16.msra.mxu0 %v3080
        %3090 = vmatprep.subr.bf16.mxu0 0
        %3091 = vmatpush1.bf16.msra.mxu0 0
        %3092 = vmatprep.subr.bf16.mxu0 0
        %3093 = vmatpush1.bf16.msra.mxu0 0
        %3094 = vmatprep.subr.bf16.mxu0 0
        %3095 = vmatpush1.bf16.msra.mxu0 0
        %3096 = vmatprep.subr.bf16.mxu0 0
        %3097 = vmatpush1.bf16.msra.mxu0 0
        %3098 = vmatprep.subr.bf16.mxu0 0
        %3099 = vmatpush1.bf16.msra.mxu0 0
        %3100 = vmatprep.subr.bf16.mxu0 0
        %3101 = vmatpush1.bf16.msra.mxu0 0
        %3102 = vmatprep.subr.bf16.mxu0 0
        %3103 = vmatpush1.bf16.msra.mxu0 0
        %3104 = vmatprep.subr.bf16.mxu0 0
        %3105 = vmatpush1.bf16.msra.mxu0 0
        %3106 = vmatprep.subr.bf16.mxu0 0
        %3107 = vmatpush1.bf16.msra.mxu0 0
        %3108 = vmatprep.subr.bf16.mxu0 0
        %3109 = vmatpush1.bf16.msra.mxu0 0
        %3110 = vmatprep.subr.bf16.mxu0 0
        %3111 = vmatpush1.bf16.msra.mxu0 0
        %3112 = vmatprep.subr.bf16.mxu0 0
        %3113 = vmatpush1.bf16.msra.mxu0 0
        %3114 = vmatprep.subr.bf16.mxu0 0
        %3115 = vmatpush1.bf16.msra.mxu0 0
        %3116 = vmatprep.subr.bf16.mxu0 0
        %3117 = vmatpush1.bf16.msra.mxu0 0
        %3118 = vmatprep.subr.bf16.mxu0 0
        %3119 = vmatpush1.bf16.msra.mxu0 0
        %3120 = vmatprep.mubr.bf16.mxu0 0
        %3121 = vmatmul.mubr.bf16.gmra.mrb[0].mxu0 %v3077
        %v3122 = vpop.f32.mrb[0].mxu0
        %v3123 = vadd.f32 0.0, %v3122
        %v3124 = vpop.f32.mrb[0].mxu0
        %v3125 = vadd.f32 0.0, %v3124
        %v3126 = vpop.f32.mrb[0].mxu0
        %v3127 = vpop.f32.mrb[0].mxu0
        %3128 = vdwg.mxu0
        %3129 = vmatprep.subr.bf16.mxu0 0
        %3130 = vmatpush1.bf16.msra.mxu0 %v3086
        %3131 = vmatprep.subr.bf16.mxu0 0
        %3132 = vmatpush1.bf16.msra.mxu0 0
        %3133 = vmatprep.subr.bf16.mxu0 0
        %3134 = vmatpush1.bf16.msra.mxu0 0
        %3135 = vmatprep.subr.bf16.mxu0 0
        %3136 = vmatpush1.bf16.msra.mxu0 0
        %3137 = vmatprep.subr.bf16.mxu0 0
        %3138 = vmatpush1.bf16.msra.mxu0 0
        %3139 = vmatprep.subr.bf16.mxu0 0
        %3140 = vmatpush1.bf16.msra.mxu0 0
        %3141 = vmatprep.subr.bf16.mxu0 0
        %3142 = vmatpush1.bf16.msra.mxu0 0
        %3143 = vmatprep.subr.bf16.mxu0 0
        %3144 = vmatpush1.bf16.msra.mxu0 0
        %3145 = vmatprep.subr.bf16.mxu0 0
        %3146 = vmatpush1.bf16.msra.mxu0 0
        %3147 = vmatprep.subr.bf16.mxu0 0
        %3148 = vmatpush1.bf16.msra.mxu0 0
        %3149 = vmatprep.subr.bf16.mxu0 0
        %3150 = vmatpush1.bf16.msra.mxu0 0
        %3151 = vmatprep.subr.bf16.mxu0 0
        %3152 = vmatpush1.bf16.msra.mxu0 0
        %3153 = vmatprep.subr.bf16.mxu0 0
        %3154 = vmatpush1.bf16.msra.mxu0 0
        %3155 = vmatprep.subr.bf16.mxu0 0
        %3156 = vmatpush1.bf16.msra.mxu0 0
        %3157 = vmatprep.subr.bf16.mxu0 0
        %3158 = vmatpush1.bf16.msra.mxu0 0
        %3159 = vmatprep.subr.bf16.mxu0 0
        %3160 = vmatpush1.bf16.msra.mxu0 0
        %3161 = vmatprep.mubr.bf16.mxu0 0
        %3162 = vmatmul.mubr.bf16.gmra.mrb[0].mxu0 %v3077
        %v3163 = vpop.f32.mrb[0].mxu0
        %v3164 = vadd.f32 0.0, %v3163
        %v3165 = vpop.f32.mrb[0].mxu0
        %v3166 = vpop.f32.mrb[0].mxu0
        %v3167 = vpop.f32.mrb[0].mxu0
        %3168 = vdwg.mxu0
        %v3169 = vadd.f32 %v3063, %v3123
        %v3170 = vadd.f32 %v3064, %v3125
        %v3171 = vadd.f32 %v3065, %v3164
        %s3172 = scalar_lea.vmem [#allocation13], 48
        %v3173 = vld [vmem:[%s3172] sm:$0x3]
        %3174 = vrot.lane.b32.xlu0 %v2549, 92
        %v3175 = vpop.permute.xlu0 %3174
        %3176 = vrot.lane.b32.xlu0 %v2550, 92
        %v3177 = vpop.permute.xlu0 %3176
        %3178 = vrot.lane.b32.xlu0 %v2551, 92
        %v3179 = vpop.permute.xlu0 %3178
        %v3180 = vsel %vm1072, %v3175, %v3177
        %v3181 = vsel %vm1072, %v3177, %v3179
        %v3183 = vsel %vm2560, %v3173, 0
        %v3186 = vsel %vm2564, %v3180, 0
        %v3189 = vsel %vm2564, %v3181, 0
        %v3192 = vsel %vm2564, %v3179, 0
        %3194 = vmatprep.subr.bf16.mxu0 %v3189
        %3195 = vmatpush1.bf16.msra.mxu0 %v3186
        %3196 = vmatprep.subr.bf16.mxu0 0
        %3197 = vmatpush1.bf16.msra.mxu0 0
        %3198 = vmatprep.subr.bf16.mxu0 0
        %3199 = vmatpush1.bf16.msra.mxu0 0
        %3200 = vmatprep.subr.bf16.mxu0 0
        %3201 = vmatpush1.bf16.msra.mxu0 0
        %3202 = vmatprep.subr.bf16.mxu0 0
        %3203 = vmatpush1.bf16.msra.mxu0 0
        %3204 = vmatprep.subr.bf16.mxu0 0
        %3205 = vmatpush1.bf16.msra.mxu0 0
        %3206 = vmatprep.subr.bf16.mxu0 0
        %3207 = vmatpush1.bf16.msra.mxu0 0
        %3208 = vmatprep.subr.bf16.mxu0 0
        %3209 = vmatpush1.bf16.msra.mxu0 0
        %3210 = vmatprep.subr.bf16.mxu0 0
        %3211 = vmatpush1.bf16.msra.mxu0 0
        %3212 = vmatprep.subr.bf16.mxu0 0
        %3213 = vmatpush1.bf16.msra.mxu0 0
        %3214 = vmatprep.subr.bf16.mxu0 0
        %3215 = vmatpush1.bf16.msra.mxu0 0
        %3216 = vmatprep.subr.bf16.mxu0 0
        %3217 = vmatpush1.bf16.msra.mxu0 0
        %3218 = vmatprep.subr.bf16.mxu0 0
        %3219 = vmatpush1.bf16.msra.mxu0 0
        %3220 = vmatprep.subr.bf16.mxu0 0
        %3221 = vmatpush1.bf16.msra.mxu0 0
        %3222 = vmatprep.subr.bf16.mxu0 0
        %3223 = vmatpush1.bf16.msra.mxu0 0
        %3224 = vmatprep.subr.bf16.mxu0 0
        %3225 = vmatpush1.bf16.msra.mxu0 0
        %3226 = vmatprep.mubr.bf16.mxu0 0
        %3227 = vmatmul.mubr.bf16.gmra.mrb[0].mxu0 %v3183
        %v3228 = vpop.f32.mrb[0].mxu0
        %v3229 = vadd.f32 0.0, %v3228
        %v3230 = vpop.f32.mrb[0].mxu0
        %v3231 = vadd.f32 0.0, %v3230
        %v3232 = vpop.f32.mrb[0].mxu0
        %v3233 = vpop.f32.mrb[0].mxu0
        %3234 = vdwg.mxu0
        %3235 = vmatprep.subr.bf16.mxu0 0
        %3236 = vmatpush1.bf16.msra.mxu0 %v3192
        %3237 = vmatprep.subr.bf16.mxu0 0
        %3238 = vmatpush1.bf16.msra.mxu0 0
        %3239 = vmatprep.subr.bf16.mxu0 0
        %3240 = vmatpush1.bf16.msra.mxu0 0
        %3241 = vmatprep.subr.bf16.mxu0 0
        %3242 = vmatpush1.bf16.msra.mxu0 0
        %3243 = vmatprep.subr.bf16.mxu0 0
        %3244 = vmatpush1.bf16.msra.mxu0 0
        %3245 = vmatprep.subr.bf16.mxu0 0
        %3246 = vmatpush1.bf16.msra.mxu0 0
        %3247 = vmatprep.subr.bf16.mxu0 0
        %3248 = vmatpush1.bf16.msra.mxu0 0
        %3249 = vmatprep.subr.bf16.mxu0 0
        %3250 = vmatpush1.bf16.msra.mxu0 0
        %3251 = vmatprep.subr.bf16.mxu0 0
        %3252 = vmatpush1.bf16.msra.mxu0 0
        %3253 = vmatprep.subr.bf16.mxu0 0
        %3254 = vmatpush1.bf16.msra.mxu0 0
        %3255 = vmatprep.subr.bf16.mxu0 0
        %3256 = vmatpush1.bf16.msra.mxu0 0
        %3257 = vmatprep.subr.bf16.mxu0 0
        %3258 = vmatpush1.bf16.msra.mxu0 0
        %3259 = vmatprep.subr.bf16.mxu0 0
        %3260 = vmatpush1.bf16.msra.mxu0 0
        %3261 = vmatprep.subr.bf16.mxu0 0
        %3262 = vmatpush1.bf16.msra.mxu0 0
        %3263 = vmatprep.subr.bf16.mxu0 0
        %3264 = vmatpush1.bf16.msra.mxu0 0
        %3265 = vmatprep.subr.bf16.mxu0 0
        %3266 = vmatpush1.bf16.msra.mxu0 0
        %3267 = vmatprep.mubr.bf16.mxu0 0
        %3268 = vmatmul.mubr.bf16.gmra.mrb[0].mxu0 %v3183
        %v3269 = vpop.f32.mrb[0].mxu0
        %v3270 = vadd.f32 0.0, %v3269
        %v3271 = vpop.f32.mrb[0].mxu0
        %v3272 = vpop.f32.mrb[0].mxu0
        %v3273 = vpop.f32.mrb[0].mxu0
        %3274 = vdwg.mxu0
        %v3275 = vadd.f32 %v3169, %v3229
        %v3276 = vadd.f32 %v3170, %v3231
        %v3277 = vadd.f32 %v3171, %v3270
        %s3278 = scalar_lea.vmem [#allocation13], 50
        %v3279 = vld [vmem:[%s3278] sm:$0x3]
        %3280 = vrot.lane.b32.xlu0 %v2549, 91
        %v3281 = vpop.permute.xlu0 %3280
        %3282 = vrot.lane.b32.xlu0 %v2550, 91
        %v3283 = vpop.permute.xlu0 %3282
        %3284 = vrot.lane.b32.xlu0 %v2551, 91
        %v3285 = vpop.permute.xlu0 %3284
        %v3286 = vsel %vm1179, %v3281, %v3283
        %v3287 = vsel %vm1179, %v3283, %v3285
        %v3289 = vsel %vm2560, %v3279, 0
        %v3292 = vsel %vm2564, %v3286, 0
        %v3295 = vsel %vm2564, %v3287, 0
        %v3298 = vsel %vm2564, %v3285, 0
        %3300 = vmatprep.subr.bf16.mxu0 %v3295
        %3301 = vmatpush1.bf16.msra.mxu0 %v3292
        %3302 = vmatprep.subr.bf16.mxu0 0
        %3303 = vmatpush1.bf16.msra.mxu0 0
        %3304 = vmatprep.subr.bf16.mxu0 0
        %3305 = vmatpush1.bf16.msra.mxu0 0
        %3306 = vmatprep.subr.bf16.mxu0 0
        %3307 = vmatpush1.bf16.msra.mxu0 0
        %3308 = vmatprep.subr.bf16.mxu0 0
        %3309 = vmatpush1.bf16.msra.mxu0 0
        %3310 = vmatprep.subr.bf16.mxu0 0
        %3311 = vmatpush1.bf16.msra.mxu0 0
        %3312 = vmatprep.subr.bf16.mxu0 0
        %3313 = vmatpush1.bf16.msra.mxu0 0
        %3314 = vmatprep.subr.bf16.mxu0 0
        %3315 = vmatpush1.bf16.msra.mxu0 0
        %3316 = vmatprep.subr.bf16.mxu0 0
        %3317 = vmatpush1.bf16.msra.mxu0 0
        %3318 = vmatprep.subr.bf16.mxu0 0
        %3319 = vmatpush1.bf16.msra.mxu0 0
        %3320 = vmatprep.subr.bf16.mxu0 0
        %3321 = vmatpush1.bf16.msra.mxu0 0
        %3322 = vmatprep.subr.bf16.mxu0 0
        %3323 = vmatpush1.bf16.msra.mxu0 0
        %3324 = vmatprep.subr.bf16.mxu0 0
        %3325 = vmatpush1.bf16.msra.mxu0 0
        %3326 = vmatprep.subr.bf16.mxu0 0
        %3327 = vmatpush1.bf16.msra.mxu0 0
        %3328 = vmatprep.subr.bf16.mxu0 0
        %3329 = vmatpush1.bf16.msra.mxu0 0
        %3330 = vmatprep.subr.bf16.mxu0 0
        %3331 = vmatpush1.bf16.msra.mxu0 0
        %3332 = vmatprep.mubr.bf16.mxu0 0
        %3333 = vmatmul.mubr.bf16.gmra.mrb[0].mxu0 %v3289
        %v3334 = vpop.f32.mrb[0].mxu0
        %v3335 = vadd.f32 0.0, %v3334
        %v3336 = vpop.f32.mrb[0].mxu0
        %v3337 = vadd.f32 0.0, %v3336
        %v3338 = vpop.f32.mrb[0].mxu0
        %v3339 = vpop.f32.mrb[0].mxu0
        %3340 = vdwg.mxu0
        %3341 = vmatprep.subr.bf16.mxu0 0
        %3342 = vmatpush1.bf16.msra.mxu0 %v3298
        %3343 = vmatprep.subr.bf16.mxu0 0
        %3344 = vmatpush1.bf16.msra.mxu0 0
        %3345 = vmatprep.subr.bf16.mxu0 0
        %3346 = vmatpush1.bf16.msra.mxu0 0
        %3347 = vmatprep.subr.bf16.mxu0 0
        %3348 = vmatpush1.bf16.msra.mxu0 0
        %3349 = vmatprep.subr.bf16.mxu0 0
        %3350 = vmatpush1.bf16.msra.mxu0 0
        %3351 = vmatprep.subr.bf16.mxu0 0
        %3352 = vmatpush1.bf16.msra.mxu0 0
        %3353 = vmatprep.subr.bf16.mxu0 0
        %3354 = vmatpush1.bf16.msra.mxu0 0
        %3355 = vmatprep.subr.bf16.mxu0 0
        %3356 = vmatpush1.bf16.msra.mxu0 0
        %3357 = vmatprep.subr.bf16.mxu0 0
        %3358 = vmatpush1.bf16.msra.mxu0 0
        %3359 = vmatprep.subr.bf16.mxu0 0
        %3360 = vmatpush1.bf16.msra.mxu0 0
        %3361 = vmatprep.subr.bf16.mxu0 0
        %3362 = vmatpush1.bf16.msra.mxu0 0
        %3363 = vmatprep.subr.bf16.mxu0 0
        %3364 = vmatpush1.bf16.msra.mxu0 0
        %3365 = vmatprep.subr.bf16.mxu0 0
        %3366 = vmatpush1.bf16.msra.mxu0 0
        %3367 = vmatprep.subr.bf16.mxu0 0
        %3368 = vmatpush1.bf16.msra.mxu0 0
        %3369 = vmatprep.subr.bf16.mxu0 0
        %3370 = vmatpush1.bf16.msra.mxu0 0
        %3371 = vmatprep.subr.bf16.mxu0 0
        %3372 = vmatpush1.bf16.msra.mxu0 0
        %3373 = vmatprep.mubr.bf16.mxu0 0
        %3374 = vmatmul.mubr.bf16.gmra.mrb[0].mxu0 %v3289
        %v3375 = vpop.f32.mrb[0].mxu0
        %v3376 = vadd.f32 0.0, %v3375
        %v3377 = vpop.f32.mrb[0].mxu0
        %v3378 = vpop.f32.mrb[0].mxu0
        %v3379 = vpop.f32.mrb[0].mxu0
        %3380 = vdwg.mxu0
        %v3381 = vadd.f32 %v3275, %v3335
        %v3382 = vadd.f32 %v3276, %v3337
        %v3383 = vadd.f32 %v3277, %v3376
        %s3384 = scalar_lea.vmem [#allocation13], 52
        %v3385 = vld [vmem:[%s3384] sm:$0x3]
        %3386 = vrot.lane.b32.xlu0 %v2549, 90
        %v3387 = vpop.permute.xlu0 %3386
        %3388 = vrot.lane.b32.xlu0 %v2550, 90
        %v3389 = vpop.permute.xlu0 %3388
        %3390 = vrot.lane.b32.xlu0 %v2551, 90
        %v3391 = vpop.permute.xlu0 %3390
        %v3392 = vsel %vm1286, %v3387, %v3389
        %v3393 = vsel %vm1286, %v3389, %v3391
        %v3395 = vsel %vm2560, %v3385, 0
        %v3398 = vsel %vm2564, %v3392, 0
        %v3401 = vsel %vm2564, %v3393, 0
        %v3404 = vsel %vm2564, %v3391, 0
        %3406 = vmatprep.subr.bf16.mxu0 %v3401
        %3407 = vmatpush1.bf16.msra.mxu0 %v3398
        %3408 = vmatprep.subr.bf16.mxu0 0
        %3409 = vmatpush1.bf16.msra.mxu0 0
        %3410 = vmatprep.subr.bf16.mxu0 0
        %3411 = vmatpush1.bf16.msra.mxu0 0
        %3412 = vmatprep.subr.bf16.mxu0 0
        %3413 = vmatpush1.bf16.msra.mxu0 0
        %3414 = vmatprep.subr.bf16.mxu0 0
        %3415 = vmatpush1.bf16.msra.mxu0 0
        %3416 = vmatprep.subr.bf16.mxu0 0
        %3417 = vmatpush1.bf16.msra.mxu0 0
        %3418 = vmatprep.subr.bf16.mxu0 0
        %3419 = vmatpush1.bf16.msra.mxu0 0
        %3420 = vmatprep.subr.bf16.mxu0 0
        %3421 = vmatpush1.bf16.msra.mxu0 0
        %3422 = vmatprep.subr.bf16.mxu0 0
        %3423 = vmatpush1.bf16.msra.mxu0 0
        %3424 = vmatprep.subr.bf16.mxu0 0
        %3425 = vmatpush1.bf16.msra.mxu0 0
        %3426 = vmatprep.subr.bf16.mxu0 0
        %3427 = vmatpush1.bf16.msra.mxu0 0
        %3428 = vmatprep.subr.bf16.mxu0 0
        %3429 = vmatpush1.bf16.msra.mxu0 0
        %3430 = vmatprep.subr.bf16.mxu0 0
        %3431 = vmatpush1.bf16.msra.mxu0 0
        %3432 = vmatprep.subr.bf16.mxu0 0
        %3433 = vmatpush1.bf16.msra.mxu0 0
        %3434 = vmatprep.subr.bf16.mxu0 0
        %3435 = vmatpush1.bf16.msra.mxu0 0
        %3436 = vmatprep.subr.bf16.mxu0 0
        %3437 = vmatpush1.bf16.msra.mxu0 0
        %3438 = vmatprep.mubr.bf16.mxu0 0
        %3439 = vmatmul.mubr.bf16.gmra.mrb[0].mxu0 %v3395
        %v3440 = vpop.f32.mrb[0].mxu0
        %v3441 = vadd.f32 0.0, %v3440
        %v3442 = vpop.f32.mrb[0].mxu0
        %v3443 = vadd.f32 0.0, %v3442
        %v3444 = vpop.f32.mrb[0].mxu0
        %v3445 = vpop.f32.mrb[0].mxu0
        %3446 = vdwg.mxu0
        %3447 = vmatprep.subr.bf16.mxu0 0
        %3448 = vmatpush1.bf16.msra.mxu0 %v3404
        %3449 = vmatprep.subr.bf16.mxu0 0
        %3450 = vmatpush1.bf16.msra.mxu0 0
        %3451 = vmatprep.subr.bf16.mxu0 0
        %3452 = vmatpush1.bf16.msra.mxu0 0
        %3453 = vmatprep.subr.bf16.mxu0 0
        %3454 = vmatpush1.bf16.msra.mxu0 0
        %3455 = vmatprep.subr.bf16.mxu0 0
        %3456 = vmatpush1.bf16.msra.mxu0 0
        %3457 = vmatprep.subr.bf16.mxu0 0
        %3458 = vmatpush1.bf16.msra.mxu0 0
        %3459 = vmatprep.subr.bf16.mxu0 0
        %3460 = vmatpush1.bf16.msra.mxu0 0
        %3461 = vmatprep.subr.bf16.mxu0 0
        %3462 = vmatpush1.bf16.msra.mxu0 0
        %3463 = vmatprep.subr.bf16.mxu0 0
        %3464 = vmatpush1.bf16.msra.mxu0 0
        %3465 = vmatprep.subr.bf16.mxu0 0
        %3466 = vmatpush1.bf16.msra.mxu0 0
        %3467 = vmatprep.subr.bf16.mxu0 0
        %3468 = vmatpush1.bf16.msra.mxu0 0
        %3469 = vmatprep.subr.bf16.mxu0 0
        %3470 = vmatpush1.bf16.msra.mxu0 0
        %3471 = vmatprep.subr.bf16.mxu0 0
        %3472 = vmatpush1.bf16.msra.mxu0 0
        %3473 = vmatprep.subr.bf16.mxu0 0
        %3474 = vmatpush1.bf16.msra.mxu0 0
        %3475 = vmatprep.subr.bf16.mxu0 0
        %3476 = vmatpush1.bf16.msra.mxu0 0
        %3477 = vmatprep.subr.bf16.mxu0 0
        %3478 = vmatpush1.bf16.msra.mxu0 0
        %3479 = vmatprep.mubr.bf16.mxu0 0
        %3480 = vmatmul.mubr.bf16.gmra.mrb[0].mxu0 %v3395
        %v3481 = vpop.f32.mrb[0].mxu0
        %v3482 = vadd.f32 0.0, %v3481
        %v3483 = vpop.f32.mrb[0].mxu0
        %v3484 = vpop.f32.mrb[0].mxu0
        %v3485 = vpop.f32.mrb[0].mxu0
        %3486 = vdwg.mxu0
        %v3487 = vadd.f32 %v3381, %v3441
        %v3488 = vadd.f32 %v3382, %v3443
        %v3489 = vadd.f32 %v3383, %v3482
        %v3490 = vld [vmem:[#allocation12] sm:$0xf]
        %3492 = vset.pattern.permute.xlu0 2
        %3493 = vperm.xlu0 %3492, %v3490
        %v3494 = vpop.permute.xlu0 %3493
        %v3496 = vadd.f32 %v3487, %v3494
        %v3497 = vadd.f32 %v3488, %v3494
        %v3498 = vadd.f32 %v3489, %v3494
        %3499 = vst [vmem:[%s336 + $0x18] sm:$0xf] %v3496
        %3500 = vst [vmem:[%s336 + $0x20] sm:$0xf] %v3497
        %3501 = vst.msk [vmem:[%s336 + $0x28] sm:$0xf] %vm353, %v3498
        %s3502 = sand.u32 %s165, 1
        %s3503 = scalar_lea.sflag [#allocation6], %s3502
        %s3504 = sand.u32 %s165, 1
        %s3505 = smul.addr %s3504, 48
        %s3506 = scalar_lea.vmem [#allocation15], %s3505
        // Predicated region
        $region69: #{dense_block_forward.1} parent=43 // pred_check
          %p3507 = pneg %p175
        $region70: #{dense_block_forward.1} parent=43 // pred_check_branch
          %3509 = sbr.rel (%p3507) target = $region72
        $region71: #{dense_block_forward.1} parent=43 // pred_region
          %s3511 = ssub.s32 768, 768
          %3512 = vsyncadd %s3503, %s3511
          %s3513 = smul.addr %s26, 6
          %s3514 = smul.addr %s3513, 128
          %s3515 = scalar_lea.hbm %s6, %s3514
          %s3516 = sshll.u32 %s3506, 4
          %s3517 = int_to_ptr.vmem [resolvable:$true] %s3516
          %3522 = dma.vmem_to_hbm [thread:$0]  %s3517, 768, %s3515, %s3503, 384, 384, 24
        $region72: #{dense_block_forward.1} parent=43 // pred_fallthru
          _
      $region44: #{dense_block_forward.1} parent=5 // pred_fallthru
        _
      %p3523 = scmp.le.s32.totalorder 2, %s21
      // Predicated region
      $region73: #{dense_block_forward.1} parent=5 // pred_check
        %p3524 = pneg %p3523
      $region74: #{dense_block_forward.1} parent=5 // pred_check_branch
        %3526 = sbr.rel (%p3524) target = $region76
      $region75: #{dense_block_forward.1} parent=5 // pred_region
        %s3527 = ssub.s32 %s21, 2
        // Predicated region
        $region77: #{dense_block_forward.1} parent=75 // pred_check
          %p3528 = pneg %p181
        $region78: #{dense_block_forward.1} parent=75 // pred_check_branch
          %3530 = sbr.rel (%p3528) target = $region80
        $region79: #{dense_block_forward.1} parent=75 // pred_region
          %s3531 = sand.u32 %s166, 1
          %s3532 = scalar_lea.sflag [#allocation6], %s3531
          %s3533 = sand.u32 %s166, 1
          %s3534 = smul.addr %s3533, 48
          %s3535 = scalar_lea.vmem [#allocation15], %s3534
          %3536 = dma.done %s3532, 768
        $region80: #{dense_block_forward.1} parent=75 // pred_fallthru
          _
      $region76: #{dense_block_forward.1} parent=5 // pred_fallthru
        _
    $region6: #{dense_block_forward.1} parent=1 // loop_footer
      %s25 = sadd.s32 1, %s21
    $region7: #{dense_block_forward.1} parent=1 // loop_footer_branch
      %20 = sbr.rel target = $region3
    $region8: #{dense_block_forward.1} parent=1 // loop_exit
      _
    %3537 = vsyncpa [#allocation5], 1
    %s3538 = scalar_lea.sflag [#allocation5], 1
    %3539 = vsyncpa %s3538, 1
    %3540 = vsyncpa [#allocation8], 1
    %3541 = vsyncpa [#allocation11], 1
    %3542 = vsyncpa [#allocation14], 1
    %3543 = vsyncpa [#allocation6], 1
    %s3544 = scalar_lea.sflag [#allocation6], 1
    %3545 = vsyncpa %s3544, 1

</llo_original>
